<compile_context>
chip_gen: v6e
topology: v6e:2x2x1
jax: 0.10.0
libtpu: 0.0.40
codegen_flags: <defaults>
</compile_context>

<pallas_src>
import functools

import numpy as np
import jax
import jax.numpy as jnp
from jax import lax
from jax.experimental import pallas as pl
from jax.experimental.pallas import tpu as pltpu


# ----------------------------------------------------------------------------
# Fused forward kernel.
#
# Gate/lane layout (G = 8H lanes): [i_f | i_b | f_f | f_b | g_f | g_b | o_f | o_b]
# so each 2H-wide gate slice holds both directions and the joint hidden state is
# naturally (B, 2H) = [h_fwd | h_bwd].
# ----------------------------------------------------------------------------
def _sigmoid_tanh(x):
    # sigmoid(x) == 0.5 * tanh(0.5 * x) + 0.5 : one EUP op instead of exp + reciprocal.
    return 0.5 * jnp.tanh(0.5 * x) + 0.5


def _model3_fused_kernel(*refs, T, B, H, num_layers, ln_out):
    H2 = 2 * H
    G = 4 * H2                                   # 8H gate lanes (both directions)

    (ids_ref, lens_ref, emb_ref) = refs[0:3]
    lyr = refs[3:3 + 3 * num_layers]             # per layer: wcat (Din,2G) bf16, b (1,G) f32, whh (2H,G) bf16
    (feats_ref, wbdx_ref, wbdf_ref, bbd_ref, w4_ref, b4_ref) = refs[3 + 3 * num_layers:9 + 3 * num_layers]
    out_ref = refs[9 + 3 * num_layers]
    proj_sc, xg_sc, hs_sc = refs[10 + 3 * num_layers:13 + 3 * num_layers]

    vocp = emb_ref.shape[0]

    # ---- embedding gather: one-hot bf16 matmul (exact for bf16 table values) ----
    ids = ids_ref[...]                                           # (T*B, 1) int32, time-major rows
    iota_v = lax.broadcasted_iota(jnp.int32, (T * B, vocp), 1)
    onehot = jnp.where(ids == iota_v, 1.0, 0.0).astype(jnp.bfloat16)
    x_bf = jnp.dot(onehot, emb_ref[...],
                   preferred_element_type=jnp.float32).astype(jnp.bfloat16)   # (T*B, E)

    lens = jnp.clip(lens_ref[...], 1, T)                         # (B,1); clamp out-of-range lens
    xl_f = jnp.zeros((B, H), jnp.float32)                        # last-relevant fwd half
    xl_b = jnp.zeros((B, H), jnp.float32)                        # last-relevant bwd half

    for layer in range(num_layers):
        wcat_ref, b_ref, whh_ref = lyr[3 * layer:3 * layer + 3]
        last = (layer == num_layers - 1)

        # (1) Hoisted input projection for all steps & both directions: one MXU pass.
        #     Columns [0:G] = "own-step" contribution, [G:2G] = "mirrored-step" contribution,
        #     per the pack-time [Wa | Wb] layout (no runtime direction select needed).
        proj_sc[...] = jnp.dot(x_bf, wcat_ref[...], preferred_element_type=jnp.float32)

        # (2) Bulk-build per-step gate inputs outside the recurrence (bias folded in).
        bias = b_ref[...]
        for s in range(T):
            xg_sc[s * B:(s + 1) * B, :] = (
                proj_sc[s * B:(s + 1) * B, 0:G]
                + proj_sc[(T - 1 - s) * B:(T - s) * B, G:2 * G]
                + bias)

        # (3) Serial recurrence: per step one (B,2H)@(2H,8H) bf16 matmul + f32 gate math.
        #     h / c live in vregs; statically unrolled (small T) so the scheduler can
        #     overlap MXU / EUP / VPU work across steps.
        wh = whh_ref[...]
        h = jnp.zeros((B, H2), jnp.float32)
        c = jnp.zeros((B, H2), jnp.float32)
        for s in range(T):
            gates = xg_sc[s * B:(s + 1) * B, :] + jnp.dot(
                h.astype(jnp.bfloat16), wh, preferred_element_type=jnp.float32)
            i_g = _sigmoid_tanh(gates[:, 0:H2])
            f_g = _sigmoid_tanh(gates[:, H2:2 * H2])
            g_g = jnp.tanh(gates[:, 2 * H2:3 * H2])
            o_g = _sigmoid_tanh(gates[:, 3 * H2:4 * H2])
            c = f_g * c + i_g * g_g                              # (B,2H) = [c_fwd | c_bwd]
            h = o_g * jnp.tanh(c)                                # (B,2H) = [h_fwd | h_bwd]
            if not last:
                # Needed as next-layer input; this store is off the h->h dependency chain.
                hs_sc[s * B:(s + 1) * B, :] = h
            else:
                # last_relevant capture (fwd hidden of time lens-1 is produced at step lens-1,
                # bwd hidden of time lens-1 at step T-lens); off the critical chain.
                xl_f = jnp.where((lens - 1) == s, h[:, 0:H], xl_f)
                xl_b = jnp.where((T - lens) == s, h[:, H:H2], xl_b)

        if not last:
            x_bf = hs_sc[...].astype(jnp.bfloat16)               # next layer's (T*B, 2H) input

    # ---- head: fcd1 / fcd2 / fcd3 as block matmuls + column-masked ReLU, then fcd4 ----
    # (dropout(0.3) -> identity in eval mode)
    h1 = (jnp.dot(xl_f, wbdx_ref[0:H, :], preferred_element_type=jnp.float32)
          + jnp.dot(xl_b, wbdx_ref[H:H2, :], preferred_element_type=jnp.float32)
          + jnp.dot(feats_ref[...], wbdf_ref[...], preferred_element_type=jnp.float32)
          + bbd_ref[...])
    col = lax.broadcasted_iota(jnp.int32, h1.shape, 1)
    relu_cols = (col < ln_out) | (col >= ln_out + 64)            # ReLU on fcd1 & fcd3 outputs only
    cat = jnp.where(relu_cols, jnp.maximum(h1, 0.0), h1)
    out = jnp.dot(cat, w4_ref[...], preferred_element_type=jnp.float32) + b4_ref[...]
    out_ref[...] = out.astype(out_ref.dtype)


# ----------------------------------------------------------------------------
# Parameter packing (host-side, one-time): build kernel-friendly layouts.
# ----------------------------------------------------------------------------
def _interleave_dirs(wf, wb, H):
    """(..., 4H) fwd & bwd -> (..., 8H) with [i_f,i_b,f_f,f_b,g_f,g_b,o_f,o_b]."""
    lead = wf.shape[:-1]
    wf4 = wf.reshape(lead + (4, H))
    wb4 = wb.reshape(lead + (4, H))
    return jnp.stack([wf4, wb4], axis=-2).reshape(lead + (8 * H,))


def pack_for_kernels(params, hd_dim, ln_output):
    H = hd_dim
    H2 = 2 * H

    # Embedding table: pad rows to a lane-friendly multiple and pre-cast to bf16.
    voc, emb_dm = params["embedding"].shape
    vocp = ((voc + 127) // 128) * 128
    emb_pad = jnp.pad(params["embedding"], ((0, vocp - voc), (0, 0))).astype(jnp.bfloat16)

    kp = {"emb": emb_pad, "H": H, "ln_out": ln_output}

    layers = []
    for idx, p in enumerate(params["lstm_layers"]):
        wih_f, wih_b = p["wih_f"], p["wih_b"]
        if idx == 0:
            # Layer 0: Wa puts wih_f on fwd lanes, Wb puts wih_b on bwd lanes; the kernel
            # then forms xg[s] = x[s]@Wa + x[T-1-s]@Wb (== fwd needs time s, bwd time T-1-s).
            z = jnp.zeros_like(wih_f)
            wa = _interleave_dirs(wih_f, z, H)
            wb = _interleave_dirs(z, wih_b, H)
        else:
            # Layers >=1: the (T*B, 2H) step-major hidden buffer holds [h_fwd(t=s) | h_bwd(t=T-1-s)]
            # at row-step s, so split each direction's input weight by which half it consumes:
            #   Wa rows 0:H  -> fwd lanes <- wih_f[:H]   (consumes h_fwd at own step)
            #   Wa rows H:2H -> bwd lanes <- wih_b[H:]   (consumes h_bwd stored at own step)
            #   Wb rows 0:H  -> bwd lanes <- wih_b[:H]
            #   Wb rows H:2H -> fwd lanes <- wih_f[H:]
            zh = jnp.zeros((H, 4 * H), jnp.float32)
            wa = jnp.concatenate([_interleave_dirs(wih_f[:H], zh, H),
                                  _interleave_dirs(zh, wih_b[H:], H)], axis=0)
            wb = jnp.concatenate([_interleave_dirs(zh, wih_b[:H], H),
                                  _interleave_dirs(wih_f[H:], zh, H)], axis=0)
        wcat = jnp.concatenate([wa, wb], axis=1).astype(jnp.bfloat16)      # (Din, 16H)

        zH = jnp.zeros_like(p["whh_f"])
        whh_c = jnp.concatenate(
            [_interleave_dirs(p["whh_f"], zH, H),
             _interleave_dirs(zH, p["whh_b"], H)], axis=0).astype(jnp.bfloat16)   # (2H, 8H)
        b_c = _interleave_dirs(p["b_f"], p["b_b"], H)                      # (1, 8H) f32
        layers.append({"wcat": wcat, "whh": whh_c, "b": b_c})
    kp["layers"] = layers

    # Head: fcd1 feeds columns [0:ln_out); fcd2/fcd3 (31->32 padded contraction) feed the
    # next 64+64 columns as a block-diagonal matmul against the packed (B,64) features.
    F = ln_output + 128
    wbd_x = jnp.zeros((H2, F), jnp.float32).at[:, :ln_output].set(params["w1"])
    w2p = jnp.pad(params["w2"], ((0, 1), (0, 0)))
    w3p = jnp.pad(params["w3"], ((0, 1), (0, 0)))
    wbd_f = jnp.zeros((64, F), jnp.float32)
    wbd_f = wbd_f.at[0:32, ln_output:ln_output + 64].set(w2p)
    wbd_f = wbd_f.at[32:64, ln_output + 64:F].set(w3p)
    kp["w_bd_x"] = wbd_x
    kp["w_bd_f"] = wbd_f
    kp["b_bd"] = jnp.concatenate([params["b1"], params["b2"], params["b3"]], axis=1)
    kp["w4"] = params["w4"]
    kp["b4"] = params["b4"]
    return kp


# ----------------------------------------------------------------------------
# Model3 forward: tiny integer/feature glue + ONE fused pallas_call.
# ----------------------------------------------------------------------------
def model3_forward(kp, x_inputs, len_sequences, line_numbers, total_lines):
    B, T = x_inputs.shape
    H = kp["H"]
    H2 = 2 * H
    G = 8 * H
    ln_out = kp["ln_out"]
    Fh, C = kp["w4"].shape
    vocp, E = kp["emb"].shape
    L = len(kp["layers"])

    # Glue is only on tiny int / 31-wide tensors; no activation-sized XLA ops.
    ids_col = x_inputs.T.reshape(T * B, 1).astype(jnp.int32)      # time-major token ids
    lens_col = len_sequences.astype(jnp.int32).reshape(B, 1)
    feats = jnp.concatenate([jnp.pad(line_numbers, ((0, 0), (0, 1))),
                             jnp.pad(total_lines, ((0, 0), (0, 1)))], axis=1)   # (B, 64)

    args = [ids_col, lens_col, kp["emb"]]
    for lp in kp["layers"]:
        args += [lp["wcat"], lp["b"], lp["whh"]]
    args += [feats, kp["w_bd_x"], kp["w_bd_f"], kp["b_bd"], kp["w4"], kp["b4"]]

    def full_spec(a):
        nd = a.ndim
        return pl.BlockSpec(a.shape, lambda i, _nd=nd: (0,) * _nd)

    # Advisory cost estimate.
    flops = 2 * T * B * vocp * E
    din = E
    for _ in range(L):
        flops += 2 * T * B * din * (2 * G) + 2 * T * B * H2 * G
        din = H2
    flops += 2 * B * (H2 * Fh + 64 * Fh + Fh * C)
    bytes_accessed = sum(int(a.size) * a.dtype.itemsize for a in args) + B * C * 4
    cost = pl.CostEstimate(flops=flops, transcendentals=5 * T * B * H2 * L,
                           bytes_accessed=bytes_accessed)

    kernel = functools.partial(_model3_fused_kernel, T=T, B=B, H=H,
                               num_layers=L, ln_out=ln_out)

    return pl.pallas_call(
        kernel,
        out_shape=jax.ShapeDtypeStruct((B, C), jnp.float32),
        grid=(1,),
        in_specs=[full_spec(a) for a in args],
        out_specs=pl.BlockSpec((B, C), lambda i: (0, 0)),
        scratch_shapes=[
            pltpu.VMEM((T * B, 2 * G), jnp.float32),   # hoisted [Wa|Wb] projections
            pltpu.VMEM((T * B, G), jnp.float32),       # per-step gate inputs (bias folded in)
            pltpu.VMEM((T * B, H2), jnp.float32),      # inter-layer sequence (VMEM-resident)
        ],
        compiler_params=pltpu.CompilerParams(dimension_semantics=("arbitrary",)),
        cost_estimate=cost,
    )(*args)


# ----------------------------------------------------------------------------
# Pure-JAX reference (mirrors the kernel's bf16 matmul-operand / f32 state numerics)
# ----------------------------------------------------------------------------
def _lstm_dir_ref(x_tm_bf, wih_bf, whh_bf, b):
    T, B, _ = x_tm_bf.shape
    H = whh_bf.shape[0]

    def step(carry, x_t):
        h, c = carry
        gates = (jnp.dot(x_t, wih_bf, preferred_element_type=jnp.float32)
                 + jnp.dot(h.astype(jnp.bfloat16), whh_bf, preferred_element_type=jnp.float32)
                 + b)
        i = jax.nn.sigmoid(gates[:, 0:H])
        f = jax.nn.sigmoid(gates[:, H:2 * H])
        g = jnp.tanh(gates[:, 2 * H:3 * H])
        o = jax.nn.sigmoid(gates[:, 3 * H:4 * H])
        c = f * c + i * g
        h = o * jnp.tanh(c)
        return (h, c), h

    init = (jnp.zeros((B, H), jnp.float32), jnp.zeros((B, H), jnp.float32))
    _, hs = lax.scan(step, init, x_tm_bf)
    return hs                                                    # (T, B, H) f32


def model3_reference(params, x_inputs, len_sequences, line_numbers, total_lines):
    B, T = x_inputs.shape
    emb = jnp.take(params["embedding"], x_inputs, axis=0)        # (B, T, E)
    inp = jnp.transpose(emb, (1, 0, 2)).astype(jnp.bfloat16)     # (T, B, E)
    res = None
    for p in params["lstm_layers"]:
        h_f = _lstm_dir_ref(inp, p["wih_f"].astype(jnp.bfloat16),
                            p["whh_f"].astype(jnp.bfloat16), p["b_f"])
        h_b = _lstm_dir_ref(inp[::-1], p["wih_b"].astype(jnp.bfloat16),
                            p["whh_b"].astype(jnp.bfloat16), p["b_b"])[::-1]
        res = jnp.concatenate([h_f, h_b], axis=-1)               # (T, B, 2H) f32
        inp = res.astype(jnp.bfloat16)
    idx = len_sequences.astype(jnp.int32) - 1
    X = res[idx, jnp.arange(B)]                                  # (B, 2H)
    X = jax.nn.relu(X @ params["w1"] + params["b1"])
    X1 = line_numbers @ params["w2"] + params["b2"]
    X2 = jax.nn.relu(total_lines @ params["w3"] + params["b3"])
    cat = jnp.concatenate([X, X1, X2], axis=1)
    return cat @ params["w4"] + params["b4"]


# ----------------------------------------------------------------------------
# Deterministic parameter init (PyTorch-style layouts, pre-transposed for x @ W)
# ----------------------------------------------------------------------------
def init_params(key, voc_size, embed_dm, hd_dim, num_lyrs, ln_output):
    keys = iter(jax.random.split(key, 64))

    def lin(in_dim, out_dim):
        bound = 1.0 / np.sqrt(in_dim)
        w = jax.random.uniform(next(keys), (in_dim, out_dim), jnp.float32, -bound, bound)
        b = jax.random.uniform(next(keys), (1, out_dim), jnp.float32, -bound, bound)
        return w, b

    params = {"embedding": jax.random.normal(next(keys), (voc_size, embed_dm), jnp.float32)}

    layers = []
    bound = 1.0 / np.sqrt(hd_dim)
    for layer in range(num_lyrs):
        din = embed_dm if layer == 0 else 2 * hd_dim
        d = {}
        for tag in ("f", "b"):
            d[f"wih_{tag}"] = jax.random.uniform(next(keys), (din, 4 * hd_dim), jnp.float32, -bound, bound)
            d[f"whh_{tag}"] = jax.random.uniform(next(keys), (hd_dim, 4 * hd_dim), jnp.float32, -bound, bound)
            d[f"b_{tag}"] = jax.random.uniform(next(keys), (1, 4 * hd_dim), jnp.float32, -bound, bound)
        layers.append(d)
    params["lstm_layers"] = layers

    params["w1"], params["b1"] = lin(2 * hd_dim, ln_output)          # fcd1
    params["w2"], params["b2"] = lin(31, 64)                         # fcd2
    params["w3"], params["b3"] = lin(31, 64)                         # fcd3
    params["w4"], params["b4"] = lin(64 + 64 + ln_output, num_lyrs)  # fcd4 (final projection)
    return params


if __name__ == "__main__":
    # Small, forward-consistent shapes (H=32 -> 2H=64, 8H=256 gate lanes; LNOUT=64 -> 192-wide concat)
    VOC, EMB, HID, NLYR, LNOUT = 50, 32, 32, 2, 64
    B, T = 8, 8

    key = jax.random.PRNGKey(0)
    kkey, k1, k2, k3, k4 = jax.random.split(key, 5)

    params = init_params(kkey, VOC, EMB, HID, NLYR, LNOUT)
    kparams = pack_for_kernels(params, HID, LNOUT)

    x_inputs = jax.random.randint(k1, (B, T), 0, VOC, dtype=jnp.int32)
    len_sequences = jax.random.randint(k2, (B,), 1, T + 1, dtype=jnp.int32)
    line_numbers = jax.random.normal(k3, (B, 31), jnp.float32)
    total_lines = jax.random.normal(k4, (B, 31), jnp.float32)

    fwd = jax.jit(functools.partial(model3_forward, kparams))
    out = jax.block_until_ready(fwd(x_inputs, len_sequences, line_numbers, total_lines))
    ref = jax.block_until_ready(
        model3_reference(params, x_inputs, len_sequences, line_numbers, total_lines))
    np.testing.assert_allclose(np.asarray(out), np.asarray(ref), rtol=1e-3, atol=1e-3)

    print("KERNEL_OK")
</pallas_src>

<mosaic_0001>
module attributes {stable_mosaic.version = 11 : i64} {
  func.func @_model3_fused_kernel(%arg0: i32, %arg1: memref<64x1xi32, #tpu.memory_space<vmem>>, %arg2: memref<8x1xi32, #tpu.memory_space<vmem>>, %arg3: memref<128x32xbf16, #tpu.memory_space<vmem>>, %arg4: memref<32x512xbf16, #tpu.memory_space<vmem>>, %arg5: memref<1x256xf32, #tpu.memory_space<vmem>>, %arg6: memref<64x256xbf16, #tpu.memory_space<vmem>>, %arg7: memref<64x512xbf16, #tpu.memory_space<vmem>>, %arg8: memref<1x256xf32, #tpu.memory_space<vmem>>, %arg9: memref<64x256xbf16, #tpu.memory_space<vmem>>, %arg10: memref<8x64xf32, #tpu.memory_space<vmem>>, %arg11: memref<64x192xf32, #tpu.memory_space<vmem>>, %arg12: memref<64x192xf32, #tpu.memory_space<vmem>>, %arg13: memref<1x192xf32, #tpu.memory_space<vmem>>, %arg14: memref<192x2xf32, #tpu.memory_space<vmem>>, %arg15: memref<1x2xf32, #tpu.memory_space<vmem>>, %arg16: memref<8x2xf32, #tpu.memory_space<vmem>>, %arg17: memref<64x512xf32, #tpu.memory_space<vmem>>, %arg18: memref<64x256xf32, #tpu.memory_space<vmem>>, %arg19: memref<64x64xf32, #tpu.memory_space<vmem>>) attributes {dimension_semantics = [#tpu.dimension_semantics<arbitrary>], iteration_bounds = array<i64: 1>, scalar_prefetch = 0 : i64, scratch_operands = 3 : i64, tpu.core_type = #tpu.core_type<tc>, window_params = [{pipeline_mode = #tpu.pipeline_mode<synchronous>, transform_indices = @transform_0, window_bounds = array<i64: 64, 1>}, {pipeline_mode = #tpu.pipeline_mode<synchronous>, transform_indices = @transform_1, window_bounds = array<i64: 8, 1>}, {pipeline_mode = #tpu.pipeline_mode<synchronous>, transform_indices = @transform_2, window_bounds = array<i64: 128, 32>}, {pipeline_mode = #tpu.pipeline_mode<synchronous>, transform_indices = @transform_3, window_bounds = array<i64: 32, 512>}, {pipeline_mode = #tpu.pipeline_mode<synchronous>, transform_indices = @transform_4, window_bounds = array<i64: 1, 256>}, {pipeline_mode = #tpu.pipeline_mode<synchronous>, transform_indices = @transform_5, window_bounds = array<i64: 64, 256>}, {pipeline_mode = #tpu.pipeline_mode<synchronous>, transform_indices = @transform_6, window_bounds = array<i64: 64, 512>}, {pipeline_mode = #tpu.pipeline_mode<synchronous>, transform_indices = @transform_7, window_bounds = array<i64: 1, 256>}, {pipeline_mode = #tpu.pipeline_mode<synchronous>, transform_indices = @transform_8, window_bounds = array<i64: 64, 256>}, {pipeline_mode = #tpu.pipeline_mode<synchronous>, transform_indices = @transform_9, window_bounds = array<i64: 8, 64>}, {pipeline_mode = #tpu.pipeline_mode<synchronous>, transform_indices = @transform_10, window_bounds = array<i64: 64, 192>}, {pipeline_mode = #tpu.pipeline_mode<synchronous>, transform_indices = @transform_11, window_bounds = array<i64: 64, 192>}, {pipeline_mode = #tpu.pipeline_mode<synchronous>, transform_indices = @transform_12, window_bounds = array<i64: 1, 192>}, {pipeline_mode = #tpu.pipeline_mode<synchronous>, transform_indices = @transform_13, window_bounds = array<i64: 192, 2>}, {pipeline_mode = #tpu.pipeline_mode<synchronous>, transform_indices = @transform_14, window_bounds = array<i64: 1, 2>}, {pipeline_mode = #tpu.pipeline_mode<synchronous>, transform_indices = @transform_15, window_bounds = array<i64: 8, 2>}]} {
    %c0 = arith.constant 0 : index
    %c0_0 = arith.constant 0 : index
    %0 = vector.load %arg1[%c0, %c0_0] : memref<64x1xi32, #tpu.memory_space<vmem>>, vector<64x1xi32>
    %1 = tpu.iota {dimensions = array<i32: 1>} : vector<64x128xi32>
    %2 = vector.broadcast %0 : vector<64x1xi32> to vector<64x128xi32>
    %3 = arith.cmpi eq, %2, %1 : vector<64x128xi32>
    %cst = arith.constant 1.000000e+00 : f32
    %cst_1 = arith.constant 0.000000e+00 : f32
    %4 = vector.broadcast %cst : f32 to vector<64x128xf32>
    %5 = vector.broadcast %cst_1 : f32 to vector<64x128xf32>
    %6 = arith.select %3, %4, %5 : vector<64x128xi1>, vector<64x128xf32>
    %7 = arith.truncf %6 : vector<64x128xf32> to vector<64x128xbf16>
    %c0_2 = arith.constant 0 : index
    %c0_3 = arith.constant 0 : index
    %8 = vector.load %arg3[%c0_2, %c0_3] : memref<128x32xbf16, #tpu.memory_space<vmem>>, vector<128x32xbf16>
    %cst_4 = arith.constant dense<0.000000e+00> : vector<64x32xf32>
    %9 = tpu.matmul %7, %8, %cst_4 {dimension_numbers = #tpu.dot_dimension_numbers<[1], [0], [0], [1], [0, 0, 1, 1], [], []>} : vector<64x128xbf16>, vector<128x32xbf16>, vector<64x32xf32> -> vector<64x32xf32>
    %10 = arith.truncf %9 : vector<64x32xf32> to vector<64x32xbf16>
    %c0_5 = arith.constant 0 : index
    %c0_6 = arith.constant 0 : index
    %11 = vector.load %arg2[%c0_5, %c0_6] : memref<8x1xi32, #tpu.memory_space<vmem>>, vector<8x1xi32>
    %c1_i32 = arith.constant 1 : i32
    %c8_i32 = arith.constant 8 : i32
    %12 = vector.broadcast %c1_i32 : i32 to vector<8x1xi32>
    %13 = arith.maxsi %12, %11 : vector<8x1xi32>
    %14 = vector.broadcast %c8_i32 : i32 to vector<8x1xi32>
    %15 = arith.minsi %14, %13 : vector<8x1xi32>
    %cst_7 = arith.constant 0.000000e+00 : f32
    %16 = vector.broadcast %cst_7 : f32 to vector<8x32xf32>
    %cst_8 = arith.constant 0.000000e+00 : f32
    %17 = vector.broadcast %cst_8 : f32 to vector<8x32xf32>
    %c0_9 = arith.constant 0 : index
    %c0_10 = arith.constant 0 : index
    %18 = vector.load %arg4[%c0_9, %c0_10] : memref<32x512xbf16, #tpu.memory_space<vmem>>, vector<32x512xbf16>
    %cst_11 = arith.constant dense<0.000000e+00> : vector<64x512xf32>
    %19 = tpu.matmul %10, %18, %cst_11 {dimension_numbers = #tpu.dot_dimension_numbers<[1], [0], [0], [1], [0, 0, 1, 1], [], []>} : vector<64x32xbf16>, vector<32x512xbf16>, vector<64x512xf32> -> vector<64x512xf32>
    %c0_12 = arith.constant 0 : index
    %c0_13 = arith.constant 0 : index
    %20 = vector.load %arg17[%c0_12, %c0_13] : memref<64x512xf32, #tpu.memory_space<vmem>>, vector<64x512xf32>
    tpu.vector_store %arg17[%c0_12, %c0_13], %19 {strides = array<i32>} : memref<64x512xf32, #tpu.memory_space<vmem>>, vector<64x512xf32>,
    %c0_14 = arith.constant 0 : index
    %c0_15 = arith.constant 0 : index
    %21 = vector.load %arg5[%c0_14, %c0_15] : memref<1x256xf32, #tpu.memory_space<vmem>>, vector<1x256xf32>
    %c0_16 = arith.constant 0 : index
    %c0_17 = arith.constant 0 : index
    %22 = vector.load %arg17[%c0_16, %c0_17] : memref<64x512xf32, #tpu.memory_space<vmem>>, vector<8x256xf32>
    %c56 = arith.constant 56 : index
    %c256 = arith.constant 256 : index
    %23 = vector.load %arg17[%c56, %c256] : memref<64x512xf32, #tpu.memory_space<vmem>>, vector<8x256xf32>
    %24 = arith.addf %22, %23 : vector<8x256xf32>
    %25 = vector.broadcast %21 : vector<1x256xf32> to vector<8x256xf32>
    %26 = arith.addf %24, %25 : vector<8x256xf32>
    %c0_18 = arith.constant 0 : index
    %c0_19 = arith.constant 0 : index
    %27 = vector.load %arg18[%c0_18, %c0_19] : memref<64x256xf32, #tpu.memory_space<vmem>>, vector<8x256xf32>
    tpu.vector_store %arg18[%c0_18, %c0_19], %26 {strides = array<i32>} : memref<64x256xf32, #tpu.memory_space<vmem>>, vector<8x256xf32>,
    %c8 = arith.constant 8 : index
    %c0_20 = arith.constant 0 : index
    %28 = vector.load %arg17[%c8, %c0_20] : memref<64x512xf32, #tpu.memory_space<vmem>>, vector<8x256xf32>
    %c48 = arith.constant 48 : index
    %c256_21 = arith.constant 256 : index
    %29 = vector.load %arg17[%c48, %c256_21] : memref<64x512xf32, #tpu.memory_space<vmem>>, vector<8x256xf32>
    %30 = arith.addf %28, %29 : vector<8x256xf32>
    %31 = vector.broadcast %21 : vector<1x256xf32> to vector<8x256xf32>
    %32 = arith.addf %30, %31 : vector<8x256xf32>
    %c8_22 = arith.constant 8 : index
    %c0_23 = arith.constant 0 : index
    %33 = vector.load %arg18[%c8_22, %c0_23] : memref<64x256xf32, #tpu.memory_space<vmem>>, vector<8x256xf32>
    tpu.vector_store %arg18[%c8_22, %c0_23], %32 {strides = array<i32>} : memref<64x256xf32, #tpu.memory_space<vmem>>, vector<8x256xf32>,
    %c16 = arith.constant 16 : index
    %c0_24 = arith.constant 0 : index
    %34 = vector.load %arg17[%c16, %c0_24] : memref<64x512xf32, #tpu.memory_space<vmem>>, vector<8x256xf32>
    %c40 = arith.constant 40 : index
    %c256_25 = arith.constant 256 : index
    %35 = vector.load %arg17[%c40, %c256_25] : memref<64x512xf32, #tpu.memory_space<vmem>>, vector<8x256xf32>
    %36 = arith.addf %34, %35 : vector<8x256xf32>
    %37 = vector.broadcast %21 : vector<1x256xf32> to vector<8x256xf32>
    %38 = arith.addf %36, %37 : vector<8x256xf32>
    %c16_26 = arith.constant 16 : index
    %c0_27 = arith.constant 0 : index
    %39 = vector.load %arg18[%c16_26, %c0_27] : memref<64x256xf32, #tpu.memory_space<vmem>>, vector<8x256xf32>
    tpu.vector_store %arg18[%c16_26, %c0_27], %38 {strides = array<i32>} : memref<64x256xf32, #tpu.memory_space<vmem>>, vector<8x256xf32>,
    %c24 = arith.constant 24 : index
    %c0_28 = arith.constant 0 : index
    %40 = vector.load %arg17[%c24, %c0_28] : memref<64x512xf32, #tpu.memory_space<vmem>>, vector<8x256xf32>
    %c32 = arith.constant 32 : index
    %c256_29 = arith.constant 256 : index
    %41 = vector.load %arg17[%c32, %c256_29] : memref<64x512xf32, #tpu.memory_space<vmem>>, vector<8x256xf32>
    %42 = arith.addf %40, %41 : vector<8x256xf32>
    %43 = vector.broadcast %21 : vector<1x256xf32> to vector<8x256xf32>
    %44 = arith.addf %42, %43 : vector<8x256xf32>
    %c24_30 = arith.constant 24 : index
    %c0_31 = arith.constant 0 : index
    %45 = vector.load %arg18[%c24_30, %c0_31] : memref<64x256xf32, #tpu.memory_space<vmem>>, vector<8x256xf32>
    tpu.vector_store %arg18[%c24_30, %c0_31], %44 {strides = array<i32>} : memref<64x256xf32, #tpu.memory_space<vmem>>, vector<8x256xf32>,
    %c32_32 = arith.constant 32 : index
    %c0_33 = arith.constant 0 : index
    %46 = vector.load %arg17[%c32_32, %c0_33] : memref<64x512xf32, #tpu.memory_space<vmem>>, vector<8x256xf32>
    %c24_34 = arith.constant 24 : index
    %c256_35 = arith.constant 256 : index
    %47 = vector.load %arg17[%c24_34, %c256_35] : memref<64x512xf32, #tpu.memory_space<vmem>>, vector<8x256xf32>
    %48 = arith.addf %46, %47 : vector<8x256xf32>
    %49 = vector.broadcast %21 : vector<1x256xf32> to vector<8x256xf32>
    %50 = arith.addf %48, %49 : vector<8x256xf32>
    %c32_36 = arith.constant 32 : index
    %c0_37 = arith.constant 0 : index
    %51 = vector.load %arg18[%c32_36, %c0_37] : memref<64x256xf32, #tpu.memory_space<vmem>>, vector<8x256xf32>
    tpu.vector_store %arg18[%c32_36, %c0_37], %50 {strides = array<i32>} : memref<64x256xf32, #tpu.memory_space<vmem>>, vector<8x256xf32>,
    %c40_38 = arith.constant 40 : index
    %c0_39 = arith.constant 0 : index
    %52 = vector.load %arg17[%c40_38, %c0_39] : memref<64x512xf32, #tpu.memory_space<vmem>>, vector<8x256xf32>
    %c16_40 = arith.constant 16 : index
    %c256_41 = arith.constant 256 : index
    %53 = vector.load %arg17[%c16_40, %c256_41] : memref<64x512xf32, #tpu.memory_space<vmem>>, vector<8x256xf32>
    %54 = arith.addf %52, %53 : vector<8x256xf32>
    %55 = vector.broadcast %21 : vector<1x256xf32> to vector<8x256xf32>
    %56 = arith.addf %54, %55 : vector<8x256xf32>
    %c40_42 = arith.constant 40 : index
    %c0_43 = arith.constant 0 : index
    %57 = vector.load %arg18[%c40_42, %c0_43] : memref<64x256xf32, #tpu.memory_space<vmem>>, vector<8x256xf32>
    tpu.vector_store %arg18[%c40_42, %c0_43], %56 {strides = array<i32>} : memref<64x256xf32, #tpu.memory_space<vmem>>, vector<8x256xf32>,
    %c48_44 = arith.constant 48 : index
    %c0_45 = arith.constant 0 : index
    %58 = vector.load %arg17[%c48_44, %c0_45] : memref<64x512xf32, #tpu.memory_space<vmem>>, vector<8x256xf32>
    %c8_46 = arith.constant 8 : index
    %c256_47 = arith.constant 256 : index
    %59 = vector.load %arg17[%c8_46, %c256_47] : memref<64x512xf32, #tpu.memory_space<vmem>>, vector<8x256xf32>
    %60 = arith.addf %58, %59 : vector<8x256xf32>
    %61 = vector.broadcast %21 : vector<1x256xf32> to vector<8x256xf32>
    %62 = arith.addf %60, %61 : vector<8x256xf32>
    %c48_48 = arith.constant 48 : index
    %c0_49 = arith.constant 0 : index
    %63 = vector.load %arg18[%c48_48, %c0_49] : memref<64x256xf32, #tpu.memory_space<vmem>>, vector<8x256xf32>
    tpu.vector_store %arg18[%c48_48, %c0_49], %62 {strides = array<i32>} : memref<64x256xf32, #tpu.memory_space<vmem>>, vector<8x256xf32>,
    %c56_50 = arith.constant 56 : index
    %c0_51 = arith.constant 0 : index
    %64 = vector.load %arg17[%c56_50, %c0_51] : memref<64x512xf32, #tpu.memory_space<vmem>>, vector<8x256xf32>
    %c0_52 = arith.constant 0 : index
    %c256_53 = arith.constant 256 : index
    %65 = vector.load %arg17[%c0_52, %c256_53] : memref<64x512xf32, #tpu.memory_space<vmem>>, vector<8x256xf32>
    %66 = arith.addf %64, %65 : vector<8x256xf32>
    %67 = vector.broadcast %21 : vector<1x256xf32> to vector<8x256xf32>
    %68 = arith.addf %66, %67 : vector<8x256xf32>
    %c56_54 = arith.constant 56 : index
    %c0_55 = arith.constant 0 : index
    %69 = vector.load %arg18[%c56_54, %c0_55] : memref<64x256xf32, #tpu.memory_space<vmem>>, vector<8x256xf32>
    tpu.vector_store %arg18[%c56_54, %c0_55], %68 {strides = array<i32>} : memref<64x256xf32, #tpu.memory_space<vmem>>, vector<8x256xf32>,
    %c0_56 = arith.constant 0 : index
    %c0_57 = arith.constant 0 : index
    %70 = vector.load %arg6[%c0_56, %c0_57] : memref<64x256xbf16, #tpu.memory_space<vmem>>, vector<64x256xbf16>
    %cst_58 = arith.constant 0.000000e+00 : f32
    %71 = vector.broadcast %cst_58 : f32 to vector<8x64xf32>
    %cst_59 = arith.constant 0.000000e+00 : f32
    %72 = vector.broadcast %cst_59 : f32 to vector<8x64xf32>
    %c0_60 = arith.constant 0 : index
    %c0_61 = arith.constant 0 : index
    %73 = vector.load %arg18[%c0_60, %c0_61] : memref<64x256xf32, #tpu.memory_space<vmem>>, vector<8x256xf32>
    %74 = arith.truncf %71 : vector<8x64xf32> to vector<8x64xbf16>
    %cst_62 = arith.constant dense<0.000000e+00> : vector<8x256xf32>
    %75 = tpu.matmul %74, %70, %cst_62 {dimension_numbers = #tpu.dot_dimension_numbers<[1], [0], [0], [1], [0, 0, 1, 1], [], []>} : vector<8x64xbf16>, vector<64x256xbf16>, vector<8x256xf32> -> vector<8x256xf32>
    %76 = arith.addf %73, %75 : vector<8x256xf32>
    %77 = vector.extract_strided_slice %76 {offsets = [0, 0], sizes = [8, 64], strides = [1, 1]} : vector<8x256xf32> to vector<8x64xf32>
    %cst_63 = arith.constant 5.000000e-01 : f32
    %78 = vector.broadcast %cst_63 : f32 to vector<8x64xf32>
    %79 = arith.mulf %78, %77 : vector<8x64xf32>
    %80 = math.tanh %79 : vector<8x64xf32>
    %cst_64 = arith.constant 5.000000e-01 : f32
    %81 = vector.broadcast %cst_64 : f32 to vector<8x64xf32>
    %82 = arith.mulf %81, %80 : vector<8x64xf32>
    %cst_65 = arith.constant 5.000000e-01 : f32
    %83 = vector.broadcast %cst_65 : f32 to vector<8x64xf32>
    %84 = arith.addf %82, %83 : vector<8x64xf32>
    %85 = vector.extract_strided_slice %76 {offsets = [0, 64], sizes = [8, 64], strides = [1, 1]} : vector<8x256xf32> to vector<8x64xf32>
    %cst_66 = arith.constant 5.000000e-01 : f32
    %86 = vector.broadcast %cst_66 : f32 to vector<8x64xf32>
    %87 = arith.mulf %86, %85 : vector<8x64xf32>
    %88 = math.tanh %87 : vector<8x64xf32>
    %cst_67 = arith.constant 5.000000e-01 : f32
    %89 = vector.broadcast %cst_67 : f32 to vector<8x64xf32>
    %90 = arith.mulf %89, %88 : vector<8x64xf32>
    %cst_68 = arith.constant 5.000000e-01 : f32
    %91 = vector.broadcast %cst_68 : f32 to vector<8x64xf32>
    %92 = arith.addf %90, %91 : vector<8x64xf32>
    %93 = vector.extract_strided_slice %76 {offsets = [0, 128], sizes = [8, 64], strides = [1, 1]} : vector<8x256xf32> to vector<8x64xf32>
    %94 = math.tanh %93 : vector<8x64xf32>
    %95 = vector.extract_strided_slice %76 {offsets = [0, 192], sizes = [8, 64], strides = [1, 1]} : vector<8x256xf32> to vector<8x64xf32>
    %cst_69 = arith.constant 5.000000e-01 : f32
    %96 = vector.broadcast %cst_69 : f32 to vector<8x64xf32>
    %97 = arith.mulf %96, %95 : vector<8x64xf32>
    %98 = math.tanh %97 : vector<8x64xf32>
    %cst_70 = arith.constant 5.000000e-01 : f32
    %99 = vector.broadcast %cst_70 : f32 to vector<8x64xf32>
    %100 = arith.mulf %99, %98 : vector<8x64xf32>
    %cst_71 = arith.constant 5.000000e-01 : f32
    %101 = vector.broadcast %cst_71 : f32 to vector<8x64xf32>
    %102 = arith.addf %100, %101 : vector<8x64xf32>
    %103 = arith.mulf %92, %72 : vector<8x64xf32>
    %104 = arith.mulf %84, %94 : vector<8x64xf32>
    %105 = arith.addf %103, %104 : vector<8x64xf32>
    %106 = math.tanh %105 : vector<8x64xf32>
    %107 = arith.mulf %102, %106 : vector<8x64xf32>
    %c0_72 = arith.constant 0 : index
    %c0_73 = arith.constant 0 : index
    %108 = vector.load %arg19[%c0_72, %c0_73] : memref<64x64xf32, #tpu.memory_space<vmem>>, vector<8x64xf32>
    tpu.vector_store %arg19[%c0_72, %c0_73], %107 {strides = array<i32>} : memref<64x64xf32, #tpu.memory_space<vmem>>, vector<8x64xf32>,
    %c8_74 = arith.constant 8 : index
    %c0_75 = arith.constant 0 : index
    %109 = vector.load %arg18[%c8_74, %c0_75] : memref<64x256xf32, #tpu.memory_space<vmem>>, vector<8x256xf32>
    %110 = arith.truncf %107 : vector<8x64xf32> to vector<8x64xbf16>
    %cst_76 = arith.constant dense<0.000000e+00> : vector<8x256xf32>
    %111 = tpu.matmul %110, %70, %cst_76 {dimension_numbers = #tpu.dot_dimension_numbers<[1], [0], [0], [1], [0, 0, 1, 1], [], []>} : vector<8x64xbf16>, vector<64x256xbf16>, vector<8x256xf32> -> vector<8x256xf32>
    %112 = arith.addf %109, %111 : vector<8x256xf32>
    %113 = vector.extract_strided_slice %112 {offsets = [0, 0], sizes = [8, 64], strides = [1, 1]} : vector<8x256xf32> to vector<8x64xf32>
    %cst_77 = arith.constant 5.000000e-01 : f32
    %114 = vector.broadcast %cst_77 : f32 to vector<8x64xf32>
    %115 = arith.mulf %114, %113 : vector<8x64xf32>
    %116 = math.tanh %115 : vector<8x64xf32>
    %cst_78 = arith.constant 5.000000e-01 : f32
    %117 = vector.broadcast %cst_78 : f32 to vector<8x64xf32>
    %118 = arith.mulf %117, %116 : vector<8x64xf32>
    %cst_79 = arith.constant 5.000000e-01 : f32
    %119 = vector.broadcast %cst_79 : f32 to vector<8x64xf32>
    %120 = arith.addf %118, %119 : vector<8x64xf32>
    %121 = vector.extract_strided_slice %112 {offsets = [0, 64], sizes = [8, 64], strides = [1, 1]} : vector<8x256xf32> to vector<8x64xf32>
    %cst_80 = arith.constant 5.000000e-01 : f32
    %122 = vector.broadcast %cst_80 : f32 to vector<8x64xf32>
    %123 = arith.mulf %122, %121 : vector<8x64xf32>
    %124 = math.tanh %123 : vector<8x64xf32>
    %cst_81 = arith.constant 5.000000e-01 : f32
    %125 = vector.broadcast %cst_81 : f32 to vector<8x64xf32>
    %126 = arith.mulf %125, %124 : vector<8x64xf32>
    %cst_82 = arith.constant 5.000000e-01 : f32
    %127 = vector.broadcast %cst_82 : f32 to vector<8x64xf32>
    %128 = arith.addf %126, %127 : vector<8x64xf32>
    %129 = vector.extract_strided_slice %112 {offsets = [0, 128], sizes = [8, 64], strides = [1, 1]} : vector<8x256xf32> to vector<8x64xf32>
    %130 = math.tanh %129 : vector<8x64xf32>
    %131 = vector.extract_strided_slice %112 {offsets = [0, 192], sizes = [8, 64], strides = [1, 1]} : vector<8x256xf32> to vector<8x64xf32>
    %cst_83 = arith.constant 5.000000e-01 : f32
    %132 = vector.broadcast %cst_83 : f32 to vector<8x64xf32>
    %133 = arith.mulf %132, %131 : vector<8x64xf32>
    %134 = math.tanh %133 : vector<8x64xf32>
    %cst_84 = arith.constant 5.000000e-01 : f32
    %135 = vector.broadcast %cst_84 : f32 to vector<8x64xf32>
    %136 = arith.mulf %135, %134 : vector<8x64xf32>
    %cst_85 = arith.constant 5.000000e-01 : f32
    %137 = vector.broadcast %cst_85 : f32 to vector<8x64xf32>
    %138 = arith.addf %136, %137 : vector<8x64xf32>
    %139 = arith.mulf %128, %105 : vector<8x64xf32>
    %140 = arith.mulf %120, %130 : vector<8x64xf32>
    %141 = arith.addf %139, %140 : vector<8x64xf32>
    %142 = math.tanh %141 : vector<8x64xf32>
    %143 = arith.mulf %138, %142 : vector<8x64xf32>
    %c8_86 = arith.constant 8 : index
    %c0_87 = arith.constant 0 : index
    %144 = vector.load %arg19[%c8_86, %c0_87] : memref<64x64xf32, #tpu.memory_space<vmem>>, vector<8x64xf32>
    tpu.vector_store %arg19[%c8_86, %c0_87], %143 {strides = array<i32>} : memref<64x64xf32, #tpu.memory_space<vmem>>, vector<8x64xf32>,
    %c16_88 = arith.constant 16 : index
    %c0_89 = arith.constant 0 : index
    %145 = vector.load %arg18[%c16_88, %c0_89] : memref<64x256xf32, #tpu.memory_space<vmem>>, vector<8x256xf32>
    %146 = arith.truncf %143 : vector<8x64xf32> to vector<8x64xbf16>
    %cst_90 = arith.constant dense<0.000000e+00> : vector<8x256xf32>
    %147 = tpu.matmul %146, %70, %cst_90 {dimension_numbers = #tpu.dot_dimension_numbers<[1], [0], [0], [1], [0, 0, 1, 1], [], []>} : vector<8x64xbf16>, vector<64x256xbf16>, vector<8x256xf32> -> vector<8x256xf32>
    %148 = arith.addf %145, %147 : vector<8x256xf32>
    %149 = vector.extract_strided_slice %148 {offsets = [0, 0], sizes = [8, 64], strides = [1, 1]} : vector<8x256xf32> to vector<8x64xf32>
    %cst_91 = arith.constant 5.000000e-01 : f32
    %150 = vector.broadcast %cst_91 : f32 to vector<8x64xf32>
    %151 = arith.mulf %150, %149 : vector<8x64xf32>
    %152 = math.tanh %151 : vector<8x64xf32>
    %cst_92 = arith.constant 5.000000e-01 : f32
    %153 = vector.broadcast %cst_92 : f32 to vector<8x64xf32>
    %154 = arith.mulf %153, %152 : vector<8x64xf32>
    %cst_93 = arith.constant 5.000000e-01 : f32
    %155 = vector.broadcast %cst_93 : f32 to vector<8x64xf32>
    %156 = arith.addf %154, %155 : vector<8x64xf32>
    %157 = vector.extract_strided_slice %148 {offsets = [0, 64], sizes = [8, 64], strides = [1, 1]} : vector<8x256xf32> to vector<8x64xf32>
    %cst_94 = arith.constant 5.000000e-01 : f32
    %158 = vector.broadcast %cst_94 : f32 to vector<8x64xf32>
    %159 = arith.mulf %158, %157 : vector<8x64xf32>
    %160 = math.tanh %159 : vector<8x64xf32>
    %cst_95 = arith.constant 5.000000e-01 : f32
    %161 = vector.broadcast %cst_95 : f32 to vector<8x64xf32>
    %162 = arith.mulf %161, %160 : vector<8x64xf32>
    %cst_96 = arith.constant 5.000000e-01 : f32
    %163 = vector.broadcast %cst_96 : f32 to vector<8x64xf32>
    %164 = arith.addf %162, %163 : vector<8x64xf32>
    %165 = vector.extract_strided_slice %148 {offsets = [0, 128], sizes = [8, 64], strides = [1, 1]} : vector<8x256xf32> to vector<8x64xf32>
    %166 = math.tanh %165 : vector<8x64xf32>
    %167 = vector.extract_strided_slice %148 {offsets = [0, 192], sizes = [8, 64], strides = [1, 1]} : vector<8x256xf32> to vector<8x64xf32>
    %cst_97 = arith.constant 5.000000e-01 : f32
    %168 = vector.broadcast %cst_97 : f32 to vector<8x64xf32>
    %169 = arith.mulf %168, %167 : vector<8x64xf32>
    %170 = math.tanh %169 : vector<8x64xf32>
    %cst_98 = arith.constant 5.000000e-01 : f32
    %171 = vector.broadcast %cst_98 : f32 to vector<8x64xf32>
    %172 = arith.mulf %171, %170 : vector<8x64xf32>
    %cst_99 = arith.constant 5.000000e-01 : f32
    %173 = vector.broadcast %cst_99 : f32 to vector<8x64xf32>
    %174 = arith.addf %172, %173 : vector<8x64xf32>
    %175 = arith.mulf %164, %141 : vector<8x64xf32>
    %176 = arith.mulf %156, %166 : vector<8x64xf32>
    %177 = arith.addf %175, %176 : vector<8x64xf32>
    %178 = math.tanh %177 : vector<8x64xf32>
    %179 = arith.mulf %174, %178 : vector<8x64xf32>
    %c16_100 = arith.constant 16 : index
    %c0_101 = arith.constant 0 : index
    %180 = vector.load %arg19[%c16_100, %c0_101] : memref<64x64xf32, #tpu.memory_space<vmem>>, vector<8x64xf32>
    tpu.vector_store %arg19[%c16_100, %c0_101], %179 {strides = array<i32>} : memref<64x64xf32, #tpu.memory_space<vmem>>, vector<8x64xf32>,
    %c24_102 = arith.constant 24 : index
    %c0_103 = arith.constant 0 : index
    %181 = vector.load %arg18[%c24_102, %c0_103] : memref<64x256xf32, #tpu.memory_space<vmem>>, vector<8x256xf32>
    %182 = arith.truncf %179 : vector<8x64xf32> to vector<8x64xbf16>
    %cst_104 = arith.constant dense<0.000000e+00> : vector<8x256xf32>
    %183 = tpu.matmul %182, %70, %cst_104 {dimension_numbers = #tpu.dot_dimension_numbers<[1], [0], [0], [1], [0, 0, 1, 1], [], []>} : vector<8x64xbf16>, vector<64x256xbf16>, vector<8x256xf32> -> vector<8x256xf32>
    %184 = arith.addf %181, %183 : vector<8x256xf32>
    %185 = vector.extract_strided_slice %184 {offsets = [0, 0], sizes = [8, 64], strides = [1, 1]} : vector<8x256xf32> to vector<8x64xf32>
    %cst_105 = arith.constant 5.000000e-01 : f32
    %186 = vector.broadcast %cst_105 : f32 to vector<8x64xf32>
    %187 = arith.mulf %186, %185 : vector<8x64xf32>
    %188 = math.tanh %187 : vector<8x64xf32>
    %cst_106 = arith.constant 5.000000e-01 : f32
    %189 = vector.broadcast %cst_106 : f32 to vector<8x64xf32>
    %190 = arith.mulf %189, %188 : vector<8x64xf32>
    %cst_107 = arith.constant 5.000000e-01 : f32
    %191 = vector.broadcast %cst_107 : f32 to vector<8x64xf32>
    %192 = arith.addf %190, %191 : vector<8x64xf32>
    %193 = vector.extract_strided_slice %184 {offsets = [0, 64], sizes = [8, 64], strides = [1, 1]} : vector<8x256xf32> to vector<8x64xf32>
    %cst_108 = arith.constant 5.000000e-01 : f32
    %194 = vector.broadcast %cst_108 : f32 to vector<8x64xf32>
    %195 = arith.mulf %194, %193 : vector<8x64xf32>
    %196 = math.tanh %195 : vector<8x64xf32>
    %cst_109 = arith.constant 5.000000e-01 : f32
    %197 = vector.broadcast %cst_109 : f32 to vector<8x64xf32>
    %198 = arith.mulf %197, %196 : vector<8x64xf32>
    %cst_110 = arith.constant 5.000000e-01 : f32
    %199 = vector.broadcast %cst_110 : f32 to vector<8x64xf32>
    %200 = arith.addf %198, %199 : vector<8x64xf32>
    %201 = vector.extract_strided_slice %184 {offsets = [0, 128], sizes = [8, 64], strides = [1, 1]} : vector<8x256xf32> to vector<8x64xf32>
    %202 = math.tanh %201 : vector<8x64xf32>
    %203 = vector.extract_strided_slice %184 {offsets = [0, 192], sizes = [8, 64], strides = [1, 1]} : vector<8x256xf32> to vector<8x64xf32>
    %cst_111 = arith.constant 5.000000e-01 : f32
    %204 = vector.broadcast %cst_111 : f32 to vector<8x64xf32>
    %205 = arith.mulf %204, %203 : vector<8x64xf32>
    %206 = math.tanh %205 : vector<8x64xf32>
    %cst_112 = arith.constant 5.000000e-01 : f32
    %207 = vector.broadcast %cst_112 : f32 to vector<8x64xf32>
    %208 = arith.mulf %207, %206 : vector<8x64xf32>
    %cst_113 = arith.constant 5.000000e-01 : f32
    %209 = vector.broadcast %cst_113 : f32 to vector<8x64xf32>
    %210 = arith.addf %208, %209 : vector<8x64xf32>
    %211 = arith.mulf %200, %177 : vector<8x64xf32>
    %212 = arith.mulf %192, %202 : vector<8x64xf32>
    %213 = arith.addf %211, %212 : vector<8x64xf32>
    %214 = math.tanh %213 : vector<8x64xf32>
    %215 = arith.mulf %210, %214 : vector<8x64xf32>
    %c24_114 = arith.constant 24 : index
    %c0_115 = arith.constant 0 : index
    %216 = vector.load %arg19[%c24_114, %c0_115] : memref<64x64xf32, #tpu.memory_space<vmem>>, vector<8x64xf32>
    tpu.vector_store %arg19[%c24_114, %c0_115], %215 {strides = array<i32>} : memref<64x64xf32, #tpu.memory_space<vmem>>, vector<8x64xf32>,
    %c32_116 = arith.constant 32 : index
    %c0_117 = arith.constant 0 : index
    %217 = vector.load %arg18[%c32_116, %c0_117] : memref<64x256xf32, #tpu.memory_space<vmem>>, vector<8x256xf32>
    %218 = arith.truncf %215 : vector<8x64xf32> to vector<8x64xbf16>
    %cst_118 = arith.constant dense<0.000000e+00> : vector<8x256xf32>
    %219 = tpu.matmul %218, %70, %cst_118 {dimension_numbers = #tpu.dot_dimension_numbers<[1], [0], [0], [1], [0, 0, 1, 1], [], []>} : vector<8x64xbf16>, vector<64x256xbf16>, vector<8x256xf32> -> vector<8x256xf32>
    %220 = arith.addf %217, %219 : vector<8x256xf32>
    %221 = vector.extract_strided_slice %220 {offsets = [0, 0], sizes = [8, 64], strides = [1, 1]} : vector<8x256xf32> to vector<8x64xf32>
    %cst_119 = arith.constant 5.000000e-01 : f32
    %222 = vector.broadcast %cst_119 : f32 to vector<8x64xf32>
    %223 = arith.mulf %222, %221 : vector<8x64xf32>
    %224 = math.tanh %223 : vector<8x64xf32>
    %cst_120 = arith.constant 5.000000e-01 : f32
    %225 = vector.broadcast %cst_120 : f32 to vector<8x64xf32>
    %226 = arith.mulf %225, %224 : vector<8x64xf32>
    %cst_121 = arith.constant 5.000000e-01 : f32
    %227 = vector.broadcast %cst_121 : f32 to vector<8x64xf32>
    %228 = arith.addf %226, %227 : vector<8x64xf32>
    %229 = vector.extract_strided_slice %220 {offsets = [0, 64], sizes = [8, 64], strides = [1, 1]} : vector<8x256xf32> to vector<8x64xf32>
    %cst_122 = arith.constant 5.000000e-01 : f32
    %230 = vector.broadcast %cst_122 : f32 to vector<8x64xf32>
    %231 = arith.mulf %230, %229 : vector<8x64xf32>
    %232 = math.tanh %231 : vector<8x64xf32>
    %cst_123 = arith.constant 5.000000e-01 : f32
    %233 = vector.broadcast %cst_123 : f32 to vector<8x64xf32>
    %234 = arith.mulf %233, %232 : vector<8x64xf32>
    %cst_124 = arith.constant 5.000000e-01 : f32
    %235 = vector.broadcast %cst_124 : f32 to vector<8x64xf32>
    %236 = arith.addf %234, %235 : vector<8x64xf32>
    %237 = vector.extract_strided_slice %220 {offsets = [0, 128], sizes = [8, 64], strides = [1, 1]} : vector<8x256xf32> to vector<8x64xf32>
    %238 = math.tanh %237 : vector<8x64xf32>
    %239 = vector.extract_strided_slice %220 {offsets = [0, 192], sizes = [8, 64], strides = [1, 1]} : vector<8x256xf32> to vector<8x64xf32>
    %cst_125 = arith.constant 5.000000e-01 : f32
    %240 = vector.broadcast %cst_125 : f32 to vector<8x64xf32>
    %241 = arith.mulf %240, %239 : vector<8x64xf32>
    %242 = math.tanh %241 : vector<8x64xf32>
    %cst_126 = arith.constant 5.000000e-01 : f32
    %243 = vector.broadcast %cst_126 : f32 to vector<8x64xf32>
    %244 = arith.mulf %243, %242 : vector<8x64xf32>
    %cst_127 = arith.constant 5.000000e-01 : f32
    %245 = vector.broadcast %cst_127 : f32 to vector<8x64xf32>
    %246 = arith.addf %244, %245 : vector<8x64xf32>
    %247 = arith.mulf %236, %213 : vector<8x64xf32>
    %248 = arith.mulf %228, %238 : vector<8x64xf32>
    %249 = arith.addf %247, %248 : vector<8x64xf32>
    %250 = math.tanh %249 : vector<8x64xf32>
    %251 = arith.mulf %246, %250 : vector<8x64xf32>
    %c32_128 = arith.constant 32 : index
    %c0_129 = arith.constant 0 : index
    %252 = vector.load %arg19[%c32_128, %c0_129] : memref<64x64xf32, #tpu.memory_space<vmem>>, vector<8x64xf32>
    tpu.vector_store %arg19[%c32_128, %c0_129], %251 {strides = array<i32>} : memref<64x64xf32, #tpu.memory_space<vmem>>, vector<8x64xf32>,
    %c40_130 = arith.constant 40 : index
    %c0_131 = arith.constant 0 : index
    %253 = vector.load %arg18[%c40_130, %c0_131] : memref<64x256xf32, #tpu.memory_space<vmem>>, vector<8x256xf32>
    %254 = arith.truncf %251 : vector<8x64xf32> to vector<8x64xbf16>
    %cst_132 = arith.constant dense<0.000000e+00> : vector<8x256xf32>
    %255 = tpu.matmul %254, %70, %cst_132 {dimension_numbers = #tpu.dot_dimension_numbers<[1], [0], [0], [1], [0, 0, 1, 1], [], []>} : vector<8x64xbf16>, vector<64x256xbf16>, vector<8x256xf32> -> vector<8x256xf32>
    %256 = arith.addf %253, %255 : vector<8x256xf32>
    %257 = vector.extract_strided_slice %256 {offsets = [0, 0], sizes = [8, 64], strides = [1, 1]} : vector<8x256xf32> to vector<8x64xf32>
    %cst_133 = arith.constant 5.000000e-01 : f32
    %258 = vector.broadcast %cst_133 : f32 to vector<8x64xf32>
    %259 = arith.mulf %258, %257 : vector<8x64xf32>
    %260 = math.tanh %259 : vector<8x64xf32>
    %cst_134 = arith.constant 5.000000e-01 : f32
    %261 = vector.broadcast %cst_134 : f32 to vector<8x64xf32>
    %262 = arith.mulf %261, %260 : vector<8x64xf32>
    %cst_135 = arith.constant 5.000000e-01 : f32
    %263 = vector.broadcast %cst_135 : f32 to vector<8x64xf32>
    %264 = arith.addf %262, %263 : vector<8x64xf32>
    %265 = vector.extract_strided_slice %256 {offsets = [0, 64], sizes = [8, 64], strides = [1, 1]} : vector<8x256xf32> to vector<8x64xf32>
    %cst_136 = arith.constant 5.000000e-01 : f32
    %266 = vector.broadcast %cst_136 : f32 to vector<8x64xf32>
    %267 = arith.mulf %266, %265 : vector<8x64xf32>
    %268 = math.tanh %267 : vector<8x64xf32>
    %cst_137 = arith.constant 5.000000e-01 : f32
    %269 = vector.broadcast %cst_137 : f32 to vector<8x64xf32>
    %270 = arith.mulf %269, %268 : vector<8x64xf32>
    %cst_138 = arith.constant 5.000000e-01 : f32
    %271 = vector.broadcast %cst_138 : f32 to vector<8x64xf32>
    %272 = arith.addf %270, %271 : vector<8x64xf32>
    %273 = vector.extract_strided_slice %256 {offsets = [0, 128], sizes = [8, 64], strides = [1, 1]} : vector<8x256xf32> to vector<8x64xf32>
    %274 = math.tanh %273 : vector<8x64xf32>
    %275 = vector.extract_strided_slice %256 {offsets = [0, 192], sizes = [8, 64], strides = [1, 1]} : vector<8x256xf32> to vector<8x64xf32>
    %cst_139 = arith.constant 5.000000e-01 : f32
    %276 = vector.broadcast %cst_139 : f32 to vector<8x64xf32>
    %277 = arith.mulf %276, %275 : vector<8x64xf32>
    %278 = math.tanh %277 : vector<8x64xf32>
    %cst_140 = arith.constant 5.000000e-01 : f32
    %279 = vector.broadcast %cst_140 : f32 to vector<8x64xf32>
    %280 = arith.mulf %279, %278 : vector<8x64xf32>
    %cst_141 = arith.constant 5.000000e-01 : f32
    %281 = vector.broadcast %cst_141 : f32 to vector<8x64xf32>
    %282 = arith.addf %280, %281 : vector<8x64xf32>
    %283 = arith.mulf %272, %249 : vector<8x64xf32>
    %284 = arith.mulf %264, %274 : vector<8x64xf32>
    %285 = arith.addf %283, %284 : vector<8x64xf32>
    %286 = math.tanh %285 : vector<8x64xf32>
    %287 = arith.mulf %282, %286 : vector<8x64xf32>
    %c40_142 = arith.constant 40 : index
    %c0_143 = arith.constant 0 : index
    %288 = vector.load %arg19[%c40_142, %c0_143] : memref<64x64xf32, #tpu.memory_space<vmem>>, vector<8x64xf32>
    tpu.vector_store %arg19[%c40_142, %c0_143], %287 {strides = array<i32>} : memref<64x64xf32, #tpu.memory_space<vmem>>, vector<8x64xf32>,
    %c48_144 = arith.constant 48 : index
    %c0_145 = arith.constant 0 : index
    %289 = vector.load %arg18[%c48_144, %c0_145] : memref<64x256xf32, #tpu.memory_space<vmem>>, vector<8x256xf32>
    %290 = arith.truncf %287 : vector<8x64xf32> to vector<8x64xbf16>
    %cst_146 = arith.constant dense<0.000000e+00> : vector<8x256xf32>
    %291 = tpu.matmul %290, %70, %cst_146 {dimension_numbers = #tpu.dot_dimension_numbers<[1], [0], [0], [1], [0, 0, 1, 1], [], []>} : vector<8x64xbf16>, vector<64x256xbf16>, vector<8x256xf32> -> vector<8x256xf32>
    %292 = arith.addf %289, %291 : vector<8x256xf32>
    %293 = vector.extract_strided_slice %292 {offsets = [0, 0], sizes = [8, 64], strides = [1, 1]} : vector<8x256xf32> to vector<8x64xf32>
    %cst_147 = arith.constant 5.000000e-01 : f32
    %294 = vector.broadcast %cst_147 : f32 to vector<8x64xf32>
    %295 = arith.mulf %294, %293 : vector<8x64xf32>
    %296 = math.tanh %295 : vector<8x64xf32>
    %cst_148 = arith.constant 5.000000e-01 : f32
    %297 = vector.broadcast %cst_148 : f32 to vector<8x64xf32>
    %298 = arith.mulf %297, %296 : vector<8x64xf32>
    %cst_149 = arith.constant 5.000000e-01 : f32
    %299 = vector.broadcast %cst_149 : f32 to vector<8x64xf32>
    %300 = arith.addf %298, %299 : vector<8x64xf32>
    %301 = vector.extract_strided_slice %292 {offsets = [0, 64], sizes = [8, 64], strides = [1, 1]} : vector<8x256xf32> to vector<8x64xf32>
    %cst_150 = arith.constant 5.000000e-01 : f32
    %302 = vector.broadcast %cst_150 : f32 to vector<8x64xf32>
    %303 = arith.mulf %302, %301 : vector<8x64xf32>
    %304 = math.tanh %303 : vector<8x64xf32>
    %cst_151 = arith.constant 5.000000e-01 : f32
    %305 = vector.broadcast %cst_151 : f32 to vector<8x64xf32>
    %306 = arith.mulf %305, %304 : vector<8x64xf32>
    %cst_152 = arith.constant 5.000000e-01 : f32
    %307 = vector.broadcast %cst_152 : f32 to vector<8x64xf32>
    %308 = arith.addf %306, %307 : vector<8x64xf32>
    %309 = vector.extract_strided_slice %292 {offsets = [0, 128], sizes = [8, 64], strides = [1, 1]} : vector<8x256xf32> to vector<8x64xf32>
    %310 = math.tanh %309 : vector<8x64xf32>
    %311 = vector.extract_strided_slice %292 {offsets = [0, 192], sizes = [8, 64], strides = [1, 1]} : vector<8x256xf32> to vector<8x64xf32>
    %cst_153 = arith.constant 5.000000e-01 : f32
    %312 = vector.broadcast %cst_153 : f32 to vector<8x64xf32>
    %313 = arith.mulf %312, %311 : vector<8x64xf32>
    %314 = math.tanh %313 : vector<8x64xf32>
    %cst_154 = arith.constant 5.000000e-01 : f32
    %315 = vector.broadcast %cst_154 : f32 to vector<8x64xf32>
    %316 = arith.mulf %315, %314 : vector<8x64xf32>
    %cst_155 = arith.constant 5.000000e-01 : f32
    %317 = vector.broadcast %cst_155 : f32 to vector<8x64xf32>
    %318 = arith.addf %316, %317 : vector<8x64xf32>
    %319 = arith.mulf %308, %285 : vector<8x64xf32>
    %320 = arith.mulf %300, %310 : vector<8x64xf32>
    %321 = arith.addf %319, %320 : vector<8x64xf32>
    %322 = math.tanh %321 : vector<8x64xf32>
    %323 = arith.mulf %318, %322 : vector<8x64xf32>
    %c48_156 = arith.constant 48 : index
    %c0_157 = arith.constant 0 : index
    %324 = vector.load %arg19[%c48_156, %c0_157] : memref<64x64xf32, #tpu.memory_space<vmem>>, vector<8x64xf32>
    tpu.vector_store %arg19[%c48_156, %c0_157], %323 {strides = array<i32>} : memref<64x64xf32, #tpu.memory_space<vmem>>, vector<8x64xf32>,
    %c56_158 = arith.constant 56 : index
    %c0_159 = arith.constant 0 : index
    %325 = vector.load %arg18[%c56_158, %c0_159] : memref<64x256xf32, #tpu.memory_space<vmem>>, vector<8x256xf32>
    %326 = arith.truncf %323 : vector<8x64xf32> to vector<8x64xbf16>
    %cst_160 = arith.constant dense<0.000000e+00> : vector<8x256xf32>
    %327 = tpu.matmul %326, %70, %cst_160 {dimension_numbers = #tpu.dot_dimension_numbers<[1], [0], [0], [1], [0, 0, 1, 1], [], []>} : vector<8x64xbf16>, vector<64x256xbf16>, vector<8x256xf32> -> vector<8x256xf32>
    %328 = arith.addf %325, %327 : vector<8x256xf32>
    %329 = vector.extract_strided_slice %328 {offsets = [0, 0], sizes = [8, 64], strides = [1, 1]} : vector<8x256xf32> to vector<8x64xf32>
    %cst_161 = arith.constant 5.000000e-01 : f32
    %330 = vector.broadcast %cst_161 : f32 to vector<8x64xf32>
    %331 = arith.mulf %330, %329 : vector<8x64xf32>
    %332 = math.tanh %331 : vector<8x64xf32>
    %cst_162 = arith.constant 5.000000e-01 : f32
    %333 = vector.broadcast %cst_162 : f32 to vector<8x64xf32>
    %334 = arith.mulf %333, %332 : vector<8x64xf32>
    %cst_163 = arith.constant 5.000000e-01 : f32
    %335 = vector.broadcast %cst_163 : f32 to vector<8x64xf32>
    %336 = arith.addf %334, %335 : vector<8x64xf32>
    %337 = vector.extract_strided_slice %328 {offsets = [0, 64], sizes = [8, 64], strides = [1, 1]} : vector<8x256xf32> to vector<8x64xf32>
    %cst_164 = arith.constant 5.000000e-01 : f32
    %338 = vector.broadcast %cst_164 : f32 to vector<8x64xf32>
    %339 = arith.mulf %338, %337 : vector<8x64xf32>
    %340 = math.tanh %339 : vector<8x64xf32>
    %cst_165 = arith.constant 5.000000e-01 : f32
    %341 = vector.broadcast %cst_165 : f32 to vector<8x64xf32>
    %342 = arith.mulf %341, %340 : vector<8x64xf32>
    %cst_166 = arith.constant 5.000000e-01 : f32
    %343 = vector.broadcast %cst_166 : f32 to vector<8x64xf32>
    %344 = arith.addf %342, %343 : vector<8x64xf32>
    %345 = vector.extract_strided_slice %328 {offsets = [0, 128], sizes = [8, 64], strides = [1, 1]} : vector<8x256xf32> to vector<8x64xf32>
    %346 = math.tanh %345 : vector<8x64xf32>
    %347 = vector.extract_strided_slice %328 {offsets = [0, 192], sizes = [8, 64], strides = [1, 1]} : vector<8x256xf32> to vector<8x64xf32>
    %cst_167 = arith.constant 5.000000e-01 : f32
    %348 = vector.broadcast %cst_167 : f32 to vector<8x64xf32>
    %349 = arith.mulf %348, %347 : vector<8x64xf32>
    %350 = math.tanh %349 : vector<8x64xf32>
    %cst_168 = arith.constant 5.000000e-01 : f32
    %351 = vector.broadcast %cst_168 : f32 to vector<8x64xf32>
    %352 = arith.mulf %351, %350 : vector<8x64xf32>
    %cst_169 = arith.constant 5.000000e-01 : f32
    %353 = vector.broadcast %cst_169 : f32 to vector<8x64xf32>
    %354 = arith.addf %352, %353 : vector<8x64xf32>
    %355 = arith.mulf %344, %321 : vector<8x64xf32>
    %356 = arith.mulf %336, %346 : vector<8x64xf32>
    %357 = arith.addf %355, %356 : vector<8x64xf32>
    %358 = math.tanh %357 : vector<8x64xf32>
    %359 = arith.mulf %354, %358 : vector<8x64xf32>
    %c56_170 = arith.constant 56 : index
    %c0_171 = arith.constant 0 : index
    %360 = vector.load %arg19[%c56_170, %c0_171] : memref<64x64xf32, #tpu.memory_space<vmem>>, vector<8x64xf32>
    tpu.vector_store %arg19[%c56_170, %c0_171], %359 {strides = array<i32>} : memref<64x64xf32, #tpu.memory_space<vmem>>, vector<8x64xf32>,
    %c0_172 = arith.constant 0 : index
    %c0_173 = arith.constant 0 : index
    %361 = vector.load %arg19[%c0_172, %c0_173] : memref<64x64xf32, #tpu.memory_space<vmem>>, vector<64x64xf32>
    %362 = arith.truncf %361 : vector<64x64xf32> to vector<64x64xbf16>
    %c0_174 = arith.constant 0 : index
    %c0_175 = arith.constant 0 : index
    %363 = vector.load %arg7[%c0_174, %c0_175] : memref<64x512xbf16, #tpu.memory_space<vmem>>, vector<64x512xbf16>
    %cst_176 = arith.constant dense<0.000000e+00> : vector<64x512xf32>
    %364 = tpu.matmul %362, %363, %cst_176 {dimension_numbers = #tpu.dot_dimension_numbers<[1], [0], [0], [1], [0, 0, 1, 1], [], []>} : vector<64x64xbf16>, vector<64x512xbf16>, vector<64x512xf32> -> vector<64x512xf32>
    %c0_177 = arith.constant 0 : index
    %c0_178 = arith.constant 0 : index
    %365 = vector.load %arg17[%c0_177, %c0_178] : memref<64x512xf32, #tpu.memory_space<vmem>>, vector<64x512xf32>
    tpu.vector_store %arg17[%c0_177, %c0_178], %364 {strides = array<i32>} : memref<64x512xf32, #tpu.memory_space<vmem>>, vector<64x512xf32>,
    %c0_179 = arith.constant 0 : index
    %c0_180 = arith.constant 0 : index
    %366 = vector.load %arg8[%c0_179, %c0_180] : memref<1x256xf32, #tpu.memory_space<vmem>>, vector<1x256xf32>
    %c0_181 = arith.constant 0 : index
    %c0_182 = arith.constant 0 : index
    %367 = vector.load %arg17[%c0_181, %c0_182] : memref<64x512xf32, #tpu.memory_space<vmem>>, vector<8x256xf32>
    %c56_183 = arith.constant 56 : index
    %c256_184 = arith.constant 256 : index
    %368 = vector.load %arg17[%c56_183, %c256_184] : memref<64x512xf32, #tpu.memory_space<vmem>>, vector<8x256xf32>
    %369 = arith.addf %367, %368 : vector<8x256xf32>
    %370 = vector.broadcast %366 : vector<1x256xf32> to vector<8x256xf32>
    %371 = arith.addf %369, %370 : vector<8x256xf32>
    %c0_185 = arith.constant 0 : index
    %c0_186 = arith.constant 0 : index
    %372 = vector.load %arg18[%c0_185, %c0_186] : memref<64x256xf32, #tpu.memory_space<vmem>>, vector<8x256xf32>
    tpu.vector_store %arg18[%c0_185, %c0_186], %371 {strides = array<i32>} : memref<64x256xf32, #tpu.memory_space<vmem>>, vector<8x256xf32>,
    %c8_187 = arith.constant 8 : index
    %c0_188 = arith.constant 0 : index
    %373 = vector.load %arg17[%c8_187, %c0_188] : memref<64x512xf32, #tpu.memory_space<vmem>>, vector<8x256xf32>
    %c48_189 = arith.constant 48 : index
    %c256_190 = arith.constant 256 : index
    %374 = vector.load %arg17[%c48_189, %c256_190] : memref<64x512xf32, #tpu.memory_space<vmem>>, vector<8x256xf32>
    %375 = arith.addf %373, %374 : vector<8x256xf32>
    %376 = vector.broadcast %366 : vector<1x256xf32> to vector<8x256xf32>
    %377 = arith.addf %375, %376 : vector<8x256xf32>
    %c8_191 = arith.constant 8 : index
    %c0_192 = arith.constant 0 : index
    %378 = vector.load %arg18[%c8_191, %c0_192] : memref<64x256xf32, #tpu.memory_space<vmem>>, vector<8x256xf32>
    tpu.vector_store %arg18[%c8_191, %c0_192], %377 {strides = array<i32>} : memref<64x256xf32, #tpu.memory_space<vmem>>, vector<8x256xf32>,
    %c16_193 = arith.constant 16 : index
    %c0_194 = arith.constant 0 : index
    %379 = vector.load %arg17[%c16_193, %c0_194] : memref<64x512xf32, #tpu.memory_space<vmem>>, vector<8x256xf32>
    %c40_195 = arith.constant 40 : index
    %c256_196 = arith.constant 256 : index
    %380 = vector.load %arg17[%c40_195, %c256_196] : memref<64x512xf32, #tpu.memory_space<vmem>>, vector<8x256xf32>
    %381 = arith.addf %379, %380 : vector<8x256xf32>
    %382 = vector.broadcast %366 : vector<1x256xf32> to vector<8x256xf32>
    %383 = arith.addf %381, %382 : vector<8x256xf32>
    %c16_197 = arith.constant 16 : index
    %c0_198 = arith.constant 0 : index
    %384 = vector.load %arg18[%c16_197, %c0_198] : memref<64x256xf32, #tpu.memory_space<vmem>>, vector<8x256xf32>
    tpu.vector_store %arg18[%c16_197, %c0_198], %383 {strides = array<i32>} : memref<64x256xf32, #tpu.memory_space<vmem>>, vector<8x256xf32>,
    %c24_199 = arith.constant 24 : index
    %c0_200 = arith.constant 0 : index
    %385 = vector.load %arg17[%c24_199, %c0_200] : memref<64x512xf32, #tpu.memory_space<vmem>>, vector<8x256xf32>
    %c32_201 = arith.constant 32 : index
    %c256_202 = arith.constant 256 : index
    %386 = vector.load %arg17[%c32_201, %c256_202] : memref<64x512xf32, #tpu.memory_space<vmem>>, vector<8x256xf32>
    %387 = arith.addf %385, %386 : vector<8x256xf32>
    %388 = vector.broadcast %366 : vector<1x256xf32> to vector<8x256xf32>
    %389 = arith.addf %387, %388 : vector<8x256xf32>
    %c24_203 = arith.constant 24 : index
    %c0_204 = arith.constant 0 : index
    %390 = vector.load %arg18[%c24_203, %c0_204] : memref<64x256xf32, #tpu.memory_space<vmem>>, vector<8x256xf32>
    tpu.vector_store %arg18[%c24_203, %c0_204], %389 {strides = array<i32>} : memref<64x256xf32, #tpu.memory_space<vmem>>, vector<8x256xf32>,
    %c32_205 = arith.constant 32 : index
    %c0_206 = arith.constant 0 : index
    %391 = vector.load %arg17[%c32_205, %c0_206] : memref<64x512xf32, #tpu.memory_space<vmem>>, vector<8x256xf32>
    %c24_207 = arith.constant 24 : index
    %c256_208 = arith.constant 256 : index
    %392 = vector.load %arg17[%c24_207, %c256_208] : memref<64x512xf32, #tpu.memory_space<vmem>>, vector<8x256xf32>
    %393 = arith.addf %391, %392 : vector<8x256xf32>
    %394 = vector.broadcast %366 : vector<1x256xf32> to vector<8x256xf32>
    %395 = arith.addf %393, %394 : vector<8x256xf32>
    %c32_209 = arith.constant 32 : index
    %c0_210 = arith.constant 0 : index
    %396 = vector.load %arg18[%c32_209, %c0_210] : memref<64x256xf32, #tpu.memory_space<vmem>>, vector<8x256xf32>
    tpu.vector_store %arg18[%c32_209, %c0_210], %395 {strides = array<i32>} : memref<64x256xf32, #tpu.memory_space<vmem>>, vector<8x256xf32>,
    %c40_211 = arith.constant 40 : index
    %c0_212 = arith.constant 0 : index
    %397 = vector.load %arg17[%c40_211, %c0_212] : memref<64x512xf32, #tpu.memory_space<vmem>>, vector<8x256xf32>
    %c16_213 = arith.constant 16 : index
    %c256_214 = arith.constant 256 : index
    %398 = vector.load %arg17[%c16_213, %c256_214] : memref<64x512xf32, #tpu.memory_space<vmem>>, vector<8x256xf32>
    %399 = arith.addf %397, %398 : vector<8x256xf32>
    %400 = vector.broadcast %366 : vector<1x256xf32> to vector<8x256xf32>
    %401 = arith.addf %399, %400 : vector<8x256xf32>
    %c40_215 = arith.constant 40 : index
    %c0_216 = arith.constant 0 : index
    %402 = vector.load %arg18[%c40_215, %c0_216] : memref<64x256xf32, #tpu.memory_space<vmem>>, vector<8x256xf32>
    tpu.vector_store %arg18[%c40_215, %c0_216], %401 {strides = array<i32>} : memref<64x256xf32, #tpu.memory_space<vmem>>, vector<8x256xf32>,
    %c48_217 = arith.constant 48 : index
    %c0_218 = arith.constant 0 : index
    %403 = vector.load %arg17[%c48_217, %c0_218] : memref<64x512xf32, #tpu.memory_space<vmem>>, vector<8x256xf32>
    %c8_219 = arith.constant 8 : index
    %c256_220 = arith.constant 256 : index
    %404 = vector.load %arg17[%c8_219, %c256_220] : memref<64x512xf32, #tpu.memory_space<vmem>>, vector<8x256xf32>
    %405 = arith.addf %403, %404 : vector<8x256xf32>
    %406 = vector.broadcast %366 : vector<1x256xf32> to vector<8x256xf32>
    %407 = arith.addf %405, %406 : vector<8x256xf32>
    %c48_221 = arith.constant 48 : index
    %c0_222 = arith.constant 0 : index
    %408 = vector.load %arg18[%c48_221, %c0_222] : memref<64x256xf32, #tpu.memory_space<vmem>>, vector<8x256xf32>
    tpu.vector_store %arg18[%c48_221, %c0_222], %407 {strides = array<i32>} : memref<64x256xf32, #tpu.memory_space<vmem>>, vector<8x256xf32>,
    %c56_223 = arith.constant 56 : index
    %c0_224 = arith.constant 0 : index
    %409 = vector.load %arg17[%c56_223, %c0_224] : memref<64x512xf32, #tpu.memory_space<vmem>>, vector<8x256xf32>
    %c0_225 = arith.constant 0 : index
    %c256_226 = arith.constant 256 : index
    %410 = vector.load %arg17[%c0_225, %c256_226] : memref<64x512xf32, #tpu.memory_space<vmem>>, vector<8x256xf32>
    %411 = arith.addf %409, %410 : vector<8x256xf32>
    %412 = vector.broadcast %366 : vector<1x256xf32> to vector<8x256xf32>
    %413 = arith.addf %411, %412 : vector<8x256xf32>
    %c56_227 = arith.constant 56 : index
    %c0_228 = arith.constant 0 : index
    %414 = vector.load %arg18[%c56_227, %c0_228] : memref<64x256xf32, #tpu.memory_space<vmem>>, vector<8x256xf32>
    tpu.vector_store %arg18[%c56_227, %c0_228], %413 {strides = array<i32>} : memref<64x256xf32, #tpu.memory_space<vmem>>, vector<8x256xf32>,
    %c0_229 = arith.constant 0 : index
    %c0_230 = arith.constant 0 : index
    %415 = vector.load %arg9[%c0_229, %c0_230] : memref<64x256xbf16, #tpu.memory_space<vmem>>, vector<64x256xbf16>
    %cst_231 = arith.constant 0.000000e+00 : f32
    %416 = vector.broadcast %cst_231 : f32 to vector<8x64xf32>
    %cst_232 = arith.constant 0.000000e+00 : f32
    %417 = vector.broadcast %cst_232 : f32 to vector<8x64xf32>
    %c0_233 = arith.constant 0 : index
    %c0_234 = arith.constant 0 : index
    %418 = vector.load %arg18[%c0_233, %c0_234] : memref<64x256xf32, #tpu.memory_space<vmem>>, vector<8x256xf32>
    %419 = arith.truncf %416 : vector<8x64xf32> to vector<8x64xbf16>
    %cst_235 = arith.constant dense<0.000000e+00> : vector<8x256xf32>
    %420 = tpu.matmul %419, %415, %cst_235 {dimension_numbers = #tpu.dot_dimension_numbers<[1], [0], [0], [1], [0, 0, 1, 1], [], []>} : vector<8x64xbf16>, vector<64x256xbf16>, vector<8x256xf32> -> vector<8x256xf32>
    %421 = arith.addf %418, %420 : vector<8x256xf32>
    %422 = vector.extract_strided_slice %421 {offsets = [0, 0], sizes = [8, 64], strides = [1, 1]} : vector<8x256xf32> to vector<8x64xf32>
    %cst_236 = arith.constant 5.000000e-01 : f32
    %423 = vector.broadcast %cst_236 : f32 to vector<8x64xf32>
    %424 = arith.mulf %423, %422 : vector<8x64xf32>
    %425 = math.tanh %424 : vector<8x64xf32>
    %cst_237 = arith.constant 5.000000e-01 : f32
    %426 = vector.broadcast %cst_237 : f32 to vector<8x64xf32>
    %427 = arith.mulf %426, %425 : vector<8x64xf32>
    %cst_238 = arith.constant 5.000000e-01 : f32
    %428 = vector.broadcast %cst_238 : f32 to vector<8x64xf32>
    %429 = arith.addf %427, %428 : vector<8x64xf32>
    %430 = vector.extract_strided_slice %421 {offsets = [0, 64], sizes = [8, 64], strides = [1, 1]} : vector<8x256xf32> to vector<8x64xf32>
    %cst_239 = arith.constant 5.000000e-01 : f32
    %431 = vector.broadcast %cst_239 : f32 to vector<8x64xf32>
    %432 = arith.mulf %431, %430 : vector<8x64xf32>
    %433 = math.tanh %432 : vector<8x64xf32>
    %cst_240 = arith.constant 5.000000e-01 : f32
    %434 = vector.broadcast %cst_240 : f32 to vector<8x64xf32>
    %435 = arith.mulf %434, %433 : vector<8x64xf32>
    %cst_241 = arith.constant 5.000000e-01 : f32
    %436 = vector.broadcast %cst_241 : f32 to vector<8x64xf32>
    %437 = arith.addf %435, %436 : vector<8x64xf32>
    %438 = vector.extract_strided_slice %421 {offsets = [0, 128], sizes = [8, 64], strides = [1, 1]} : vector<8x256xf32> to vector<8x64xf32>
    %439 = math.tanh %438 : vector<8x64xf32>
    %440 = vector.extract_strided_slice %421 {offsets = [0, 192], sizes = [8, 64], strides = [1, 1]} : vector<8x256xf32> to vector<8x64xf32>
    %cst_242 = arith.constant 5.000000e-01 : f32
    %441 = vector.broadcast %cst_242 : f32 to vector<8x64xf32>
    %442 = arith.mulf %441, %440 : vector<8x64xf32>
    %443 = math.tanh %442 : vector<8x64xf32>
    %cst_243 = arith.constant 5.000000e-01 : f32
    %444 = vector.broadcast %cst_243 : f32 to vector<8x64xf32>
    %445 = arith.mulf %444, %443 : vector<8x64xf32>
    %cst_244 = arith.constant 5.000000e-01 : f32
    %446 = vector.broadcast %cst_244 : f32 to vector<8x64xf32>
    %447 = arith.addf %445, %446 : vector<8x64xf32>
    %448 = arith.mulf %437, %417 : vector<8x64xf32>
    %449 = arith.mulf %429, %439 : vector<8x64xf32>
    %450 = arith.addf %448, %449 : vector<8x64xf32>
    %451 = math.tanh %450 : vector<8x64xf32>
    %452 = arith.mulf %447, %451 : vector<8x64xf32>
    %c1_i32_245 = arith.constant 1 : i32
    %453 = vector.broadcast %c1_i32_245 : i32 to vector<8x1xi32>
    %454 = arith.subi %15, %453 : vector<8x1xi32>
    %c0_i32 = arith.constant 0 : i32
    %455 = vector.broadcast %c0_i32 : i32 to vector<8x1xi32>
    %456 = arith.cmpi eq, %454, %455 : vector<8x1xi32>
    %457 = vector.extract_strided_slice %452 {offsets = [0, 0], sizes = [8, 32], strides = [1, 1]} : vector<8x64xf32> to vector<8x32xf32>
    %458 = vector.shape_cast %456 : vector<8x1xi1> to vector<8x1xi1>
    %459 = vector.broadcast %458 : vector<8x1xi1> to vector<8x32xi1>
    %460 = arith.select %459, %457, %16 : vector<8x32xi1>, vector<8x32xf32>
    %c8_i32_246 = arith.constant 8 : i32
    %461 = vector.broadcast %c8_i32_246 : i32 to vector<8x1xi32>
    %462 = arith.subi %461, %15 : vector<8x1xi32>
    %c0_i32_247 = arith.constant 0 : i32
    %463 = vector.broadcast %c0_i32_247 : i32 to vector<8x1xi32>
    %464 = arith.cmpi eq, %462, %463 : vector<8x1xi32>
    %465 = vector.extract_strided_slice %452 {offsets = [0, 32], sizes = [8, 32], strides = [1, 1]} : vector<8x64xf32> to vector<8x32xf32>
    %466 = vector.shape_cast %464 : vector<8x1xi1> to vector<8x1xi1>
    %467 = vector.broadcast %466 : vector<8x1xi1> to vector<8x32xi1>
    %468 = arith.select %467, %465, %17 : vector<8x32xi1>, vector<8x32xf32>
    %c8_248 = arith.constant 8 : index
    %c0_249 = arith.constant 0 : index
    %469 = vector.load %arg18[%c8_248, %c0_249] : memref<64x256xf32, #tpu.memory_space<vmem>>, vector<8x256xf32>
    %470 = arith.truncf %452 : vector<8x64xf32> to vector<8x64xbf16>
    %cst_250 = arith.constant dense<0.000000e+00> : vector<8x256xf32>
    %471 = tpu.matmul %470, %415, %cst_250 {dimension_numbers = #tpu.dot_dimension_numbers<[1], [0], [0], [1], [0, 0, 1, 1], [], []>} : vector<8x64xbf16>, vector<64x256xbf16>, vector<8x256xf32> -> vector<8x256xf32>
    %472 = arith.addf %469, %471 : vector<8x256xf32>
    %473 = vector.extract_strided_slice %472 {offsets = [0, 0], sizes = [8, 64], strides = [1, 1]} : vector<8x256xf32> to vector<8x64xf32>
    %cst_251 = arith.constant 5.000000e-01 : f32
    %474 = vector.broadcast %cst_251 : f32 to vector<8x64xf32>
    %475 = arith.mulf %474, %473 : vector<8x64xf32>
    %476 = math.tanh %475 : vector<8x64xf32>
    %cst_252 = arith.constant 5.000000e-01 : f32
    %477 = vector.broadcast %cst_252 : f32 to vector<8x64xf32>
    %478 = arith.mulf %477, %476 : vector<8x64xf32>
    %cst_253 = arith.constant 5.000000e-01 : f32
    %479 = vector.broadcast %cst_253 : f32 to vector<8x64xf32>
    %480 = arith.addf %478, %479 : vector<8x64xf32>
    %481 = vector.extract_strided_slice %472 {offsets = [0, 64], sizes = [8, 64], strides = [1, 1]} : vector<8x256xf32> to vector<8x64xf32>
    %cst_254 = arith.constant 5.000000e-01 : f32
    %482 = vector.broadcast %cst_254 : f32 to vector<8x64xf32>
    %483 = arith.mulf %482, %481 : vector<8x64xf32>
    %484 = math.tanh %483 : vector<8x64xf32>
    %cst_255 = arith.constant 5.000000e-01 : f32
    %485 = vector.broadcast %cst_255 : f32 to vector<8x64xf32>
    %486 = arith.mulf %485, %484 : vector<8x64xf32>
    %cst_256 = arith.constant 5.000000e-01 : f32
    %487 = vector.broadcast %cst_256 : f32 to vector<8x64xf32>
    %488 = arith.addf %486, %487 : vector<8x64xf32>
    %489 = vector.extract_strided_slice %472 {offsets = [0, 128], sizes = [8, 64], strides = [1, 1]} : vector<8x256xf32> to vector<8x64xf32>
    %490 = math.tanh %489 : vector<8x64xf32>
    %491 = vector.extract_strided_slice %472 {offsets = [0, 192], sizes = [8, 64], strides = [1, 1]} : vector<8x256xf32> to vector<8x64xf32>
    %cst_257 = arith.constant 5.000000e-01 : f32
    %492 = vector.broadcast %cst_257 : f32 to vector<8x64xf32>
    %493 = arith.mulf %492, %491 : vector<8x64xf32>
    %494 = math.tanh %493 : vector<8x64xf32>
    %cst_258 = arith.constant 5.000000e-01 : f32
    %495 = vector.broadcast %cst_258 : f32 to vector<8x64xf32>
    %496 = arith.mulf %495, %494 : vector<8x64xf32>
    %cst_259 = arith.constant 5.000000e-01 : f32
    %497 = vector.broadcast %cst_259 : f32 to vector<8x64xf32>
    %498 = arith.addf %496, %497 : vector<8x64xf32>
    %499 = arith.mulf %488, %450 : vector<8x64xf32>
    %500 = arith.mulf %480, %490 : vector<8x64xf32>
    %501 = arith.addf %499, %500 : vector<8x64xf32>
    %502 = math.tanh %501 : vector<8x64xf32>
    %503 = arith.mulf %498, %502 : vector<8x64xf32>
    %c1_i32_260 = arith.constant 1 : i32
    %504 = vector.broadcast %c1_i32_260 : i32 to vector<8x1xi32>
    %505 = arith.subi %15, %504 : vector<8x1xi32>
    %c1_i32_261 = arith.constant 1 : i32
    %506 = vector.broadcast %c1_i32_261 : i32 to vector<8x1xi32>
    %507 = arith.cmpi eq, %505, %506 : vector<8x1xi32>
    %508 = vector.extract_strided_slice %503 {offsets = [0, 0], sizes = [8, 32], strides = [1, 1]} : vector<8x64xf32> to vector<8x32xf32>
    %509 = vector.shape_cast %507 : vector<8x1xi1> to vector<8x1xi1>
    %510 = vector.broadcast %509 : vector<8x1xi1> to vector<8x32xi1>
    %511 = arith.select %510, %508, %460 : vector<8x32xi1>, vector<8x32xf32>
    %c8_i32_262 = arith.constant 8 : i32
    %512 = vector.broadcast %c8_i32_262 : i32 to vector<8x1xi32>
    %513 = arith.subi %512, %15 : vector<8x1xi32>
    %c1_i32_263 = arith.constant 1 : i32
    %514 = vector.broadcast %c1_i32_263 : i32 to vector<8x1xi32>
    %515 = arith.cmpi eq, %513, %514 : vector<8x1xi32>
    %516 = vector.extract_strided_slice %503 {offsets = [0, 32], sizes = [8, 32], strides = [1, 1]} : vector<8x64xf32> to vector<8x32xf32>
    %517 = vector.shape_cast %515 : vector<8x1xi1> to vector<8x1xi1>
    %518 = vector.broadcast %517 : vector<8x1xi1> to vector<8x32xi1>
    %519 = arith.select %518, %516, %468 : vector<8x32xi1>, vector<8x32xf32>
    %c16_264 = arith.constant 16 : index
    %c0_265 = arith.constant 0 : index
    %520 = vector.load %arg18[%c16_264, %c0_265] : memref<64x256xf32, #tpu.memory_space<vmem>>, vector<8x256xf32>
    %521 = arith.truncf %503 : vector<8x64xf32> to vector<8x64xbf16>
    %cst_266 = arith.constant dense<0.000000e+00> : vector<8x256xf32>
    %522 = tpu.matmul %521, %415, %cst_266 {dimension_numbers = #tpu.dot_dimension_numbers<[1], [0], [0], [1], [0, 0, 1, 1], [], []>} : vector<8x64xbf16>, vector<64x256xbf16>, vector<8x256xf32> -> vector<8x256xf32>
    %523 = arith.addf %520, %522 : vector<8x256xf32>
    %524 = vector.extract_strided_slice %523 {offsets = [0, 0], sizes = [8, 64], strides = [1, 1]} : vector<8x256xf32> to vector<8x64xf32>
    %cst_267 = arith.constant 5.000000e-01 : f32
    %525 = vector.broadcast %cst_267 : f32 to vector<8x64xf32>
    %526 = arith.mulf %525, %524 : vector<8x64xf32>
    %527 = math.tanh %526 : vector<8x64xf32>
    %cst_268 = arith.constant 5.000000e-01 : f32
    %528 = vector.broadcast %cst_268 : f32 to vector<8x64xf32>
    %529 = arith.mulf %528, %527 : vector<8x64xf32>
    %cst_269 = arith.constant 5.000000e-01 : f32
    %530 = vector.broadcast %cst_269 : f32 to vector<8x64xf32>
    %531 = arith.addf %529, %530 : vector<8x64xf32>
    %532 = vector.extract_strided_slice %523 {offsets = [0, 64], sizes = [8, 64], strides = [1, 1]} : vector<8x256xf32> to vector<8x64xf32>
    %cst_270 = arith.constant 5.000000e-01 : f32
    %533 = vector.broadcast %cst_270 : f32 to vector<8x64xf32>
    %534 = arith.mulf %533, %532 : vector<8x64xf32>
    %535 = math.tanh %534 : vector<8x64xf32>
    %cst_271 = arith.constant 5.000000e-01 : f32
    %536 = vector.broadcast %cst_271 : f32 to vector<8x64xf32>
    %537 = arith.mulf %536, %535 : vector<8x64xf32>
    %cst_272 = arith.constant 5.000000e-01 : f32
    %538 = vector.broadcast %cst_272 : f32 to vector<8x64xf32>
    %539 = arith.addf %537, %538 : vector<8x64xf32>
    %540 = vector.extract_strided_slice %523 {offsets = [0, 128], sizes = [8, 64], strides = [1, 1]} : vector<8x256xf32> to vector<8x64xf32>
    %541 = math.tanh %540 : vector<8x64xf32>
    %542 = vector.extract_strided_slice %523 {offsets = [0, 192], sizes = [8, 64], strides = [1, 1]} : vector<8x256xf32> to vector<8x64xf32>
    %cst_273 = arith.constant 5.000000e-01 : f32
    %543 = vector.broadcast %cst_273 : f32 to vector<8x64xf32>
    %544 = arith.mulf %543, %542 : vector<8x64xf32>
    %545 = math.tanh %544 : vector<8x64xf32>
    %cst_274 = arith.constant 5.000000e-01 : f32
    %546 = vector.broadcast %cst_274 : f32 to vector<8x64xf32>
    %547 = arith.mulf %546, %545 : vector<8x64xf32>
    %cst_275 = arith.constant 5.000000e-01 : f32
    %548 = vector.broadcast %cst_275 : f32 to vector<8x64xf32>
    %549 = arith.addf %547, %548 : vector<8x64xf32>
    %550 = arith.mulf %539, %501 : vector<8x64xf32>
    %551 = arith.mulf %531, %541 : vector<8x64xf32>
    %552 = arith.addf %550, %551 : vector<8x64xf32>
    %553 = math.tanh %552 : vector<8x64xf32>
    %554 = arith.mulf %549, %553 : vector<8x64xf32>
    %c1_i32_276 = arith.constant 1 : i32
    %555 = vector.broadcast %c1_i32_276 : i32 to vector<8x1xi32>
    %556 = arith.subi %15, %555 : vector<8x1xi32>
    %c2_i32 = arith.constant 2 : i32
    %557 = vector.broadcast %c2_i32 : i32 to vector<8x1xi32>
    %558 = arith.cmpi eq, %556, %557 : vector<8x1xi32>
    %559 = vector.extract_strided_slice %554 {offsets = [0, 0], sizes = [8, 32], strides = [1, 1]} : vector<8x64xf32> to vector<8x32xf32>
    %560 = vector.shape_cast %558 : vector<8x1xi1> to vector<8x1xi1>
    %561 = vector.broadcast %560 : vector<8x1xi1> to vector<8x32xi1>
    %562 = arith.select %561, %559, %511 : vector<8x32xi1>, vector<8x32xf32>
    %c8_i32_277 = arith.constant 8 : i32
    %563 = vector.broadcast %c8_i32_277 : i32 to vector<8x1xi32>
    %564 = arith.subi %563, %15 : vector<8x1xi32>
    %c2_i32_278 = arith.constant 2 : i32
    %565 = vector.broadcast %c2_i32_278 : i32 to vector<8x1xi32>
    %566 = arith.cmpi eq, %564, %565 : vector<8x1xi32>
    %567 = vector.extract_strided_slice %554 {offsets = [0, 32], sizes = [8, 32], strides = [1, 1]} : vector<8x64xf32> to vector<8x32xf32>
    %568 = vector.shape_cast %566 : vector<8x1xi1> to vector<8x1xi1>
    %569 = vector.broadcast %568 : vector<8x1xi1> to vector<8x32xi1>
    %570 = arith.select %569, %567, %519 : vector<8x32xi1>, vector<8x32xf32>
    %c24_279 = arith.constant 24 : index
    %c0_280 = arith.constant 0 : index
    %571 = vector.load %arg18[%c24_279, %c0_280] : memref<64x256xf32, #tpu.memory_space<vmem>>, vector<8x256xf32>
    %572 = arith.truncf %554 : vector<8x64xf32> to vector<8x64xbf16>
    %cst_281 = arith.constant dense<0.000000e+00> : vector<8x256xf32>
    %573 = tpu.matmul %572, %415, %cst_281 {dimension_numbers = #tpu.dot_dimension_numbers<[1], [0], [0], [1], [0, 0, 1, 1], [], []>} : vector<8x64xbf16>, vector<64x256xbf16>, vector<8x256xf32> -> vector<8x256xf32>
    %574 = arith.addf %571, %573 : vector<8x256xf32>
    %575 = vector.extract_strided_slice %574 {offsets = [0, 0], sizes = [8, 64], strides = [1, 1]} : vector<8x256xf32> to vector<8x64xf32>
    %cst_282 = arith.constant 5.000000e-01 : f32
    %576 = vector.broadcast %cst_282 : f32 to vector<8x64xf32>
    %577 = arith.mulf %576, %575 : vector<8x64xf32>
    %578 = math.tanh %577 : vector<8x64xf32>
    %cst_283 = arith.constant 5.000000e-01 : f32
    %579 = vector.broadcast %cst_283 : f32 to vector<8x64xf32>
    %580 = arith.mulf %579, %578 : vector<8x64xf32>
    %cst_284 = arith.constant 5.000000e-01 : f32
    %581 = vector.broadcast %cst_284 : f32 to vector<8x64xf32>
    %582 = arith.addf %580, %581 : vector<8x64xf32>
    %583 = vector.extract_strided_slice %574 {offsets = [0, 64], sizes = [8, 64], strides = [1, 1]} : vector<8x256xf32> to vector<8x64xf32>
    %cst_285 = arith.constant 5.000000e-01 : f32
    %584 = vector.broadcast %cst_285 : f32 to vector<8x64xf32>
    %585 = arith.mulf %584, %583 : vector<8x64xf32>
    %586 = math.tanh %585 : vector<8x64xf32>
    %cst_286 = arith.constant 5.000000e-01 : f32
    %587 = vector.broadcast %cst_286 : f32 to vector<8x64xf32>
    %588 = arith.mulf %587, %586 : vector<8x64xf32>
    %cst_287 = arith.constant 5.000000e-01 : f32
    %589 = vector.broadcast %cst_287 : f32 to vector<8x64xf32>
    %590 = arith.addf %588, %589 : vector<8x64xf32>
    %591 = vector.extract_strided_slice %574 {offsets = [0, 128], sizes = [8, 64], strides = [1, 1]} : vector<8x256xf32> to vector<8x64xf32>
    %592 = math.tanh %591 : vector<8x64xf32>
    %593 = vector.extract_strided_slice %574 {offsets = [0, 192], sizes = [8, 64], strides = [1, 1]} : vector<8x256xf32> to vector<8x64xf32>
    %cst_288 = arith.constant 5.000000e-01 : f32
    %594 = vector.broadcast %cst_288 : f32 to vector<8x64xf32>
    %595 = arith.mulf %594, %593 : vector<8x64xf32>
    %596 = math.tanh %595 : vector<8x64xf32>
    %cst_289 = arith.constant 5.000000e-01 : f32
    %597 = vector.broadcast %cst_289 : f32 to vector<8x64xf32>
    %598 = arith.mulf %597, %596 : vector<8x64xf32>
    %cst_290 = arith.constant 5.000000e-01 : f32
    %599 = vector.broadcast %cst_290 : f32 to vector<8x64xf32>
    %600 = arith.addf %598, %599 : vector<8x64xf32>
    %601 = arith.mulf %590, %552 : vector<8x64xf32>
    %602 = arith.mulf %582, %592 : vector<8x64xf32>
    %603 = arith.addf %601, %602 : vector<8x64xf32>
    %604 = math.tanh %603 : vector<8x64xf32>
    %605 = arith.mulf %600, %604 : vector<8x64xf32>
    %c1_i32_291 = arith.constant 1 : i32
    %606 = vector.broadcast %c1_i32_291 : i32 to vector<8x1xi32>
    %607 = arith.subi %15, %606 : vector<8x1xi32>
    %c3_i32 = arith.constant 3 : i32
    %608 = vector.broadcast %c3_i32 : i32 to vector<8x1xi32>
    %609 = arith.cmpi eq, %607, %608 : vector<8x1xi32>
    %610 = vector.extract_strided_slice %605 {offsets = [0, 0], sizes = [8, 32], strides = [1, 1]} : vector<8x64xf32> to vector<8x32xf32>
    %611 = vector.shape_cast %609 : vector<8x1xi1> to vector<8x1xi1>
    %612 = vector.broadcast %611 : vector<8x1xi1> to vector<8x32xi1>
    %613 = arith.select %612, %610, %562 : vector<8x32xi1>, vector<8x32xf32>
    %c8_i32_292 = arith.constant 8 : i32
    %614 = vector.broadcast %c8_i32_292 : i32 to vector<8x1xi32>
    %615 = arith.subi %614, %15 : vector<8x1xi32>
    %c3_i32_293 = arith.constant 3 : i32
    %616 = vector.broadcast %c3_i32_293 : i32 to vector<8x1xi32>
    %617 = arith.cmpi eq, %615, %616 : vector<8x1xi32>
    %618 = vector.extract_strided_slice %605 {offsets = [0, 32], sizes = [8, 32], strides = [1, 1]} : vector<8x64xf32> to vector<8x32xf32>
    %619 = vector.shape_cast %617 : vector<8x1xi1> to vector<8x1xi1>
    %620 = vector.broadcast %619 : vector<8x1xi1> to vector<8x32xi1>
    %621 = arith.select %620, %618, %570 : vector<8x32xi1>, vector<8x32xf32>
    %c32_294 = arith.constant 32 : index
    %c0_295 = arith.constant 0 : index
    %622 = vector.load %arg18[%c32_294, %c0_295] : memref<64x256xf32, #tpu.memory_space<vmem>>, vector<8x256xf32>
    %623 = arith.truncf %605 : vector<8x64xf32> to vector<8x64xbf16>
    %cst_296 = arith.constant dense<0.000000e+00> : vector<8x256xf32>
    %624 = tpu.matmul %623, %415, %cst_296 {dimension_numbers = #tpu.dot_dimension_numbers<[1], [0], [0], [1], [0, 0, 1, 1], [], []>} : vector<8x64xbf16>, vector<64x256xbf16>, vector<8x256xf32> -> vector<8x256xf32>
    %625 = arith.addf %622, %624 : vector<8x256xf32>
    %626 = vector.extract_strided_slice %625 {offsets = [0, 0], sizes = [8, 64], strides = [1, 1]} : vector<8x256xf32> to vector<8x64xf32>
    %cst_297 = arith.constant 5.000000e-01 : f32
    %627 = vector.broadcast %cst_297 : f32 to vector<8x64xf32>
    %628 = arith.mulf %627, %626 : vector<8x64xf32>
    %629 = math.tanh %628 : vector<8x64xf32>
    %cst_298 = arith.constant 5.000000e-01 : f32
    %630 = vector.broadcast %cst_298 : f32 to vector<8x64xf32>
    %631 = arith.mulf %630, %629 : vector<8x64xf32>
    %cst_299 = arith.constant 5.000000e-01 : f32
    %632 = vector.broadcast %cst_299 : f32 to vector<8x64xf32>
    %633 = arith.addf %631, %632 : vector<8x64xf32>
    %634 = vector.extract_strided_slice %625 {offsets = [0, 64], sizes = [8, 64], strides = [1, 1]} : vector<8x256xf32> to vector<8x64xf32>
    %cst_300 = arith.constant 5.000000e-01 : f32
    %635 = vector.broadcast %cst_300 : f32 to vector<8x64xf32>
    %636 = arith.mulf %635, %634 : vector<8x64xf32>
    %637 = math.tanh %636 : vector<8x64xf32>
    %cst_301 = arith.constant 5.000000e-01 : f32
    %638 = vector.broadcast %cst_301 : f32 to vector<8x64xf32>
    %639 = arith.mulf %638, %637 : vector<8x64xf32>
    %cst_302 = arith.constant 5.000000e-01 : f32
    %640 = vector.broadcast %cst_302 : f32 to vector<8x64xf32>
    %641 = arith.addf %639, %640 : vector<8x64xf32>
    %642 = vector.extract_strided_slice %625 {offsets = [0, 128], sizes = [8, 64], strides = [1, 1]} : vector<8x256xf32> to vector<8x64xf32>
    %643 = math.tanh %642 : vector<8x64xf32>
    %644 = vector.extract_strided_slice %625 {offsets = [0, 192], sizes = [8, 64], strides = [1, 1]} : vector<8x256xf32> to vector<8x64xf32>
    %cst_303 = arith.constant 5.000000e-01 : f32
    %645 = vector.broadcast %cst_303 : f32 to vector<8x64xf32>
    %646 = arith.mulf %645, %644 : vector<8x64xf32>
    %647 = math.tanh %646 : vector<8x64xf32>
    %cst_304 = arith.constant 5.000000e-01 : f32
    %648 = vector.broadcast %cst_304 : f32 to vector<8x64xf32>
    %649 = arith.mulf %648, %647 : vector<8x64xf32>
    %cst_305 = arith.constant 5.000000e-01 : f32
    %650 = vector.broadcast %cst_305 : f32 to vector<8x64xf32>
    %651 = arith.addf %649, %650 : vector<8x64xf32>
    %652 = arith.mulf %641, %603 : vector<8x64xf32>
    %653 = arith.mulf %633, %643 : vector<8x64xf32>
    %654 = arith.addf %652, %653 : vector<8x64xf32>
    %655 = math.tanh %654 : vector<8x64xf32>
    %656 = arith.mulf %651, %655 : vector<8x64xf32>
    %c1_i32_306 = arith.constant 1 : i32
    %657 = vector.broadcast %c1_i32_306 : i32 to vector<8x1xi32>
    %658 = arith.subi %15, %657 : vector<8x1xi32>
    %c4_i32 = arith.constant 4 : i32
    %659 = vector.broadcast %c4_i32 : i32 to vector<8x1xi32>
    %660 = arith.cmpi eq, %658, %659 : vector<8x1xi32>
    %661 = vector.extract_strided_slice %656 {offsets = [0, 0], sizes = [8, 32], strides = [1, 1]} : vector<8x64xf32> to vector<8x32xf32>
    %662 = vector.shape_cast %660 : vector<8x1xi1> to vector<8x1xi1>
    %663 = vector.broadcast %662 : vector<8x1xi1> to vector<8x32xi1>
    %664 = arith.select %663, %661, %613 : vector<8x32xi1>, vector<8x32xf32>
    %c8_i32_307 = arith.constant 8 : i32
    %665 = vector.broadcast %c8_i32_307 : i32 to vector<8x1xi32>
    %666 = arith.subi %665, %15 : vector<8x1xi32>
    %c4_i32_308 = arith.constant 4 : i32
    %667 = vector.broadcast %c4_i32_308 : i32 to vector<8x1xi32>
    %668 = arith.cmpi eq, %666, %667 : vector<8x1xi32>
    %669 = vector.extract_strided_slice %656 {offsets = [0, 32], sizes = [8, 32], strides = [1, 1]} : vector<8x64xf32> to vector<8x32xf32>
    %670 = vector.shape_cast %668 : vector<8x1xi1> to vector<8x1xi1>
    %671 = vector.broadcast %670 : vector<8x1xi1> to vector<8x32xi1>
    %672 = arith.select %671, %669, %621 : vector<8x32xi1>, vector<8x32xf32>
    %c40_309 = arith.constant 40 : index
    %c0_310 = arith.constant 0 : index
    %673 = vector.load %arg18[%c40_309, %c0_310] : memref<64x256xf32, #tpu.memory_space<vmem>>, vector<8x256xf32>
    %674 = arith.truncf %656 : vector<8x64xf32> to vector<8x64xbf16>
    %cst_311 = arith.constant dense<0.000000e+00> : vector<8x256xf32>
    %675 = tpu.matmul %674, %415, %cst_311 {dimension_numbers = #tpu.dot_dimension_numbers<[1], [0], [0], [1], [0, 0, 1, 1], [], []>} : vector<8x64xbf16>, vector<64x256xbf16>, vector<8x256xf32> -> vector<8x256xf32>
    %676 = arith.addf %673, %675 : vector<8x256xf32>
    %677 = vector.extract_strided_slice %676 {offsets = [0, 0], sizes = [8, 64], strides = [1, 1]} : vector<8x256xf32> to vector<8x64xf32>
    %cst_312 = arith.constant 5.000000e-01 : f32
    %678 = vector.broadcast %cst_312 : f32 to vector<8x64xf32>
    %679 = arith.mulf %678, %677 : vector<8x64xf32>
    %680 = math.tanh %679 : vector<8x64xf32>
    %cst_313 = arith.constant 5.000000e-01 : f32
    %681 = vector.broadcast %cst_313 : f32 to vector<8x64xf32>
    %682 = arith.mulf %681, %680 : vector<8x64xf32>
    %cst_314 = arith.constant 5.000000e-01 : f32
    %683 = vector.broadcast %cst_314 : f32 to vector<8x64xf32>
    %684 = arith.addf %682, %683 : vector<8x64xf32>
    %685 = vector.extract_strided_slice %676 {offsets = [0, 64], sizes = [8, 64], strides = [1, 1]} : vector<8x256xf32> to vector<8x64xf32>
    %cst_315 = arith.constant 5.000000e-01 : f32
    %686 = vector.broadcast %cst_315 : f32 to vector<8x64xf32>
    %687 = arith.mulf %686, %685 : vector<8x64xf32>
    %688 = math.tanh %687 : vector<8x64xf32>
    %cst_316 = arith.constant 5.000000e-01 : f32
    %689 = vector.broadcast %cst_316 : f32 to vector<8x64xf32>
    %690 = arith.mulf %689, %688 : vector<8x64xf32>
    %cst_317 = arith.constant 5.000000e-01 : f32
    %691 = vector.broadcast %cst_317 : f32 to vector<8x64xf32>
    %692 = arith.addf %690, %691 : vector<8x64xf32>
    %693 = vector.extract_strided_slice %676 {offsets = [0, 128], sizes = [8, 64], strides = [1, 1]} : vector<8x256xf32> to vector<8x64xf32>
    %694 = math.tanh %693 : vector<8x64xf32>
    %695 = vector.extract_strided_slice %676 {offsets = [0, 192], sizes = [8, 64], strides = [1, 1]} : vector<8x256xf32> to vector<8x64xf32>
    %cst_318 = arith.constant 5.000000e-01 : f32
    %696 = vector.broadcast %cst_318 : f32 to vector<8x64xf32>
    %697 = arith.mulf %696, %695 : vector<8x64xf32>
    %698 = math.tanh %697 : vector<8x64xf32>
    %cst_319 = arith.constant 5.000000e-01 : f32
    %699 = vector.broadcast %cst_319 : f32 to vector<8x64xf32>
    %700 = arith.mulf %699, %698 : vector<8x64xf32>
    %cst_320 = arith.constant 5.000000e-01 : f32
    %701 = vector.broadcast %cst_320 : f32 to vector<8x64xf32>
    %702 = arith.addf %700, %701 : vector<8x64xf32>
    %703 = arith.mulf %692, %654 : vector<8x64xf32>
    %704 = arith.mulf %684, %694 : vector<8x64xf32>
    %705 = arith.addf %703, %704 : vector<8x64xf32>
    %706 = math.tanh %705 : vector<8x64xf32>
    %707 = arith.mulf %702, %706 : vector<8x64xf32>
    %c1_i32_321 = arith.constant 1 : i32
    %708 = vector.broadcast %c1_i32_321 : i32 to vector<8x1xi32>
    %709 = arith.subi %15, %708 : vector<8x1xi32>
    %c5_i32 = arith.constant 5 : i32
    %710 = vector.broadcast %c5_i32 : i32 to vector<8x1xi32>
    %711 = arith.cmpi eq, %709, %710 : vector<8x1xi32>
    %712 = vector.extract_strided_slice %707 {offsets = [0, 0], sizes = [8, 32], strides = [1, 1]} : vector<8x64xf32> to vector<8x32xf32>
    %713 = vector.shape_cast %711 : vector<8x1xi1> to vector<8x1xi1>
    %714 = vector.broadcast %713 : vector<8x1xi1> to vector<8x32xi1>
    %715 = arith.select %714, %712, %664 : vector<8x32xi1>, vector<8x32xf32>
    %c8_i32_322 = arith.constant 8 : i32
    %716 = vector.broadcast %c8_i32_322 : i32 to vector<8x1xi32>
    %717 = arith.subi %716, %15 : vector<8x1xi32>
    %c5_i32_323 = arith.constant 5 : i32
    %718 = vector.broadcast %c5_i32_323 : i32 to vector<8x1xi32>
    %719 = arith.cmpi eq, %717, %718 : vector<8x1xi32>
    %720 = vector.extract_strided_slice %707 {offsets = [0, 32], sizes = [8, 32], strides = [1, 1]} : vector<8x64xf32> to vector<8x32xf32>
    %721 = vector.shape_cast %719 : vector<8x1xi1> to vector<8x1xi1>
    %722 = vector.broadcast %721 : vector<8x1xi1> to vector<8x32xi1>
    %723 = arith.select %722, %720, %672 : vector<8x32xi1>, vector<8x32xf32>
    %c48_324 = arith.constant 48 : index
    %c0_325 = arith.constant 0 : index
    %724 = vector.load %arg18[%c48_324, %c0_325] : memref<64x256xf32, #tpu.memory_space<vmem>>, vector<8x256xf32>
    %725 = arith.truncf %707 : vector<8x64xf32> to vector<8x64xbf16>
    %cst_326 = arith.constant dense<0.000000e+00> : vector<8x256xf32>
    %726 = tpu.matmul %725, %415, %cst_326 {dimension_numbers = #tpu.dot_dimension_numbers<[1], [0], [0], [1], [0, 0, 1, 1], [], []>} : vector<8x64xbf16>, vector<64x256xbf16>, vector<8x256xf32> -> vector<8x256xf32>
    %727 = arith.addf %724, %726 : vector<8x256xf32>
    %728 = vector.extract_strided_slice %727 {offsets = [0, 0], sizes = [8, 64], strides = [1, 1]} : vector<8x256xf32> to vector<8x64xf32>
    %cst_327 = arith.constant 5.000000e-01 : f32
    %729 = vector.broadcast %cst_327 : f32 to vector<8x64xf32>
    %730 = arith.mulf %729, %728 : vector<8x64xf32>
    %731 = math.tanh %730 : vector<8x64xf32>
    %cst_328 = arith.constant 5.000000e-01 : f32
    %732 = vector.broadcast %cst_328 : f32 to vector<8x64xf32>
    %733 = arith.mulf %732, %731 : vector<8x64xf32>
    %cst_329 = arith.constant 5.000000e-01 : f32
    %734 = vector.broadcast %cst_329 : f32 to vector<8x64xf32>
    %735 = arith.addf %733, %734 : vector<8x64xf32>
    %736 = vector.extract_strided_slice %727 {offsets = [0, 64], sizes = [8, 64], strides = [1, 1]} : vector<8x256xf32> to vector<8x64xf32>
    %cst_330 = arith.constant 5.000000e-01 : f32
    %737 = vector.broadcast %cst_330 : f32 to vector<8x64xf32>
    %738 = arith.mulf %737, %736 : vector<8x64xf32>
    %739 = math.tanh %738 : vector<8x64xf32>
    %cst_331 = arith.constant 5.000000e-01 : f32
    %740 = vector.broadcast %cst_331 : f32 to vector<8x64xf32>
    %741 = arith.mulf %740, %739 : vector<8x64xf32>
    %cst_332 = arith.constant 5.000000e-01 : f32
    %742 = vector.broadcast %cst_332 : f32 to vector<8x64xf32>
    %743 = arith.addf %741, %742 : vector<8x64xf32>
    %744 = vector.extract_strided_slice %727 {offsets = [0, 128], sizes = [8, 64], strides = [1, 1]} : vector<8x256xf32> to vector<8x64xf32>
    %745 = math.tanh %744 : vector<8x64xf32>
    %746 = vector.extract_strided_slice %727 {offsets = [0, 192], sizes = [8, 64], strides = [1, 1]} : vector<8x256xf32> to vector<8x64xf32>
    %cst_333 = arith.constant 5.000000e-01 : f32
    %747 = vector.broadcast %cst_333 : f32 to vector<8x64xf32>
    %748 = arith.mulf %747, %746 : vector<8x64xf32>
    %749 = math.tanh %748 : vector<8x64xf32>
    %cst_334 = arith.constant 5.000000e-01 : f32
    %750 = vector.broadcast %cst_334 : f32 to vector<8x64xf32>
    %751 = arith.mulf %750, %749 : vector<8x64xf32>
    %cst_335 = arith.constant 5.000000e-01 : f32
    %752 = vector.broadcast %cst_335 : f32 to vector<8x64xf32>
    %753 = arith.addf %751, %752 : vector<8x64xf32>
    %754 = arith.mulf %743, %705 : vector<8x64xf32>
    %755 = arith.mulf %735, %745 : vector<8x64xf32>
    %756 = arith.addf %754, %755 : vector<8x64xf32>
    %757 = math.tanh %756 : vector<8x64xf32>
    %758 = arith.mulf %753, %757 : vector<8x64xf32>
    %c1_i32_336 = arith.constant 1 : i32
    %759 = vector.broadcast %c1_i32_336 : i32 to vector<8x1xi32>
    %760 = arith.subi %15, %759 : vector<8x1xi32>
    %c6_i32 = arith.constant 6 : i32
    %761 = vector.broadcast %c6_i32 : i32 to vector<8x1xi32>
    %762 = arith.cmpi eq, %760, %761 : vector<8x1xi32>
    %763 = vector.extract_strided_slice %758 {offsets = [0, 0], sizes = [8, 32], strides = [1, 1]} : vector<8x64xf32> to vector<8x32xf32>
    %764 = vector.shape_cast %762 : vector<8x1xi1> to vector<8x1xi1>
    %765 = vector.broadcast %764 : vector<8x1xi1> to vector<8x32xi1>
    %766 = arith.select %765, %763, %715 : vector<8x32xi1>, vector<8x32xf32>
    %c8_i32_337 = arith.constant 8 : i32
    %767 = vector.broadcast %c8_i32_337 : i32 to vector<8x1xi32>
    %768 = arith.subi %767, %15 : vector<8x1xi32>
    %c6_i32_338 = arith.constant 6 : i32
    %769 = vector.broadcast %c6_i32_338 : i32 to vector<8x1xi32>
    %770 = arith.cmpi eq, %768, %769 : vector<8x1xi32>
    %771 = vector.extract_strided_slice %758 {offsets = [0, 32], sizes = [8, 32], strides = [1, 1]} : vector<8x64xf32> to vector<8x32xf32>
    %772 = vector.shape_cast %770 : vector<8x1xi1> to vector<8x1xi1>
    %773 = vector.broadcast %772 : vector<8x1xi1> to vector<8x32xi1>
    %774 = arith.select %773, %771, %723 : vector<8x32xi1>, vector<8x32xf32>
    %c56_339 = arith.constant 56 : index
    %c0_340 = arith.constant 0 : index
    %775 = vector.load %arg18[%c56_339, %c0_340] : memref<64x256xf32, #tpu.memory_space<vmem>>, vector<8x256xf32>
    %776 = arith.truncf %758 : vector<8x64xf32> to vector<8x64xbf16>
    %cst_341 = arith.constant dense<0.000000e+00> : vector<8x256xf32>
    %777 = tpu.matmul %776, %415, %cst_341 {dimension_numbers = #tpu.dot_dimension_numbers<[1], [0], [0], [1], [0, 0, 1, 1], [], []>} : vector<8x64xbf16>, vector<64x256xbf16>, vector<8x256xf32> -> vector<8x256xf32>
    %778 = arith.addf %775, %777 : vector<8x256xf32>
    %779 = vector.extract_strided_slice %778 {offsets = [0, 0], sizes = [8, 64], strides = [1, 1]} : vector<8x256xf32> to vector<8x64xf32>
    %cst_342 = arith.constant 5.000000e-01 : f32
    %780 = vector.broadcast %cst_342 : f32 to vector<8x64xf32>
    %781 = arith.mulf %780, %779 : vector<8x64xf32>
    %782 = math.tanh %781 : vector<8x64xf32>
    %cst_343 = arith.constant 5.000000e-01 : f32
    %783 = vector.broadcast %cst_343 : f32 to vector<8x64xf32>
    %784 = arith.mulf %783, %782 : vector<8x64xf32>
    %cst_344 = arith.constant 5.000000e-01 : f32
    %785 = vector.broadcast %cst_344 : f32 to vector<8x64xf32>
    %786 = arith.addf %784, %785 : vector<8x64xf32>
    %787 = vector.extract_strided_slice %778 {offsets = [0, 64], sizes = [8, 64], strides = [1, 1]} : vector<8x256xf32> to vector<8x64xf32>
    %cst_345 = arith.constant 5.000000e-01 : f32
    %788 = vector.broadcast %cst_345 : f32 to vector<8x64xf32>
    %789 = arith.mulf %788, %787 : vector<8x64xf32>
    %790 = math.tanh %789 : vector<8x64xf32>
    %cst_346 = arith.constant 5.000000e-01 : f32
    %791 = vector.broadcast %cst_346 : f32 to vector<8x64xf32>
    %792 = arith.mulf %791, %790 : vector<8x64xf32>
    %cst_347 = arith.constant 5.000000e-01 : f32
    %793 = vector.broadcast %cst_347 : f32 to vector<8x64xf32>
    %794 = arith.addf %792, %793 : vector<8x64xf32>
    %795 = vector.extract_strided_slice %778 {offsets = [0, 128], sizes = [8, 64], strides = [1, 1]} : vector<8x256xf32> to vector<8x64xf32>
    %796 = math.tanh %795 : vector<8x64xf32>
    %797 = vector.extract_strided_slice %778 {offsets = [0, 192], sizes = [8, 64], strides = [1, 1]} : vector<8x256xf32> to vector<8x64xf32>
    %cst_348 = arith.constant 5.000000e-01 : f32
    %798 = vector.broadcast %cst_348 : f32 to vector<8x64xf32>
    %799 = arith.mulf %798, %797 : vector<8x64xf32>
    %800 = math.tanh %799 : vector<8x64xf32>
    %cst_349 = arith.constant 5.000000e-01 : f32
    %801 = vector.broadcast %cst_349 : f32 to vector<8x64xf32>
    %802 = arith.mulf %801, %800 : vector<8x64xf32>
    %cst_350 = arith.constant 5.000000e-01 : f32
    %803 = vector.broadcast %cst_350 : f32 to vector<8x64xf32>
    %804 = arith.addf %802, %803 : vector<8x64xf32>
    %805 = arith.mulf %794, %756 : vector<8x64xf32>
    %806 = arith.mulf %786, %796 : vector<8x64xf32>
    %807 = arith.addf %805, %806 : vector<8x64xf32>
    %808 = math.tanh %807 : vector<8x64xf32>
    %809 = arith.mulf %804, %808 : vector<8x64xf32>
    %c1_i32_351 = arith.constant 1 : i32
    %810 = vector.broadcast %c1_i32_351 : i32 to vector<8x1xi32>
    %811 = arith.subi %15, %810 : vector<8x1xi32>
    %c7_i32 = arith.constant 7 : i32
    %812 = vector.broadcast %c7_i32 : i32 to vector<8x1xi32>
    %813 = arith.cmpi eq, %811, %812 : vector<8x1xi32>
    %814 = vector.extract_strided_slice %809 {offsets = [0, 0], sizes = [8, 32], strides = [1, 1]} : vector<8x64xf32> to vector<8x32xf32>
    %815 = vector.shape_cast %813 : vector<8x1xi1> to vector<8x1xi1>
    %816 = vector.broadcast %815 : vector<8x1xi1> to vector<8x32xi1>
    %817 = arith.select %816, %814, %766 : vector<8x32xi1>, vector<8x32xf32>
    %c8_i32_352 = arith.constant 8 : i32
    %818 = vector.broadcast %c8_i32_352 : i32 to vector<8x1xi32>
    %819 = arith.subi %818, %15 : vector<8x1xi32>
    %c7_i32_353 = arith.constant 7 : i32
    %820 = vector.broadcast %c7_i32_353 : i32 to vector<8x1xi32>
    %821 = arith.cmpi eq, %819, %820 : vector<8x1xi32>
    %822 = vector.extract_strided_slice %809 {offsets = [0, 32], sizes = [8, 32], strides = [1, 1]} : vector<8x64xf32> to vector<8x32xf32>
    %823 = vector.shape_cast %821 : vector<8x1xi1> to vector<8x1xi1>
    %824 = vector.broadcast %823 : vector<8x1xi1> to vector<8x32xi1>
    %825 = arith.select %824, %822, %774 : vector<8x32xi1>, vector<8x32xf32>
    %c0_354 = arith.constant 0 : index
    %c0_355 = arith.constant 0 : index
    %826 = vector.load %arg11[%c0_354, %c0_355] : memref<64x192xf32, #tpu.memory_space<vmem>>, vector<32x192xf32>
    %cst_356 = arith.constant dense<0.000000e+00> : vector<8x192xf32>
    %827 = tpu.matmul %817, %826, %cst_356 {dimension_numbers = #tpu.dot_dimension_numbers<[1], [0], [0], [1], [0, 0, 1, 1], [], []>} : vector<8x32xf32>, vector<32x192xf32>, vector<8x192xf32> -> vector<8x192xf32>
    %c32_357 = arith.constant 32 : index
    %c0_358 = arith.constant 0 : index
    %828 = vector.load %arg11[%c32_357, %c0_358] : memref<64x192xf32, #tpu.memory_space<vmem>>, vector<32x192xf32>
    %cst_359 = arith.constant dense<0.000000e+00> : vector<8x192xf32>
    %829 = tpu.matmul %825, %828, %cst_359 {dimension_numbers = #tpu.dot_dimension_numbers<[1], [0], [0], [1], [0, 0, 1, 1], [], []>} : vector<8x32xf32>, vector<32x192xf32>, vector<8x192xf32> -> vector<8x192xf32>
    %830 = arith.addf %827, %829 : vector<8x192xf32>
    %c0_360 = arith.constant 0 : index
    %c0_361 = arith.constant 0 : index
    %831 = vector.load %arg10[%c0_360, %c0_361] : memref<8x64xf32, #tpu.memory_space<vmem>>, vector<8x64xf32>
    %c0_362 = arith.constant 0 : index
    %c0_363 = arith.constant 0 : index
    %832 = vector.load %arg12[%c0_362, %c0_363] : memref<64x192xf32, #tpu.memory_space<vmem>>, vector<64x192xf32>
    %cst_364 = arith.constant dense<0.000000e+00> : vector<8x192xf32>
    %833 = tpu.matmul %831, %832, %cst_364 {dimension_numbers = #tpu.dot_dimension_numbers<[1], [0], [0], [1], [0, 0, 1, 1], [], []>} : vector<8x64xf32>, vector<64x192xf32>, vector<8x192xf32> -> vector<8x192xf32>
    %834 = arith.addf %830, %833 : vector<8x192xf32>
    %c0_365 = arith.constant 0 : index
    %c0_366 = arith.constant 0 : index
    %835 = vector.load %arg13[%c0_365, %c0_366] : memref<1x192xf32, #tpu.memory_space<vmem>>, vector<1x192xf32>
    %836 = vector.broadcast %835 : vector<1x192xf32> to vector<8x192xf32>
    %837 = arith.addf %834, %836 : vector<8x192xf32>
    %838 = tpu.iota {dimensions = array<i32: 1>} : vector<8x192xi32>
    %c64_i32 = arith.constant 64 : i32
    %839 = vector.broadcast %c64_i32 : i32 to vector<8x192xi32>
    %840 = arith.cmpi slt, %838, %839 : vector<8x192xi32>
    %c128_i32 = arith.constant 128 : i32
    %841 = vector.broadcast %c128_i32 : i32 to vector<8x192xi32>
    %842 = arith.cmpi sge, %838, %841 : vector<8x192xi32>
    %843 = arith.ori %840, %842 : vector<8x192xi1>
    %cst_367 = arith.constant 0.000000e+00 : f32
    %844 = vector.broadcast %cst_367 : f32 to vector<8x192xf32>
    %845 = arith.maximumf %837, %844 : vector<8x192xf32>
    %846 = arith.select %843, %845, %837 : vector<8x192xi1>, vector<8x192xf32>
    %c0_368 = arith.constant 0 : index
    %c0_369 = arith.constant 0 : index
    %847 = vector.load %arg14[%c0_368, %c0_369] : memref<192x2xf32, #tpu.memory_space<vmem>>, vector<192x2xf32>
    %cst_370 = arith.constant dense<0.000000e+00> : vector<8x2xf32>
    %848 = tpu.matmul %846, %847, %cst_370 {dimension_numbers = #tpu.dot_dimension_numbers<[1], [0], [0], [1], [0, 0, 1, 1], [], []>} : vector<8x192xf32>, vector<192x2xf32>, vector<8x2xf32> -> vector<8x2xf32>
    %c0_371 = arith.constant 0 : index
    %c0_372 = arith.constant 0 : index
    %849 = vector.load %arg15[%c0_371, %c0_372] : memref<1x2xf32, #tpu.memory_space<vmem>>, vector<1x2xf32>
    %850 = vector.broadcast %849 : vector<1x2xf32> to vector<8x2xf32>
    %851 = arith.addf %848, %850 : vector<8x2xf32>
    %c0_373 = arith.constant 0 : index
    %c0_374 = arith.constant 0 : index
    %852 = vector.load %arg16[%c0_373, %c0_374] : memref<8x2xf32, #tpu.memory_space<vmem>>, vector<8x2xf32>
    tpu.vector_store %arg16[%c0_373, %c0_374], %851 {strides = array<i32>} : memref<8x2xf32, #tpu.memory_space<vmem>>, vector<8x2xf32>,
    return
  }
  func.func @transform_0(%arg0: i32) -> (i32, i32) {
    %c0_i32 = arith.constant 0 : i32
    %c0_i32_0 = arith.constant 0 : i32
    %c0_i32_1 = arith.constant 0 : i32
    return %c0_i32, %c0_i32_0 : i32, i32
  }
  func.func @transform_1(%arg0: i32) -> (i32, i32) {
    %c0_i32 = arith.constant 0 : i32
    %c0_i32_0 = arith.constant 0 : i32
    %c0_i32_1 = arith.constant 0 : i32
    return %c0_i32, %c0_i32_0 : i32, i32
  }
  func.func @transform_2(%arg0: i32) -> (i32, i32) {
    %c0_i32 = arith.constant 0 : i32
    %c0_i32_0 = arith.constant 0 : i32
    %c0_i32_1 = arith.constant 0 : i32
    return %c0_i32, %c0_i32_0 : i32, i32
  }
  func.func @transform_3(%arg0: i32) -> (i32, i32) {
    %c0_i32 = arith.constant 0 : i32
    %c0_i32_0 = arith.constant 0 : i32
    %c0_i32_1 = arith.constant 0 : i32
    return %c0_i32, %c0_i32_0 : i32, i32
  }
  func.func @transform_4(%arg0: i32) -> (i32, i32) {
    %c0_i32 = arith.constant 0 : i32
    %c0_i32_0 = arith.constant 0 : i32
    %c0_i32_1 = arith.constant 0 : i32
    return %c0_i32, %c0_i32_0 : i32, i32
  }
  func.func @transform_5(%arg0: i32) -> (i32, i32) {
    %c0_i32 = arith.constant 0 : i32
    %c0_i32_0 = arith.constant 0 : i32
    %c0_i32_1 = arith.constant 0 : i32
    return %c0_i32, %c0_i32_0 : i32, i32
  }
  func.func @transform_6(%arg0: i32) -> (i32, i32) {
    %c0_i32 = arith.constant 0 : i32
    %c0_i32_0 = arith.constant 0 : i32
    %c0_i32_1 = arith.constant 0 : i32
    return %c0_i32, %c0_i32_0 : i32, i32
  }
  func.func @transform_7(%arg0: i32) -> (i32, i32) {
    %c0_i32 = arith.constant 0 : i32
    %c0_i32_0 = arith.constant 0 : i32
    %c0_i32_1 = arith.constant 0 : i32
    return %c0_i32, %c0_i32_0 : i32, i32
  }
  func.func @transform_8(%arg0: i32) -> (i32, i32) {
    %c0_i32 = arith.constant 0 : i32
    %c0_i32_0 = arith.constant 0 : i32
    %c0_i32_1 = arith.constant 0 : i32
    return %c0_i32, %c0_i32_0 : i32, i32
  }
  func.func @transform_9(%arg0: i32) -> (i32, i32) {
    %c0_i32 = arith.constant 0 : i32
    %c0_i32_0 = arith.constant 0 : i32
    %c0_i32_1 = arith.constant 0 : i32
    return %c0_i32, %c0_i32_0 : i32, i32
  }
  func.func @transform_10(%arg0: i32) -> (i32, i32) {
    %c0_i32 = arith.constant 0 : i32
    %c0_i32_0 = arith.constant 0 : i32
    %c0_i32_1 = arith.constant 0 : i32
    return %c0_i32, %c0_i32_0 : i32, i32
  }
  func.func @transform_11(%arg0: i32) -> (i32, i32) {
    %c0_i32 = arith.constant 0 : i32
    %c0_i32_0 = arith.constant 0 : i32
    %c0_i32_1 = arith.constant 0 : i32
    return %c0_i32, %c0_i32_0 : i32, i32
  }
  func.func @transform_12(%arg0: i32) -> (i32, i32) {
    %c0_i32 = arith.constant 0 : i32
    %c0_i32_0 = arith.constant 0 : i32
    %c0_i32_1 = arith.constant 0 : i32
    return %c0_i32, %c0_i32_0 : i32, i32
  }
  func.func @transform_13(%arg0: i32) -> (i32, i32) {
    %c0_i32 = arith.constant 0 : i32
    %c0_i32_0 = arith.constant 0 : i32
    %c0_i32_1 = arith.constant 0 : i32
    return %c0_i32, %c0_i32_0 : i32, i32
  }
  func.func @transform_14(%arg0: i32) -> (i32, i32) {
    %c0_i32 = arith.constant 0 : i32
    %c0_i32_0 = arith.constant 0 : i32
    %c0_i32_1 = arith.constant 0 : i32
    return %c0_i32, %c0_i32_0 : i32, i32
  }
  func.func @transform_15(%arg0: i32) -> (i32, i32) {
    %c0_i32 = arith.constant 0 : i32
    %c0_i32_0 = arith.constant 0 : i32
    %c0_i32_1 = arith.constant 0 : i32
    return %c0_i32, %c0_i32_0 : i32, i32
  }
}

</mosaic_0001>

<llo_original>
// kernel: model3_forward.1
$region0: #{model3_forward.1}
  #allocation0 [shape = 'u32[]', space=smem, size = 0x4, offset = 0x4, fixed_abs, tag = 'smem constant byte address 0x4 - core index']
  #allocation1 [shape = 'u32[144,128]{1,0:T(1,128)}', space=vmem, size = 0x12000, scoped, tag = 'internal scratch']
  #allocation2 [shape = 'f32[64,512]{1,0:T(8,128)}', space=vmem, size = 0x20000, scoped, tag = 'scratch operand']
  #allocation3 [shape = 'f32[64,256]{1,0:T(8,128)}', space=vmem, size = 0x10000, scoped, tag = 'scratch operand']
  #allocation4 [shape = 'f32[64,64]{1,0:T(8,128)}', space=vmem, size = 0x8000, scoped, tag = 'scratch operand']
  %s0 = inlined_call_operand.vmem [shape: s32[64,1], index: 0, kind: input, shape index: {}]
  %s1 = inlined_call_operand.vmem [shape: s32[8,1], index: 1, kind: input, shape index: {}]
  %s2 = inlined_call_operand.hbm [shape: bf16[128,32], index: 2, kind: input, shape index: {}]
  %s3 = inlined_call_operand.hbm [shape: bf16[32,512], index: 3, kind: input, shape index: {}]
  %s4 = inlined_call_operand.vmem [shape: f32[1,256], index: 4, kind: input, shape index: {}]
  %s5 = inlined_call_operand.hbm [shape: bf16[64,256], index: 5, kind: input, shape index: {}]
  %s6 = inlined_call_operand.hbm [shape: bf16[64,512], index: 6, kind: input, shape index: {}]
  %s7 = inlined_call_operand.vmem [shape: f32[1,256], index: 7, kind: input, shape index: {}]
  %s8 = inlined_call_operand.hbm [shape: bf16[64,256], index: 8, kind: input, shape index: {}]
  %s9 = inlined_call_operand.vmem [shape: f32[8,64], index: 9, kind: input, shape index: {}]
  %s10 = inlined_call_operand.hbm [shape: f32[64,192], index: 10, kind: input, shape index: {}]
  %s11 = inlined_call_operand.vmem [shape: f32[64,192], index: 11, kind: input, shape index: {}]
  %s12 = inlined_call_operand.vmem [shape: f32[1,192], index: 12, kind: input, shape index: {}]
  %s13 = inlined_call_operand.hbm [shape: f32[192,2], index: 13, kind: input, shape index: {}]
  %s14 = inlined_call_operand.vmem [shape: f32[1,2], index: 14, kind: input, shape index: {}]
  %s15 = inlined_call_operand.vmem [shape: f32[8,2], index: 15, kind: output, shape index: {}]
  %s16 = sld [smem:[#allocation0]]
  $region98: #{model3_forward.1} parent=0
    _
  %s18 = ssub.s32 1, %s16
  %s19 = scalar_select 0, %s18, %s16
  $region1: #{model3_forward.1} parent=0
    #allocation5 [shape = 'u8[32768]{0}', space=vmem, size = 0x8000, scoped, tag = 'input window, operand 2, single buffered']
    #allocation6 [shape = 's32[1]{0}', space=sflag, size = 0x4, scoped, tag = 'scoped memory for model3_forward.1']
    #allocation7 [shape = 'u8[32768]{0}', space=vmem, size = 0x8000, scoped, tag = 'input window, operand 3, single buffered']
    #allocation8 [shape = 's32[1]{0}', space=sflag, size = 0x4, scoped, tag = 'scoped memory for model3_forward.1']
    #allocation9 [shape = 'u8[32768]{0}', space=vmem, size = 0x8000, scoped, tag = 'input window, operand 5, single buffered']
    #allocation10 [shape = 'u8[65536]{0}', space=vmem, size = 0x10000, scoped, tag = 'input window, operand 6, single buffered']
    #allocation11 [shape = 's32[1]{0}', space=sflag, size = 0x4, scoped, tag = 'scoped memory for model3_forward.1']
    #allocation12 [shape = 'u8[32768]{0}', space=vmem, size = 0x8000, scoped, tag = 'input window, operand 8, single buffered']
    #allocation13 [shape = 'u8[65536]{0}', space=vmem, size = 0x10000, scoped, tag = 'input window, operand 10, single buffered']
    #allocation14 [shape = 's32[1]{0}', space=sflag, size = 0x4, scoped, tag = 'scoped memory for model3_forward.1']
    #allocation15 [shape = 'u8[98304]{0}', space=vmem, size = 0x18000, scoped, tag = 'input window, operand 13, single buffered']
    %20 = vsyncpa [#allocation6], 0
    %21 = vsyncpa [#allocation8], 0
    %22 = vsyncpa [#allocation11], 0
    %23 = vsyncpa [#allocation14], 0
    // Predicated region
    $region2: #{model3_forward.1} parent=1 // pred_check
      _
    $region3: #{model3_forward.1} parent=1 // pred_check_branch
      %25 = sbr.rel (0) target = $region5
    $region4: #{model3_forward.1} parent=1 // pred_region
      _
    $region5: #{model3_forward.1} parent=1 // pred_fallthru
      _
    // Predicated region
    $region6: #{model3_forward.1} parent=1 // pred_check
      _
    $region7: #{model3_forward.1} parent=1 // pred_check_branch
      %27 = sbr.rel (0) target = $region9
    $region8: #{model3_forward.1} parent=1 // pred_region
      _
    $region9: #{model3_forward.1} parent=1 // pred_fallthru
      _
    // Predicated region
    $region10: #{model3_forward.1} parent=1 // pred_check
      _
    $region11: #{model3_forward.1} parent=1 // pred_check_branch
      %29 = sbr.rel (0) target = $region13
    $region12: #{model3_forward.1} parent=1 // pred_region
      %s31 = ssub.s32 1024, 1024
      %32 = vsyncadd [#allocation6], %s31
      %s33 = sshll.u32 [#allocation5], 4
      %s34 = int_to_ptr.vmem [resolvable:$true] %s33
      %39 = dma.hbm_to_vmem [thread:$0]  %s2, 1024, %s34, [#allocation6], 64, 64, 4
    $region13: #{model3_forward.1} parent=1 // pred_fallthru
      _
    // Predicated region
    $region14: #{model3_forward.1} parent=1 // pred_check
      _
    $region15: #{model3_forward.1} parent=1 // pred_check_branch
      %41 = sbr.rel (0) target = $region17
    $region16: #{model3_forward.1} parent=1 // pred_region
      %s43 = ssub.s32 1024, 1024
      %44 = vsyncadd [#allocation8], %s43
      %s45 = sshll.u32 [#allocation7], 4
      %s46 = int_to_ptr.vmem [resolvable:$true] %s45
      %51 = dma.hbm_to_vmem [thread:$0]  %s3, 1024, %s46, [#allocation8], 256, 256, 16
    $region17: #{model3_forward.1} parent=1 // pred_fallthru
      _
    // Predicated region
    $region18: #{model3_forward.1} parent=1 // pred_check
      _
    $region19: #{model3_forward.1} parent=1 // pred_check_branch
      %53 = sbr.rel (0) target = $region21
    $region20: #{model3_forward.1} parent=1 // pred_region
      _
    $region21: #{model3_forward.1} parent=1 // pred_fallthru
      _
    // Predicated region
    $region22: #{model3_forward.1} parent=1 // pred_check
      _
    $region23: #{model3_forward.1} parent=1 // pred_check_branch
      %55 = sbr.rel (0) target = $region25
    $region24: #{model3_forward.1} parent=1 // pred_region
      %s57 = ssub.s32 1024, 1024
      %58 = vsyncadd [#allocation8], %s57
      %s59 = sshll.u32 [#allocation9], 4
      %s60 = int_to_ptr.vmem [resolvable:$true] %s59
      %65 = dma.hbm_to_vmem [thread:$0]  %s5, 1024, %s60, [#allocation8], 128, 128, 8
    $region25: #{model3_forward.1} parent=1 // pred_fallthru
      _
    // Predicated region
    $region26: #{model3_forward.1} parent=1 // pred_check
      _
    $region27: #{model3_forward.1} parent=1 // pred_check_branch
      %67 = sbr.rel (0) target = $region29
    $region28: #{model3_forward.1} parent=1 // pred_region
      %s69 = ssub.s32 2048, 2048
      %70 = vsyncadd [#allocation11], %s69
      %s71 = sshll.u32 [#allocation10], 4
      %s72 = int_to_ptr.vmem [resolvable:$true] %s71
      %77 = dma.hbm_to_vmem [thread:$0]  %s6, 2048, %s72, [#allocation11], 256, 256, 16
    $region29: #{model3_forward.1} parent=1 // pred_fallthru
      _
    // Predicated region
    $region30: #{model3_forward.1} parent=1 // pred_check
      _
    $region31: #{model3_forward.1} parent=1 // pred_check_branch
      %79 = sbr.rel (0) target = $region33
    $region32: #{model3_forward.1} parent=1 // pred_region
      _
    $region33: #{model3_forward.1} parent=1 // pred_fallthru
      _
    // Predicated region
    $region34: #{model3_forward.1} parent=1 // pred_check
      _
    $region35: #{model3_forward.1} parent=1 // pred_check_branch
      %81 = sbr.rel (0) target = $region37
    $region36: #{model3_forward.1} parent=1 // pred_region
      %s83 = ssub.s32 1024, 1024
      %84 = vsyncadd [#allocation11], %s83
      %s85 = sshll.u32 [#allocation12], 4
      %s86 = int_to_ptr.vmem [resolvable:$true] %s85
      %91 = dma.hbm_to_vmem [thread:$0]  %s8, 1024, %s86, [#allocation11], 128, 128, 8
    $region37: #{model3_forward.1} parent=1 // pred_fallthru
      _
    // Predicated region
    $region38: #{model3_forward.1} parent=1 // pred_check
      _
    $region39: #{model3_forward.1} parent=1 // pred_check_branch
      %93 = sbr.rel (0) target = $region41
    $region40: #{model3_forward.1} parent=1 // pred_region
      _
    $region41: #{model3_forward.1} parent=1 // pred_fallthru
      _
    // Predicated region
    $region42: #{model3_forward.1} parent=1 // pred_check
      _
    $region43: #{model3_forward.1} parent=1 // pred_check_branch
      %95 = sbr.rel (0) target = $region45
    $region44: #{model3_forward.1} parent=1 // pred_region
      %s97 = ssub.s32 2048, 2048
      %98 = vsyncadd [#allocation14], %s97
      %s99 = sshll.u32 [#allocation13], 4
      %s100 = int_to_ptr.vmem [resolvable:$true] %s99
      %105 = dma.hbm_to_vmem [thread:$0]  %s10, 2048, %s100, [#allocation14], 256, 256, 16
    $region45: #{model3_forward.1} parent=1 // pred_fallthru
      _
    // Predicated region
    $region46: #{model3_forward.1} parent=1 // pred_check
      _
    $region47: #{model3_forward.1} parent=1 // pred_check_branch
      %107 = sbr.rel (0) target = $region49
    $region48: #{model3_forward.1} parent=1 // pred_region
      _
    $region49: #{model3_forward.1} parent=1 // pred_fallthru
      _
    // Predicated region
    $region50: #{model3_forward.1} parent=1 // pred_check
      _
    $region51: #{model3_forward.1} parent=1 // pred_check_branch
      %109 = sbr.rel (0) target = $region53
    $region52: #{model3_forward.1} parent=1 // pred_region
      _
    $region53: #{model3_forward.1} parent=1 // pred_fallthru
      _
    // Predicated region
    $region54: #{model3_forward.1} parent=1 // pred_check
      _
    $region55: #{model3_forward.1} parent=1 // pred_check_branch
      %111 = sbr.rel (0) target = $region57
    $region56: #{model3_forward.1} parent=1 // pred_region
      %s113 = ssub.s32 3072, 3072
      %114 = vsyncadd [#allocation14], %s113
      %s115 = sshll.u32 [#allocation15], 4
      %s116 = int_to_ptr.vmem [resolvable:$true] %s115
      %121 = dma.hbm_to_vmem [thread:$0]  %s13, 3072, %s116, [#allocation14], 128, 128, 8
    $region57: #{model3_forward.1} parent=1 // pred_fallthru
      _
    // Predicated region
    $region58: #{model3_forward.1} parent=1 // pred_check
      _
    $region59: #{model3_forward.1} parent=1 // pred_check_branch
      %123 = sbr.rel (0) target = $region61
    $region60: #{model3_forward.1} parent=1 // pred_region
      _
    $region61: #{model3_forward.1} parent=1 // pred_fallthru
      _
    // Predicated region
    $region62: #{model3_forward.1} parent=1 // pred_check
      _
    $region63: #{model3_forward.1} parent=1 // pred_check_branch
      %125 = sbr.rel (0) target = $region65
    $region64: #{model3_forward.1} parent=1 // pred_region
      %126 = dma.done [#allocation6], 1024
    $region65: #{model3_forward.1} parent=1 // pred_fallthru
      _
    // Predicated region
    $region66: #{model3_forward.1} parent=1 // pred_check
      _
    $region67: #{model3_forward.1} parent=1 // pred_check_branch
      %128 = sbr.rel (0) target = $region69
    $region68: #{model3_forward.1} parent=1 // pred_region
      %129 = dma.done [#allocation8], 1024
    $region69: #{model3_forward.1} parent=1 // pred_fallthru
      _
    // Predicated region
    $region70: #{model3_forward.1} parent=1 // pred_check
      _
    $region71: #{model3_forward.1} parent=1 // pred_check_branch
      %131 = sbr.rel (0) target = $region73
    $region72: #{model3_forward.1} parent=1 // pred_region
      %132 = dma.done [#allocation8], 1024
    $region73: #{model3_forward.1} parent=1 // pred_fallthru
      _
    // Predicated region
    $region74: #{model3_forward.1} parent=1 // pred_check
      _
    $region75: #{model3_forward.1} parent=1 // pred_check_branch
      %134 = sbr.rel (0) target = $region77
    $region76: #{model3_forward.1} parent=1 // pred_region
      %135 = dma.done [#allocation11], 2048
    $region77: #{model3_forward.1} parent=1 // pred_fallthru
      _
    // Predicated region
    $region78: #{model3_forward.1} parent=1 // pred_check
      _
    $region79: #{model3_forward.1} parent=1 // pred_check_branch
      %137 = sbr.rel (0) target = $region81
    $region80: #{model3_forward.1} parent=1 // pred_region
      %138 = dma.done [#allocation11], 1024
    $region81: #{model3_forward.1} parent=1 // pred_fallthru
      _
    // Predicated region
    $region82: #{model3_forward.1} parent=1 // pred_check
      _
    $region83: #{model3_forward.1} parent=1 // pred_check_branch
      %140 = sbr.rel (0) target = $region85
    $region84: #{model3_forward.1} parent=1 // pred_region
      %141 = dma.done [#allocation14], 2048
    $region85: #{model3_forward.1} parent=1 // pred_fallthru
      _
    // Predicated region
    $region86: #{model3_forward.1} parent=1 // pred_check
      _
    $region87: #{model3_forward.1} parent=1 // pred_check_branch
      %143 = sbr.rel (0) target = $region89
    $region88: #{model3_forward.1} parent=1 // pred_region
      %144 = dma.done [#allocation14], 3072
    $region89: #{model3_forward.1} parent=1 // pred_fallthru
      _
    %v146 = vld [vmem:[%s0] sm:$0xff]
    %v147 = vld [vmem:[%s0 + $0x8] sm:$0xff]
    %v148 = vld [vmem:[%s0 + $0x10] sm:$0xff]
    %v149 = vld [vmem:[%s0 + $0x18] sm:$0xff]
    %v150 = vld [vmem:[%s0 + $0x20] sm:$0xff]
    %v151 = vld [vmem:[%s0 + $0x28] sm:$0xff]
    %v152 = vld [vmem:[%s0 + $0x30] sm:$0xff]
    %v153 = vld [vmem:[%s0 + $0x38] sm:$0xff]
    %v154 = vlaneseq
    %v155 = vand.u32 %v154, 127
    %156 = vset.pattern.permute.xlu0 0
    %157 = vperm.xlu0 %156, %v146
    %v158 = vpop.permute.xlu0 %157
    %159 = vset.pattern.permute.xlu0 0
    %160 = vperm.xlu0 %159, %v147
    %v161 = vpop.permute.xlu0 %160
    %162 = vset.pattern.permute.xlu0 0
    %163 = vperm.xlu0 %162, %v148
    %v164 = vpop.permute.xlu0 %163
    %165 = vset.pattern.permute.xlu0 0
    %166 = vperm.xlu0 %165, %v149
    %v167 = vpop.permute.xlu0 %166
    %168 = vset.pattern.permute.xlu0 0
    %169 = vperm.xlu0 %168, %v150
    %v170 = vpop.permute.xlu0 %169
    %171 = vset.pattern.permute.xlu0 0
    %172 = vperm.xlu0 %171, %v151
    %v173 = vpop.permute.xlu0 %172
    %174 = vset.pattern.permute.xlu0 0
    %175 = vperm.xlu0 %174, %v152
    %v176 = vpop.permute.xlu0 %175
    %177 = vset.pattern.permute.xlu0 0
    %178 = vperm.xlu0 %177, %v153
    %v179 = vpop.permute.xlu0 %178
    %vm180 = vcmp.eq.s32.totalorder %v158, %v155
    %vm181 = vcmp.eq.s32.totalorder %v161, %v155
    %vm182 = vcmp.eq.s32.totalorder %v164, %v155
    %vm183 = vcmp.eq.s32.totalorder %v167, %v155
    %vm184 = vcmp.eq.s32.totalorder %v170, %v155
    %vm185 = vcmp.eq.s32.totalorder %v173, %v155
    %vm186 = vcmp.eq.s32.totalorder %v176, %v155
    %vm187 = vcmp.eq.s32.totalorder %v179, %v155
    %v188 = vsel %vm180, 1.0, 0.0
    %v189 = vsel %vm181, 1.0, 0.0
    %v190 = vsel %vm182, 1.0, 0.0
    %v191 = vsel %vm183, 1.0, 0.0
    %v192 = vsel %vm184, 1.0, 0.0
    %v193 = vsel %vm185, 1.0, 0.0
    %v194 = vsel %vm186, 1.0, 0.0
    %v195 = vsel %vm187, 1.0, 0.0
    %v196 = vpack.c.bf16 %v189, %v188
    %v197 = vpack.c.bf16 %v191, %v190
    %v198 = vpack.c.bf16 %v193, %v192
    %v199 = vpack.c.bf16 %v195, %v194
    %v200 = vld [vmem:[#allocation5] sm:$0xf]
    %v201 = vld [vmem:[#allocation5 + $0x4] sm:$0xf]
    %v202 = vld [vmem:[#allocation5 + $0x8] sm:$0xf]
    %v203 = vld [vmem:[#allocation5 + $0xc] sm:$0xf]
    %v204 = vld [vmem:[#allocation5 + $0x10] sm:$0xf]
    %v205 = vld [vmem:[#allocation5 + $0x14] sm:$0xf]
    %v206 = vld [vmem:[#allocation5 + $0x18] sm:$0xf]
    %v207 = vld [vmem:[#allocation5 + $0x1c] sm:$0xf]
    %v208 = vld [vmem:[#allocation5 + $0x20] sm:$0xf]
    %v209 = vld [vmem:[#allocation5 + $0x24] sm:$0xf]
    %v210 = vld [vmem:[#allocation5 + $0x28] sm:$0xf]
    %v211 = vld [vmem:[#allocation5 + $0x2c] sm:$0xf]
    %v212 = vld [vmem:[#allocation5 + $0x30] sm:$0xf]
    %v213 = vld [vmem:[#allocation5 + $0x34] sm:$0xf]
    %v214 = vld [vmem:[#allocation5 + $0x38] sm:$0xf]
    %v215 = vld [vmem:[#allocation5 + $0x3c] sm:$0xf]
    %v232 = vunpack.c.l.b16 %v200
    %v233 = vunpack.c.l.b16 %v201
    %v234 = vunpack.c.l.b16 %v202
    %v235 = vunpack.c.l.b16 %v203
    %v236 = vunpack.c.l.b16 %v204
    %v237 = vunpack.c.l.b16 %v205
    %v238 = vunpack.c.l.b16 %v206
    %v239 = vunpack.c.l.b16 %v207
    %v240 = vunpack.c.l.b16 %v208
    %v241 = vunpack.c.l.b16 %v209
    %v242 = vunpack.c.l.b16 %v210
    %v243 = vunpack.c.l.b16 %v211
    %v244 = vunpack.c.l.b16 %v212
    %v245 = vunpack.c.l.b16 %v213
    %v246 = vunpack.c.l.b16 %v214
    %v247 = vunpack.c.l.b16 %v215
    %v248 = vpack.c.b16 %v233, %v232
    %v249 = vpack.c.b16 %v235, %v234
    %v250 = vpack.c.b16 %v237, %v236
    %v251 = vpack.c.b16 %v239, %v238
    %v252 = vpack.c.b16 %v241, %v240
    %v253 = vpack.c.b16 %v243, %v242
    %v254 = vpack.c.b16 %v245, %v244
    %v255 = vpack.c.b16 %v247, %v246
    %264 = vmatprep.subr.bf16.mxu0 0
    %265 = vmatpush1.bf16.msra.mxu0 %v255
    %266 = vmatprep.subr.bf16.mxu0 0
    %267 = vmatpush1.bf16.msra.mxu0 %v254
    %268 = vmatprep.subr.bf16.mxu0 0
    %269 = vmatpush1.bf16.msra.mxu0 %v253
    %270 = vmatprep.subr.bf16.mxu0 0
    %271 = vmatpush1.bf16.msra.mxu0 %v252
    %272 = vmatprep.subr.bf16.mxu0 0
    %273 = vmatpush1.bf16.msra.mxu0 %v251
    %274 = vmatprep.subr.bf16.mxu0 0
    %275 = vmatpush1.bf16.msra.mxu0 %v250
    %276 = vmatprep.subr.bf16.mxu0 0
    %277 = vmatpush1.bf16.msra.mxu0 %v249
    %278 = vmatprep.subr.bf16.mxu0 0
    %279 = vmatpush1.bf16.msra.mxu0 %v248
    %280 = vmatprep.subr.bf16.mxu0 0
    %281 = vmatpush2.bf16.msra.mxu0 0
    %282 = vmatprep.subr.bf16.mxu0 0
    %283 = vmatpush2.bf16.msra.mxu0 0
    %284 = vmatprep.subr.bf16.mxu0 0
    %285 = vmatpush2.bf16.msra.mxu0 0
    %286 = vmatprep.subr.bf16.mxu0 0
    %287 = vmatpush2.bf16.msra.mxu0 0
    %288 = vmatprep.subr.bf16.mxu0 0
    %289 = vmatpush2.bf16.msra.mxu0 0
    %290 = vmatprep.subr.bf16.mxu0 0
    %291 = vmatpush2.bf16.msra.mxu0 0
    %292 = vmatprep.subr.bf16.mxu0 0
    %293 = vmatpush2.bf16.msra.mxu0 0
    %294 = vmatprep.subr.bf16.mxu0 0
    %295 = vmatpush2.bf16.msra.mxu0 0
    %296 = vmatprep.mubr.bf16.mxu0 0
    %297 = vmatmul.mubr.bf16.gmra.mxu0 %v196
    %v298 = vpop.f32.mrf.mxu0
    %v299 = vadd.f32 0.0, %v298
    %v300 = vpop.f32.mrf.mxu0
    %v301 = vpop.f32.mrf.mxu0
    %v302 = vadd.f32 0.0, %v301
    %v303 = vpop.f32.mrf.mxu0
    %304 = vmatprep.mubr.bf16.mxu0 0
    %305 = vmatmul.mubr.bf16.gmra.mxu0 %v197
    %v306 = vpop.f32.mrf.mxu0
    %v307 = vadd.f32 0.0, %v306
    %v308 = vpop.f32.mrf.mxu0
    %v309 = vpop.f32.mrf.mxu0
    %v310 = vadd.f32 0.0, %v309
    %v311 = vpop.f32.mrf.mxu0
    %312 = vmatprep.mubr.bf16.mxu0 0
    %313 = vmatmul.mubr.bf16.gmra.mxu0 %v198
    %v314 = vpop.f32.mrf.mxu0
    %v315 = vadd.f32 0.0, %v314
    %v316 = vpop.f32.mrf.mxu0
    %v317 = vpop.f32.mrf.mxu0
    %v318 = vadd.f32 0.0, %v317
    %v319 = vpop.f32.mrf.mxu0
    %320 = vmatprep.mubr.bf16.mxu0 0
    %321 = vmatmul.mubr.bf16.gmra.mxu0 %v199
    %v322 = vpop.f32.mrf.mxu0
    %v323 = vadd.f32 0.0, %v322
    %v324 = vpop.f32.mrf.mxu0
    %v325 = vpop.f32.mrf.mxu0
    %v326 = vadd.f32 0.0, %v325
    %v327 = vpop.f32.mrf.mxu0
    %328 = vdwg.mxu0
    %v329 = vpack.c.bf16 %v302, %v299
    %v330 = vpack.c.bf16 %v310, %v307
    %v331 = vpack.c.bf16 %v318, %v315
    %v332 = vpack.c.bf16 %v326, %v323
    %v333 = vld [vmem:[%s1] sm:$0xff]
    %vm334 = vcmp.gt.s32.totalorder %v333, 1
    %v335 = vsel %vm334, %v333, 1
    %vm336 = vcmp.lt.s32.totalorder %v335, 8
    %v337 = vsel %vm336, %v335, 8
    %v338 = vld [vmem:[#allocation7] sm:$0xff]
    %v339 = vld [vmem:[#allocation7 + $0x8] sm:$0xff]
    %v340 = vld [vmem:[#allocation7 + $0x10] sm:$0xff]
    %v341 = vld [vmem:[#allocation7 + $0x18] sm:$0xff]
    %v342 = vld [vmem:[#allocation7 + $0x20] sm:$0xff]
    %v343 = vld [vmem:[#allocation7 + $0x28] sm:$0xff]
    %v344 = vld [vmem:[#allocation7 + $0x30] sm:$0xff]
    %v345 = vld [vmem:[#allocation7 + $0x38] sm:$0xff]
    %v354 = vunpack.c.l.b16 %v338
    %v355 = vunpack.c.h.b16 %v338
    %v356 = vunpack.c.l.b16 %v339
    %v357 = vunpack.c.h.b16 %v339
    %v358 = vunpack.c.l.b16 %v340
    %v359 = vunpack.c.h.b16 %v340
    %v360 = vunpack.c.l.b16 %v341
    %v361 = vunpack.c.h.b16 %v341
    %v362 = vunpack.c.l.b16 %v342
    %v363 = vunpack.c.h.b16 %v342
    %v364 = vunpack.c.l.b16 %v343
    %v365 = vunpack.c.h.b16 %v343
    %v366 = vunpack.c.l.b16 %v344
    %v367 = vunpack.c.h.b16 %v344
    %v368 = vunpack.c.l.b16 %v345
    %v369 = vunpack.c.h.b16 %v345
    %v370 = vpack.c.b16 %v358, %v354
    %v371 = vpack.c.b16 %v359, %v355
    %v372 = vpack.c.b16 %v360, %v356
    %v373 = vpack.c.b16 %v361, %v357
    %v374 = vpack.c.b16 %v366, %v362
    %v375 = vpack.c.b16 %v367, %v363
    %v376 = vpack.c.b16 %v368, %v364
    %v377 = vpack.c.b16 %v369, %v365
    %vm386 = vcmask 261120
    %v388 = vsel %vm386, %v329, 0
    %v391 = vsel %vm386, %v330, 0
    %v394 = vsel %vm386, %v331, 0
    %v397 = vsel %vm386, %v332, 0
    %399 = vmatprep.subr.bf16.mxu0 0
    %400 = vmatpush1.bf16.msra.mxu0 0
    %401 = vmatprep.subr.bf16.mxu0 0
    %402 = vmatpush1.bf16.msra.mxu0 0
    %403 = vmatprep.subr.bf16.mxu0 0
    %404 = vmatpush1.bf16.msra.mxu0 0
    %405 = vmatprep.subr.bf16.mxu0 0
    %406 = vmatpush1.bf16.msra.mxu0 0
    %407 = vmatprep.subr.bf16.mxu0 0
    %408 = vmatpush1.bf16.msra.mxu0 0
    %409 = vmatprep.subr.bf16.mxu0 0
    %410 = vmatpush1.bf16.msra.mxu0 0
    %411 = vmatprep.subr.bf16.mxu0 %v375
    %412 = vmatpush1.bf16.msra.mxu0 %v374
    %413 = vmatprep.subr.bf16.mxu0 %v371
    %414 = vmatpush1.bf16.msra.mxu0 %v370
    %415 = vmatprep.subr.bf16.mxu0 0
    %416 = vmatpush2.bf16.msra.mxu0 0
    %417 = vmatprep.subr.bf16.mxu0 0
    %418 = vmatpush2.bf16.msra.mxu0 0
    %419 = vmatprep.subr.bf16.mxu0 0
    %420 = vmatpush2.bf16.msra.mxu0 0
    %421 = vmatprep.subr.bf16.mxu0 0
    %422 = vmatpush2.bf16.msra.mxu0 0
    %423 = vmatprep.subr.bf16.mxu0 0
    %424 = vmatpush2.bf16.msra.mxu0 0
    %425 = vmatprep.subr.bf16.mxu0 0
    %426 = vmatpush2.bf16.msra.mxu0 0
    %427 = vmatprep.subr.bf16.mxu0 0
    %428 = vmatpush2.bf16.msra.mxu0 0
    %429 = vmatprep.subr.bf16.mxu0 0
    %430 = vmatpush2.bf16.msra.mxu0 0
    %431 = vmatprep.mubr.bf16.mxu0 0
    %432 = vmatmul.mubr.bf16.gmra.mxu0 %v388
    %v433 = vpop.f32.mrf.mxu0
    %v434 = vadd.f32 0.0, %v433
    %v435 = vpop.f32.mrf.mxu0
    %v436 = vadd.f32 0.0, %v435
    %v437 = vpop.f32.mrf.mxu0
    %v438 = vadd.f32 0.0, %v437
    %v439 = vpop.f32.mrf.mxu0
    %v440 = vadd.f32 0.0, %v439
    %441 = vmatprep.mubr.bf16.mxu0 0
    %442 = vmatmul.mubr.bf16.gmra.mxu0 %v391
    %v443 = vpop.f32.mrf.mxu0
    %v444 = vadd.f32 0.0, %v443
    %v445 = vpop.f32.mrf.mxu0
    %v446 = vadd.f32 0.0, %v445
    %v447 = vpop.f32.mrf.mxu0
    %v448 = vadd.f32 0.0, %v447
    %v449 = vpop.f32.mrf.mxu0
    %v450 = vadd.f32 0.0, %v449
    %451 = vmatprep.mubr.bf16.mxu0 0
    %452 = vmatmul.mubr.bf16.gmra.mxu0 %v394
    %v453 = vpop.f32.mrf.mxu0
    %v454 = vadd.f32 0.0, %v453
    %v455 = vpop.f32.mrf.mxu0
    %v456 = vadd.f32 0.0, %v455
    %v457 = vpop.f32.mrf.mxu0
    %v458 = vadd.f32 0.0, %v457
    %v459 = vpop.f32.mrf.mxu0
    %v460 = vadd.f32 0.0, %v459
    %461 = vmatprep.mubr.bf16.mxu0 0
    %462 = vmatmul.mubr.bf16.gmra.mxu0 %v397
    %v463 = vpop.f32.mrf.mxu0
    %v464 = vadd.f32 0.0, %v463
    %v465 = vpop.f32.mrf.mxu0
    %v466 = vadd.f32 0.0, %v465
    %v467 = vpop.f32.mrf.mxu0
    %v468 = vadd.f32 0.0, %v467
    %v469 = vpop.f32.mrf.mxu0
    %v470 = vadd.f32 0.0, %v469
    %471 = vdwg.mxu0
    %472 = vmatprep.subr.bf16.mxu0 0
    %473 = vmatpush1.bf16.msra.mxu0 0
    %474 = vmatprep.subr.bf16.mxu0 0
    %475 = vmatpush1.bf16.msra.mxu0 0
    %476 = vmatprep.subr.bf16.mxu0 0
    %477 = vmatpush1.bf16.msra.mxu0 0
    %478 = vmatprep.subr.bf16.mxu0 0
    %479 = vmatpush1.bf16.msra.mxu0 0
    %480 = vmatprep.subr.bf16.mxu0 0
    %481 = vmatpush1.bf16.msra.mxu0 0
    %482 = vmatprep.subr.bf16.mxu0 0
    %483 = vmatpush1.bf16.msra.mxu0 0
    %484 = vmatprep.subr.bf16.mxu0 %v377
    %485 = vmatpush1.bf16.msra.mxu0 %v376
    %486 = vmatprep.subr.bf16.mxu0 %v373
    %487 = vmatpush1.bf16.msra.mxu0 %v372
    %488 = vmatprep.subr.bf16.mxu0 0
    %489 = vmatpush2.bf16.msra.mxu0 0
    %490 = vmatprep.subr.bf16.mxu0 0
    %491 = vmatpush2.bf16.msra.mxu0 0
    %492 = vmatprep.subr.bf16.mxu0 0
    %493 = vmatpush2.bf16.msra.mxu0 0
    %494 = vmatprep.subr.bf16.mxu0 0
    %495 = vmatpush2.bf16.msra.mxu0 0
    %496 = vmatprep.subr.bf16.mxu0 0
    %497 = vmatpush2.bf16.msra.mxu0 0
    %498 = vmatprep.subr.bf16.mxu0 0
    %499 = vmatpush2.bf16.msra.mxu0 0
    %500 = vmatprep.subr.bf16.mxu0 0
    %501 = vmatpush2.bf16.msra.mxu0 0
    %502 = vmatprep.subr.bf16.mxu0 0
    %503 = vmatpush2.bf16.msra.mxu0 0
    %504 = vmatprep.mubr.bf16.mxu0 0
    %505 = vmatmul.mubr.bf16.gmra.mxu0 %v388
    %v506 = vpop.f32.mrf.mxu0
    %v507 = vadd.f32 0.0, %v506
    %v508 = vpop.f32.mrf.mxu0
    %v509 = vadd.f32 0.0, %v508
    %v510 = vpop.f32.mrf.mxu0
    %v511 = vadd.f32 0.0, %v510
    %v512 = vpop.f32.mrf.mxu0
    %v513 = vadd.f32 0.0, %v512
    %514 = vmatprep.mubr.bf16.mxu0 0
    %515 = vmatmul.mubr.bf16.gmra.mxu0 %v391
    %v516 = vpop.f32.mrf.mxu0
    %v517 = vadd.f32 0.0, %v516
    %v518 = vpop.f32.mrf.mxu0
    %v519 = vadd.f32 0.0, %v518
    %v520 = vpop.f32.mrf.mxu0
    %v521 = vadd.f32 0.0, %v520
    %v522 = vpop.f32.mrf.mxu0
    %v523 = vadd.f32 0.0, %v522
    %524 = vmatprep.mubr.bf16.mxu0 0
    %525 = vmatmul.mubr.bf16.gmra.mxu0 %v394
    %v526 = vpop.f32.mrf.mxu0
    %v527 = vadd.f32 0.0, %v526
    %v528 = vpop.f32.mrf.mxu0
    %v529 = vadd.f32 0.0, %v528
    %v530 = vpop.f32.mrf.mxu0
    %v531 = vadd.f32 0.0, %v530
    %v532 = vpop.f32.mrf.mxu0
    %v533 = vadd.f32 0.0, %v532
    %534 = vmatprep.mubr.bf16.mxu0 0
    %535 = vmatmul.mubr.bf16.gmra.mxu0 %v397
    %v536 = vpop.f32.mrf.mxu0
    %v537 = vadd.f32 0.0, %v536
    %v538 = vpop.f32.mrf.mxu0
    %v539 = vadd.f32 0.0, %v538
    %v540 = vpop.f32.mrf.mxu0
    %v541 = vadd.f32 0.0, %v540
    %v542 = vpop.f32.mrf.mxu0
    %v543 = vadd.f32 0.0, %v542
    %544 = vdwg.mxu0
    %545 = vst [vmem:[#allocation2] sm:$0xff] %v434
    %546 = vst [vmem:[#allocation2 + $0x8] sm:$0xff] %v436
    %547 = vst [vmem:[#allocation2 + $0x10] sm:$0xff] %v507
    %548 = vst [vmem:[#allocation2 + $0x18] sm:$0xff] %v509
    %549 = vst [vmem:[#allocation2 + $0x20] sm:$0xff] %v438
    %550 = vst [vmem:[#allocation2 + $0x28] sm:$0xff] %v440
    %551 = vst [vmem:[#allocation2 + $0x30] sm:$0xff] %v511
    %552 = vst [vmem:[#allocation2 + $0x38] sm:$0xff] %v513
    %553 = vst [vmem:[#allocation2 + $0x40] sm:$0xff] %v444
    %554 = vst [vmem:[#allocation2 + $0x48] sm:$0xff] %v446
    %555 = vst [vmem:[#allocation2 + $0x50] sm:$0xff] %v517
    %556 = vst [vmem:[#allocation2 + $0x58] sm:$0xff] %v519
    %557 = vst [vmem:[#allocation2 + $0x60] sm:$0xff] %v448
    %558 = vst [vmem:[#allocation2 + $0x68] sm:$0xff] %v450
    %559 = vst [vmem:[#allocation2 + $0x70] sm:$0xff] %v521
    %560 = vst [vmem:[#allocation2 + $0x78] sm:$0xff] %v523
    %561 = vst [vmem:[#allocation2 + $0x80] sm:$0xff] %v454
    %562 = vst [vmem:[#allocation2 + $0x88] sm:$0xff] %v456
    %563 = vst [vmem:[#allocation2 + $0x90] sm:$0xff] %v527
    %564 = vst [vmem:[#allocation2 + $0x98] sm:$0xff] %v529
    %565 = vst [vmem:[#allocation2 + $0xa0] sm:$0xff] %v458
    %566 = vst [vmem:[#allocation2 + $0xa8] sm:$0xff] %v460
    %567 = vst [vmem:[#allocation2 + $0xb0] sm:$0xff] %v531
    %568 = vst [vmem:[#allocation2 + $0xb8] sm:$0xff] %v533
    %569 = vst [vmem:[#allocation2 + $0xc0] sm:$0xff] %v464
    %570 = vst [vmem:[#allocation2 + $0xc8] sm:$0xff] %v466
    %571 = vst [vmem:[#allocation2 + $0xd0] sm:$0xff] %v537
    %572 = vst [vmem:[#allocation2 + $0xd8] sm:$0xff] %v539
    %573 = vst [vmem:[#allocation2 + $0xe0] sm:$0xff] %v468
    %574 = vst [vmem:[#allocation2 + $0xe8] sm:$0xff] %v470
    %575 = vst [vmem:[#allocation2 + $0xf0] sm:$0xff] %v541
    %576 = vst [vmem:[#allocation2 + $0xf8] sm:$0xff] %v543
    %v577 = vld [vmem:[%s4] sm:$0x3]
    %v578 = vld [vmem:[#allocation2] sm:$0xff]
    %v579 = vld [vmem:[#allocation2 + $0x8] sm:$0xff]
    %v580 = vld [vmem:[#allocation2 + $0xf0] sm:$0xff]
    %v581 = vld [vmem:[#allocation2 + $0xf8] sm:$0xff]
    %v582 = vadd.f32 %v578, %v580
    %v583 = vadd.f32 %v579, %v581
    %v585 = vlaneseq
    %v586 = vshrl.u32 %v585, 7
    %v587 = vsub.s32 0, %v586
    %v588 = vrot.slane %v577, %v587
    %v589 = vlaneseq
    %v590 = vshrl.u32 %v589, 7
    %v591 = vsub.s32 1, %v590
    %v592 = vrot.slane %v577, %v591
    %v595 = vadd.f32 %v582, %v588
    %v596 = vadd.f32 %v583, %v592
    %597 = vst [vmem:[#allocation3] sm:$0xff] %v595
    %598 = vst [vmem:[#allocation3 + $0x8] sm:$0xff] %v596
    %v599 = vld [vmem:[#allocation2 + $0x20] sm:$0xff]
    %v600 = vld [vmem:[#allocation2 + $0x28] sm:$0xff]
    %v601 = vld [vmem:[#allocation2 + $0xd0] sm:$0xff]
    %v602 = vld [vmem:[#allocation2 + $0xd8] sm:$0xff]
    %v603 = vadd.f32 %v599, %v601
    %v604 = vadd.f32 %v600, %v602
    %v605 = vadd.f32 %v603, %v588
    %v606 = vadd.f32 %v604, %v592
    %607 = vst [vmem:[#allocation3 + $0x10] sm:$0xff] %v605
    %608 = vst [vmem:[#allocation3 + $0x18] sm:$0xff] %v606
    %v609 = vld [vmem:[#allocation2 + $0x40] sm:$0xff]
    %v610 = vld [vmem:[#allocation2 + $0x48] sm:$0xff]
    %v611 = vld [vmem:[#allocation2 + $0xb0] sm:$0xff]
    %v612 = vld [vmem:[#allocation2 + $0xb8] sm:$0xff]
    %v613 = vadd.f32 %v609, %v611
    %v614 = vadd.f32 %v610, %v612
    %v615 = vadd.f32 %v613, %v588
    %v616 = vadd.f32 %v614, %v592
    %617 = vst [vmem:[#allocation3 + $0x20] sm:$0xff] %v615
    %618 = vst [vmem:[#allocation3 + $0x28] sm:$0xff] %v616
    %v619 = vld [vmem:[#allocation2 + $0x60] sm:$0xff]
    %v620 = vld [vmem:[#allocation2 + $0x68] sm:$0xff]
    %v621 = vld [vmem:[#allocation2 + $0x90] sm:$0xff]
    %v622 = vld [vmem:[#allocation2 + $0x98] sm:$0xff]
    %v623 = vadd.f32 %v619, %v621
    %v624 = vadd.f32 %v620, %v622
    %v625 = vadd.f32 %v623, %v588
    %v626 = vadd.f32 %v624, %v592
    %627 = vst [vmem:[#allocation3 + $0x30] sm:$0xff] %v625
    %628 = vst [vmem:[#allocation3 + $0x38] sm:$0xff] %v626
    %v629 = vld [vmem:[#allocation2 + $0x80] sm:$0xff]
    %v630 = vld [vmem:[#allocation2 + $0x88] sm:$0xff]
    %v631 = vld [vmem:[#allocation2 + $0x70] sm:$0xff]
    %v632 = vld [vmem:[#allocation2 + $0x78] sm:$0xff]
    %v633 = vadd.f32 %v629, %v631
    %v634 = vadd.f32 %v630, %v632
    %v635 = vadd.f32 %v633, %v588
    %v636 = vadd.f32 %v634, %v592
    %637 = vst [vmem:[#allocation3 + $0x40] sm:$0xff] %v635
    %638 = vst [vmem:[#allocation3 + $0x48] sm:$0xff] %v636
    %v639 = vld [vmem:[#allocation2 + $0xa0] sm:$0xff]
    %v640 = vld [vmem:[#allocation2 + $0xa8] sm:$0xff]
    %v641 = vld [vmem:[#allocation2 + $0x50] sm:$0xff]
    %v642 = vld [vmem:[#allocation2 + $0x58] sm:$0xff]
    %v643 = vadd.f32 %v639, %v641
    %v644 = vadd.f32 %v640, %v642
    %v645 = vadd.f32 %v643, %v588
    %v646 = vadd.f32 %v644, %v592
    %647 = vst [vmem:[#allocation3 + $0x50] sm:$0xff] %v645
    %648 = vst [vmem:[#allocation3 + $0x58] sm:$0xff] %v646
    %v649 = vld [vmem:[#allocation2 + $0xc0] sm:$0xff]
    %v650 = vld [vmem:[#allocation2 + $0xc8] sm:$0xff]
    %v651 = vld [vmem:[#allocation2 + $0x30] sm:$0xff]
    %v652 = vld [vmem:[#allocation2 + $0x38] sm:$0xff]
    %v653 = vadd.f32 %v649, %v651
    %v654 = vadd.f32 %v650, %v652
    %v655 = vadd.f32 %v653, %v588
    %v656 = vadd.f32 %v654, %v592
    %657 = vst [vmem:[#allocation3 + $0x60] sm:$0xff] %v655
    %658 = vst [vmem:[#allocation3 + $0x68] sm:$0xff] %v656
    %v659 = vld [vmem:[#allocation2 + $0xe0] sm:$0xff]
    %v660 = vld [vmem:[#allocation2 + $0xe8] sm:$0xff]
    %v661 = vld [vmem:[#allocation2 + $0x10] sm:$0xff]
    %v662 = vld [vmem:[#allocation2 + $0x18] sm:$0xff]
    %v663 = vadd.f32 %v659, %v661
    %v664 = vadd.f32 %v660, %v662
    %v665 = vadd.f32 %v663, %v588
    %v666 = vadd.f32 %v664, %v592
    %667 = vst [vmem:[#allocation3 + $0x70] sm:$0xff] %v665
    %668 = vst [vmem:[#allocation3 + $0x78] sm:$0xff] %v666
    %v669 = vld [vmem:[#allocation9] sm:$0xff]
    %v670 = vld [vmem:[#allocation9 + $0x8] sm:$0xff]
    %v671 = vld [vmem:[#allocation9 + $0x10] sm:$0xff]
    %v672 = vld [vmem:[#allocation9 + $0x18] sm:$0xff]
    %v673 = vld [vmem:[#allocation9 + $0x20] sm:$0xff]
    %v674 = vld [vmem:[#allocation9 + $0x28] sm:$0xff]
    %v675 = vld [vmem:[#allocation9 + $0x30] sm:$0xff]
    %v676 = vld [vmem:[#allocation9 + $0x38] sm:$0xff]
    %v677 = vld [vmem:[#allocation3] sm:$0xff]
    %v678 = vld [vmem:[#allocation3 + $0x8] sm:$0xff]
    %v687 = vunpack.c.l.b16 %v669
    %v688 = vunpack.c.h.b16 %v669
    %v689 = vunpack.c.l.b16 %v670
    %v690 = vunpack.c.h.b16 %v670
    %v691 = vunpack.c.l.b16 %v671
    %v692 = vunpack.c.h.b16 %v671
    %v693 = vunpack.c.l.b16 %v672
    %v694 = vunpack.c.h.b16 %v672
    %v695 = vunpack.c.l.b16 %v673
    %v696 = vunpack.c.h.b16 %v673
    %v697 = vunpack.c.l.b16 %v674
    %v698 = vunpack.c.h.b16 %v674
    %v699 = vunpack.c.l.b16 %v675
    %v700 = vunpack.c.h.b16 %v675
    %v701 = vunpack.c.l.b16 %v676
    %v702 = vunpack.c.h.b16 %v676
    %v703 = vpack.c.b16 %v689, %v687
    %v704 = vpack.c.b16 %v690, %v688
    %v705 = vpack.c.b16 %v693, %v691
    %v706 = vpack.c.b16 %v694, %v692
    %v707 = vpack.c.b16 %v697, %v695
    %v708 = vpack.c.b16 %v698, %v696
    %v709 = vpack.c.b16 %v701, %v699
    %v710 = vpack.c.b16 %v702, %v700
    %vm719 = vcmask 523264
    %v721 = vsel %vm719, 0, 0
    %723 = vmatprep.subr.bf16.mxu0 0
    %724 = vmatpush1.bf16.msra.mxu0 0
    %725 = vmatprep.subr.bf16.mxu0 0
    %726 = vmatpush1.bf16.msra.mxu0 0
    %727 = vmatprep.subr.bf16.mxu0 0
    %728 = vmatpush1.bf16.msra.mxu0 0
    %729 = vmatprep.subr.bf16.mxu0 0
    %730 = vmatpush1.bf16.msra.mxu0 0
    %731 = vmatprep.subr.bf16.mxu0 %v710
    %732 = vmatpush1.bf16.msra.mxu0 %v709
    %733 = vmatprep.subr.bf16.mxu0 %v708
    %734 = vmatpush1.bf16.msra.mxu0 %v707
    %735 = vmatprep.subr.bf16.mxu0 %v706
    %736 = vmatpush1.bf16.msra.mxu0 %v705
    %737 = vmatprep.subr.bf16.mxu0 %v704
    %738 = vmatpush1.bf16.msra.mxu0 %v703
    %739 = vmatprep.subr.bf16.mxu0 0
    %740 = vmatpush2.bf16.msra.mxu0 0
    %741 = vmatprep.subr.bf16.mxu0 0
    %742 = vmatpush2.bf16.msra.mxu0 0
    %743 = vmatprep.subr.bf16.mxu0 0
    %744 = vmatpush2.bf16.msra.mxu0 0
    %745 = vmatprep.subr.bf16.mxu0 0
    %746 = vmatpush2.bf16.msra.mxu0 0
    %747 = vmatprep.subr.bf16.mxu0 0
    %748 = vmatpush2.bf16.msra.mxu0 0
    %749 = vmatprep.subr.bf16.mxu0 0
    %750 = vmatpush2.bf16.msra.mxu0 0
    %751 = vmatprep.subr.bf16.mxu0 0
    %752 = vmatpush2.bf16.msra.mxu0 0
    %753 = vmatprep.subr.bf16.mxu0 0
    %754 = vmatpush2.bf16.msra.mxu0 0
    %755 = vmatprep.mubr.bf16.mxu0 0
    %756 = vmatmul.mubr.bf16.gmra.mxu0 %v721
    %v757 = vpop.f32.mrf.mxu0
    %v758 = vadd.f32 0.0, %v757
    %v759 = vpop.f32.mrf.mxu0
    %v760 = vadd.f32 0.0, %v759
    %v761 = vpop.f32.mrf.mxu0
    %v762 = vpop.f32.mrf.mxu0
    %763 = vdwg.mxu0
    %v764 = vadd.f32 %v677, %v758
    %v765 = vadd.f32 %v678, %v760
    %v766 = vmul.f32 %v764, 0.5
    %v767 = vtanh.pop %v766
    %v768 = vmul.f32 %v767, 0.5
    %v769 = vadd.f32 %v768, 0.5
    %v770 = vtanh.pop %v765
    %v771 = vmul.f32 %v765, 0.5
    %v772 = vtanh.pop %v771
    %v773 = vmul.f32 %v772, 0.5
    %v774 = vadd.f32 %v773, 0.5
    %v775 = vmul.f32 %v769, 0.0
    %v776 = vmul.f32 %v769, %v770
    %778 = vrot.lane.b32.xlu0 %v776, 64
    %v779 = vpop.permute.xlu0 %778
    %v781 = vadd.f32 %v775, %v779
    %v782 = vtanh.pop %v781
    %v783 = vmul.f32 %v774, %v782
    %785 = vrot.lane.b32.xlu0 %v783, 64
    %v786 = vpop.permute.xlu0 %785
    %788 = vst.msk [vmem:[#allocation4] sm:$0xff] %vm719, %v786
    %v789 = vld [vmem:[#allocation3 + $0x10] sm:$0xff]
    %v790 = vld [vmem:[#allocation3 + $0x18] sm:$0xff]
    %v791 = vpack.c.bf16 %v783, %v783
    %793 = vrot.lane.b32.xlu0 %v791, 64
    %v794 = vpop.permute.xlu0 %793
    %v796 = vsel %vm719, %v794, 0
    %798 = vmatprep.subr.bf16.mxu0 0
    %799 = vmatpush1.bf16.msra.mxu0 0
    %800 = vmatprep.subr.bf16.mxu0 0
    %801 = vmatpush1.bf16.msra.mxu0 0
    %802 = vmatprep.subr.bf16.mxu0 0
    %803 = vmatpush1.bf16.msra.mxu0 0
    %804 = vmatprep.subr.bf16.mxu0 0
    %805 = vmatpush1.bf16.msra.mxu0 0
    %806 = vmatprep.subr.bf16.mxu0 %v710
    %807 = vmatpush1.bf16.msra.mxu0 %v709
    %808 = vmatprep.subr.bf16.mxu0 %v708
    %809 = vmatpush1.bf16.msra.mxu0 %v707
    %810 = vmatprep.subr.bf16.mxu0 %v706
    %811 = vmatpush1.bf16.msra.mxu0 %v705
    %812 = vmatprep.subr.bf16.mxu0 %v704
    %813 = vmatpush1.bf16.msra.mxu0 %v703
    %814 = vmatprep.subr.bf16.mxu0 0
    %815 = vmatpush2.bf16.msra.mxu0 0
    %816 = vmatprep.subr.bf16.mxu0 0
    %817 = vmatpush2.bf16.msra.mxu0 0
    %818 = vmatprep.subr.bf16.mxu0 0
    %819 = vmatpush2.bf16.msra.mxu0 0
    %820 = vmatprep.subr.bf16.mxu0 0
    %821 = vmatpush2.bf16.msra.mxu0 0
    %822 = vmatprep.subr.bf16.mxu0 0
    %823 = vmatpush2.bf16.msra.mxu0 0
    %824 = vmatprep.subr.bf16.mxu0 0
    %825 = vmatpush2.bf16.msra.mxu0 0
    %826 = vmatprep.subr.bf16.mxu0 0
    %827 = vmatpush2.bf16.msra.mxu0 0
    %828 = vmatprep.subr.bf16.mxu0 0
    %829 = vmatpush2.bf16.msra.mxu0 0
    %830 = vmatprep.mubr.bf16.mxu0 0
    %831 = vmatmul.mubr.bf16.gmra.mxu0 %v796
    %v832 = vpop.f32.mrf.mxu0
    %v833 = vadd.f32 0.0, %v832
    %v834 = vpop.f32.mrf.mxu0
    %v835 = vadd.f32 0.0, %v834
    %v836 = vpop.f32.mrf.mxu0
    %v837 = vpop.f32.mrf.mxu0
    %838 = vdwg.mxu0
    %v839 = vadd.f32 %v789, %v833
    %v840 = vadd.f32 %v790, %v835
    %v841 = vmul.f32 %v839, 0.5
    %v842 = vtanh.pop %v841
    %v843 = vmul.f32 %v842, 0.5
    %v844 = vadd.f32 %v843, 0.5
    %v845 = vtanh.pop %v840
    %v846 = vmul.f32 %v840, 0.5
    %v847 = vtanh.pop %v846
    %v848 = vmul.f32 %v847, 0.5
    %v849 = vadd.f32 %v848, 0.5
    %v850 = vmul.f32 %v844, %v781
    %v851 = vmul.f32 %v844, %v845
    %853 = vrot.lane.b32.xlu0 %v851, 64
    %v854 = vpop.permute.xlu0 %853
    %v856 = vadd.f32 %v850, %v854
    %v857 = vtanh.pop %v856
    %v858 = vmul.f32 %v849, %v857
    %860 = vrot.lane.b32.xlu0 %v858, 64
    %v861 = vpop.permute.xlu0 %860
    %863 = vst.msk [vmem:[#allocation4 + $0x8] sm:$0xff] %vm719, %v861
    %v864 = vld [vmem:[#allocation3 + $0x20] sm:$0xff]
    %v865 = vld [vmem:[#allocation3 + $0x28] sm:$0xff]
    %v866 = vpack.c.bf16 %v858, %v858
    %868 = vrot.lane.b32.xlu0 %v866, 64
    %v869 = vpop.permute.xlu0 %868
    %v871 = vsel %vm719, %v869, 0
    %873 = vmatprep.subr.bf16.mxu0 0
    %874 = vmatpush1.bf16.msra.mxu0 0
    %875 = vmatprep.subr.bf16.mxu0 0
    %876 = vmatpush1.bf16.msra.mxu0 0
    %877 = vmatprep.subr.bf16.mxu0 0
    %878 = vmatpush1.bf16.msra.mxu0 0
    %879 = vmatprep.subr.bf16.mxu0 0
    %880 = vmatpush1.bf16.msra.mxu0 0
    %881 = vmatprep.subr.bf16.mxu0 %v710
    %882 = vmatpush1.bf16.msra.mxu0 %v709
    %883 = vmatprep.subr.bf16.mxu0 %v708
    %884 = vmatpush1.bf16.msra.mxu0 %v707
    %885 = vmatprep.subr.bf16.mxu0 %v706
    %886 = vmatpush1.bf16.msra.mxu0 %v705
    %887 = vmatprep.subr.bf16.mxu0 %v704
    %888 = vmatpush1.bf16.msra.mxu0 %v703
    %889 = vmatprep.subr.bf16.mxu0 0
    %890 = vmatpush2.bf16.msra.mxu0 0
    %891 = vmatprep.subr.bf16.mxu0 0
    %892 = vmatpush2.bf16.msra.mxu0 0
    %893 = vmatprep.subr.bf16.mxu0 0
    %894 = vmatpush2.bf16.msra.mxu0 0
    %895 = vmatprep.subr.bf16.mxu0 0
    %896 = vmatpush2.bf16.msra.mxu0 0
    %897 = vmatprep.subr.bf16.mxu0 0
    %898 = vmatpush2.bf16.msra.mxu0 0
    %899 = vmatprep.subr.bf16.mxu0 0
    %900 = vmatpush2.bf16.msra.mxu0 0
    %901 = vmatprep.subr.bf16.mxu0 0
    %902 = vmatpush2.bf16.msra.mxu0 0
    %903 = vmatprep.subr.bf16.mxu0 0
    %904 = vmatpush2.bf16.msra.mxu0 0
    %905 = vmatprep.mubr.bf16.mxu0 0
    %906 = vmatmul.mubr.bf16.gmra.mxu0 %v871
    %v907 = vpop.f32.mrf.mxu0
    %v908 = vadd.f32 0.0, %v907
    %v909 = vpop.f32.mrf.mxu0
    %v910 = vadd.f32 0.0, %v909
    %v911 = vpop.f32.mrf.mxu0
    %v912 = vpop.f32.mrf.mxu0
    %913 = vdwg.mxu0
    %v914 = vadd.f32 %v864, %v908
    %v915 = vadd.f32 %v865, %v910
    %v916 = vmul.f32 %v914, 0.5
    %v917 = vtanh.pop %v916
    %v918 = vmul.f32 %v917, 0.5
    %v919 = vadd.f32 %v918, 0.5
    %v920 = vtanh.pop %v915
    %v921 = vmul.f32 %v915, 0.5
    %v922 = vtanh.pop %v921
    %v923 = vmul.f32 %v922, 0.5
    %v924 = vadd.f32 %v923, 0.5
    %v925 = vmul.f32 %v919, %v856
    %v926 = vmul.f32 %v919, %v920
    %928 = vrot.lane.b32.xlu0 %v926, 64
    %v929 = vpop.permute.xlu0 %928
    %v931 = vadd.f32 %v925, %v929
    %v932 = vtanh.pop %v931
    %v933 = vmul.f32 %v924, %v932
    %935 = vrot.lane.b32.xlu0 %v933, 64
    %v936 = vpop.permute.xlu0 %935
    %938 = vst.msk [vmem:[#allocation4 + $0x10] sm:$0xff] %vm719, %v936
    %v939 = vld [vmem:[#allocation3 + $0x30] sm:$0xff]
    %v940 = vld [vmem:[#allocation3 + $0x38] sm:$0xff]
    %v941 = vpack.c.bf16 %v933, %v933
    %943 = vrot.lane.b32.xlu0 %v941, 64
    %v944 = vpop.permute.xlu0 %943
    %v946 = vsel %vm719, %v944, 0
    %948 = vmatprep.subr.bf16.mxu0 0
    %949 = vmatpush1.bf16.msra.mxu0 0
    %950 = vmatprep.subr.bf16.mxu0 0
    %951 = vmatpush1.bf16.msra.mxu0 0
    %952 = vmatprep.subr.bf16.mxu0 0
    %953 = vmatpush1.bf16.msra.mxu0 0
    %954 = vmatprep.subr.bf16.mxu0 0
    %955 = vmatpush1.bf16.msra.mxu0 0
    %956 = vmatprep.subr.bf16.mxu0 %v710
    %957 = vmatpush1.bf16.msra.mxu0 %v709
    %958 = vmatprep.subr.bf16.mxu0 %v708
    %959 = vmatpush1.bf16.msra.mxu0 %v707
    %960 = vmatprep.subr.bf16.mxu0 %v706
    %961 = vmatpush1.bf16.msra.mxu0 %v705
    %962 = vmatprep.subr.bf16.mxu0 %v704
    %963 = vmatpush1.bf16.msra.mxu0 %v703
    %964 = vmatprep.subr.bf16.mxu0 0
    %965 = vmatpush2.bf16.msra.mxu0 0
    %966 = vmatprep.subr.bf16.mxu0 0
    %967 = vmatpush2.bf16.msra.mxu0 0
    %968 = vmatprep.subr.bf16.mxu0 0
    %969 = vmatpush2.bf16.msra.mxu0 0
    %970 = vmatprep.subr.bf16.mxu0 0
    %971 = vmatpush2.bf16.msra.mxu0 0
    %972 = vmatprep.subr.bf16.mxu0 0
    %973 = vmatpush2.bf16.msra.mxu0 0
    %974 = vmatprep.subr.bf16.mxu0 0
    %975 = vmatpush2.bf16.msra.mxu0 0
    %976 = vmatprep.subr.bf16.mxu0 0
    %977 = vmatpush2.bf16.msra.mxu0 0
    %978 = vmatprep.subr.bf16.mxu0 0
    %979 = vmatpush2.bf16.msra.mxu0 0
    %980 = vmatprep.mubr.bf16.mxu0 0
    %981 = vmatmul.mubr.bf16.gmra.mxu0 %v946
    %v982 = vpop.f32.mrf.mxu0
    %v983 = vadd.f32 0.0, %v982
    %v984 = vpop.f32.mrf.mxu0
    %v985 = vadd.f32 0.0, %v984
    %v986 = vpop.f32.mrf.mxu0
    %v987 = vpop.f32.mrf.mxu0
    %988 = vdwg.mxu0
    %v989 = vadd.f32 %v939, %v983
    %v990 = vadd.f32 %v940, %v985
    %v991 = vmul.f32 %v989, 0.5
    %v992 = vtanh.pop %v991
    %v993 = vmul.f32 %v992, 0.5
    %v994 = vadd.f32 %v993, 0.5
    %v995 = vtanh.pop %v990
    %v996 = vmul.f32 %v990, 0.5
    %v997 = vtanh.pop %v996
    %v998 = vmul.f32 %v997, 0.5
    %v999 = vadd.f32 %v998, 0.5
    %v1000 = vmul.f32 %v994, %v931
    %v1001 = vmul.f32 %v994, %v995
    %1003 = vrot.lane.b32.xlu0 %v1001, 64
    %v1004 = vpop.permute.xlu0 %1003
    %v1006 = vadd.f32 %v1000, %v1004
    %v1007 = vtanh.pop %v1006
    %v1008 = vmul.f32 %v999, %v1007
    %1010 = vrot.lane.b32.xlu0 %v1008, 64
    %v1011 = vpop.permute.xlu0 %1010
    %1013 = vst.msk [vmem:[#allocation4 + $0x18] sm:$0xff] %vm719, %v1011
    %v1014 = vld [vmem:[#allocation3 + $0x40] sm:$0xff]
    %v1015 = vld [vmem:[#allocation3 + $0x48] sm:$0xff]
    %v1016 = vpack.c.bf16 %v1008, %v1008
    %1018 = vrot.lane.b32.xlu0 %v1016, 64
    %v1019 = vpop.permute.xlu0 %1018
    %v1021 = vsel %vm719, %v1019, 0
    %1023 = vmatprep.subr.bf16.mxu0 0
    %1024 = vmatpush1.bf16.msra.mxu0 0
    %1025 = vmatprep.subr.bf16.mxu0 0
    %1026 = vmatpush1.bf16.msra.mxu0 0
    %1027 = vmatprep.subr.bf16.mxu0 0
    %1028 = vmatpush1.bf16.msra.mxu0 0
    %1029 = vmatprep.subr.bf16.mxu0 0
    %1030 = vmatpush1.bf16.msra.mxu0 0
    %1031 = vmatprep.subr.bf16.mxu0 %v710
    %1032 = vmatpush1.bf16.msra.mxu0 %v709
    %1033 = vmatprep.subr.bf16.mxu0 %v708
    %1034 = vmatpush1.bf16.msra.mxu0 %v707
    %1035 = vmatprep.subr.bf16.mxu0 %v706
    %1036 = vmatpush1.bf16.msra.mxu0 %v705
    %1037 = vmatprep.subr.bf16.mxu0 %v704
    %1038 = vmatpush1.bf16.msra.mxu0 %v703
    %1039 = vmatprep.subr.bf16.mxu0 0
    %1040 = vmatpush2.bf16.msra.mxu0 0
    %1041 = vmatprep.subr.bf16.mxu0 0
    %1042 = vmatpush2.bf16.msra.mxu0 0
    %1043 = vmatprep.subr.bf16.mxu0 0
    %1044 = vmatpush2.bf16.msra.mxu0 0
    %1045 = vmatprep.subr.bf16.mxu0 0
    %1046 = vmatpush2.bf16.msra.mxu0 0
    %1047 = vmatprep.subr.bf16.mxu0 0
    %1048 = vmatpush2.bf16.msra.mxu0 0
    %1049 = vmatprep.subr.bf16.mxu0 0
    %1050 = vmatpush2.bf16.msra.mxu0 0
    %1051 = vmatprep.subr.bf16.mxu0 0
    %1052 = vmatpush2.bf16.msra.mxu0 0
    %1053 = vmatprep.subr.bf16.mxu0 0
    %1054 = vmatpush2.bf16.msra.mxu0 0
    %1055 = vmatprep.mubr.bf16.mxu0 0
    %1056 = vmatmul.mubr.bf16.gmra.mxu0 %v1021
    %v1057 = vpop.f32.mrf.mxu0
    %v1058 = vadd.f32 0.0, %v1057
    %v1059 = vpop.f32.mrf.mxu0
    %v1060 = vadd.f32 0.0, %v1059
    %v1061 = vpop.f32.mrf.mxu0
    %v1062 = vpop.f32.mrf.mxu0
    %1063 = vdwg.mxu0
    %v1064 = vadd.f32 %v1014, %v1058
    %v1065 = vadd.f32 %v1015, %v1060
    %v1066 = vmul.f32 %v1064, 0.5
    %v1067 = vtanh.pop %v1066
    %v1068 = vmul.f32 %v1067, 0.5
    %v1069 = vadd.f32 %v1068, 0.5
    %v1070 = vtanh.pop %v1065
    %v1071 = vmul.f32 %v1065, 0.5
    %v1072 = vtanh.pop %v1071
    %v1073 = vmul.f32 %v1072, 0.5
    %v1074 = vadd.f32 %v1073, 0.5
    %v1075 = vmul.f32 %v1069, %v1006
    %v1076 = vmul.f32 %v1069, %v1070
    %1078 = vrot.lane.b32.xlu0 %v1076, 64
    %v1079 = vpop.permute.xlu0 %1078
    %v1081 = vadd.f32 %v1075, %v1079
    %v1082 = vtanh.pop %v1081
    %v1083 = vmul.f32 %v1074, %v1082
    %1085 = vrot.lane.b32.xlu0 %v1083, 64
    %v1086 = vpop.permute.xlu0 %1085
    %1088 = vst.msk [vmem:[#allocation4 + $0x20] sm:$0xff] %vm719, %v1086
    %v1089 = vld [vmem:[#allocation3 + $0x50] sm:$0xff]
    %v1090 = vld [vmem:[#allocation3 + $0x58] sm:$0xff]
    %v1091 = vpack.c.bf16 %v1083, %v1083
    %1093 = vrot.lane.b32.xlu0 %v1091, 64
    %v1094 = vpop.permute.xlu0 %1093
    %v1096 = vsel %vm719, %v1094, 0
    %1098 = vmatprep.subr.bf16.mxu0 0
    %1099 = vmatpush1.bf16.msra.mxu0 0
    %1100 = vmatprep.subr.bf16.mxu0 0
    %1101 = vmatpush1.bf16.msra.mxu0 0
    %1102 = vmatprep.subr.bf16.mxu0 0
    %1103 = vmatpush1.bf16.msra.mxu0 0
    %1104 = vmatprep.subr.bf16.mxu0 0
    %1105 = vmatpush1.bf16.msra.mxu0 0
    %1106 = vmatprep.subr.bf16.mxu0 %v710
    %1107 = vmatpush1.bf16.msra.mxu0 %v709
    %1108 = vmatprep.subr.bf16.mxu0 %v708
    %1109 = vmatpush1.bf16.msra.mxu0 %v707
    %1110 = vmatprep.subr.bf16.mxu0 %v706
    %1111 = vmatpush1.bf16.msra.mxu0 %v705
    %1112 = vmatprep.subr.bf16.mxu0 %v704
    %1113 = vmatpush1.bf16.msra.mxu0 %v703
    %1114 = vmatprep.subr.bf16.mxu0 0
    %1115 = vmatpush2.bf16.msra.mxu0 0
    %1116 = vmatprep.subr.bf16.mxu0 0
    %1117 = vmatpush2.bf16.msra.mxu0 0
    %1118 = vmatprep.subr.bf16.mxu0 0
    %1119 = vmatpush2.bf16.msra.mxu0 0
    %1120 = vmatprep.subr.bf16.mxu0 0
    %1121 = vmatpush2.bf16.msra.mxu0 0
    %1122 = vmatprep.subr.bf16.mxu0 0
    %1123 = vmatpush2.bf16.msra.mxu0 0
    %1124 = vmatprep.subr.bf16.mxu0 0
    %1125 = vmatpush2.bf16.msra.mxu0 0
    %1126 = vmatprep.subr.bf16.mxu0 0
    %1127 = vmatpush2.bf16.msra.mxu0 0
    %1128 = vmatprep.subr.bf16.mxu0 0
    %1129 = vmatpush2.bf16.msra.mxu0 0
    %1130 = vmatprep.mubr.bf16.mxu0 0
    %1131 = vmatmul.mubr.bf16.gmra.mxu0 %v1096
    %v1132 = vpop.f32.mrf.mxu0
    %v1133 = vadd.f32 0.0, %v1132
    %v1134 = vpop.f32.mrf.mxu0
    %v1135 = vadd.f32 0.0, %v1134
    %v1136 = vpop.f32.mrf.mxu0
    %v1137 = vpop.f32.mrf.mxu0
    %1138 = vdwg.mxu0
    %v1139 = vadd.f32 %v1089, %v1133
    %v1140 = vadd.f32 %v1090, %v1135
    %v1141 = vmul.f32 %v1139, 0.5
    %v1142 = vtanh.pop %v1141
    %v1143 = vmul.f32 %v1142, 0.5
    %v1144 = vadd.f32 %v1143, 0.5
    %v1145 = vtanh.pop %v1140
    %v1146 = vmul.f32 %v1140, 0.5
    %v1147 = vtanh.pop %v1146
    %v1148 = vmul.f32 %v1147, 0.5
    %v1149 = vadd.f32 %v1148, 0.5
    %v1150 = vmul.f32 %v1144, %v1081
    %v1151 = vmul.f32 %v1144, %v1145
    %1153 = vrot.lane.b32.xlu0 %v1151, 64
    %v1154 = vpop.permute.xlu0 %1153
    %v1156 = vadd.f32 %v1150, %v1154
    %v1157 = vtanh.pop %v1156
    %v1158 = vmul.f32 %v1149, %v1157
    %1160 = vrot.lane.b32.xlu0 %v1158, 64
    %v1161 = vpop.permute.xlu0 %1160
    %1163 = vst.msk [vmem:[#allocation4 + $0x28] sm:$0xff] %vm719, %v1161
    %v1164 = vld [vmem:[#allocation3 + $0x60] sm:$0xff]
    %v1165 = vld [vmem:[#allocation3 + $0x68] sm:$0xff]
    %v1166 = vpack.c.bf16 %v1158, %v1158
    %1168 = vrot.lane.b32.xlu0 %v1166, 64
    %v1169 = vpop.permute.xlu0 %1168
    %v1171 = vsel %vm719, %v1169, 0
    %1173 = vmatprep.subr.bf16.mxu0 0
    %1174 = vmatpush1.bf16.msra.mxu0 0
    %1175 = vmatprep.subr.bf16.mxu0 0
    %1176 = vmatpush1.bf16.msra.mxu0 0
    %1177 = vmatprep.subr.bf16.mxu0 0
    %1178 = vmatpush1.bf16.msra.mxu0 0
    %1179 = vmatprep.subr.bf16.mxu0 0
    %1180 = vmatpush1.bf16.msra.mxu0 0
    %1181 = vmatprep.subr.bf16.mxu0 %v710
    %1182 = vmatpush1.bf16.msra.mxu0 %v709
    %1183 = vmatprep.subr.bf16.mxu0 %v708
    %1184 = vmatpush1.bf16.msra.mxu0 %v707
    %1185 = vmatprep.subr.bf16.mxu0 %v706
    %1186 = vmatpush1.bf16.msra.mxu0 %v705
    %1187 = vmatprep.subr.bf16.mxu0 %v704
    %1188 = vmatpush1.bf16.msra.mxu0 %v703
    %1189 = vmatprep.subr.bf16.mxu0 0
    %1190 = vmatpush2.bf16.msra.mxu0 0
    %1191 = vmatprep.subr.bf16.mxu0 0
    %1192 = vmatpush2.bf16.msra.mxu0 0
    %1193 = vmatprep.subr.bf16.mxu0 0
    %1194 = vmatpush2.bf16.msra.mxu0 0
    %1195 = vmatprep.subr.bf16.mxu0 0
    %1196 = vmatpush2.bf16.msra.mxu0 0
    %1197 = vmatprep.subr.bf16.mxu0 0
    %1198 = vmatpush2.bf16.msra.mxu0 0
    %1199 = vmatprep.subr.bf16.mxu0 0
    %1200 = vmatpush2.bf16.msra.mxu0 0
    %1201 = vmatprep.subr.bf16.mxu0 0
    %1202 = vmatpush2.bf16.msra.mxu0 0
    %1203 = vmatprep.subr.bf16.mxu0 0
    %1204 = vmatpush2.bf16.msra.mxu0 0
    %1205 = vmatprep.mubr.bf16.mxu0 0
    %1206 = vmatmul.mubr.bf16.gmra.mxu0 %v1171
    %v1207 = vpop.f32.mrf.mxu0
    %v1208 = vadd.f32 0.0, %v1207
    %v1209 = vpop.f32.mrf.mxu0
    %v1210 = vadd.f32 0.0, %v1209
    %v1211 = vpop.f32.mrf.mxu0
    %v1212 = vpop.f32.mrf.mxu0
    %1213 = vdwg.mxu0
    %v1214 = vadd.f32 %v1164, %v1208
    %v1215 = vadd.f32 %v1165, %v1210
    %v1216 = vmul.f32 %v1214, 0.5
    %v1217 = vtanh.pop %v1216
    %v1218 = vmul.f32 %v1217, 0.5
    %v1219 = vadd.f32 %v1218, 0.5
    %v1220 = vtanh.pop %v1215
    %v1221 = vmul.f32 %v1215, 0.5
    %v1222 = vtanh.pop %v1221
    %v1223 = vmul.f32 %v1222, 0.5
    %v1224 = vadd.f32 %v1223, 0.5
    %v1225 = vmul.f32 %v1219, %v1156
    %v1226 = vmul.f32 %v1219, %v1220
    %1228 = vrot.lane.b32.xlu0 %v1226, 64
    %v1229 = vpop.permute.xlu0 %1228
    %v1231 = vadd.f32 %v1225, %v1229
    %v1232 = vtanh.pop %v1231
    %v1233 = vmul.f32 %v1224, %v1232
    %1235 = vrot.lane.b32.xlu0 %v1233, 64
    %v1236 = vpop.permute.xlu0 %1235
    %1238 = vst.msk [vmem:[#allocation4 + $0x30] sm:$0xff] %vm719, %v1236
    %v1239 = vld [vmem:[#allocation3 + $0x70] sm:$0xff]
    %v1240 = vld [vmem:[#allocation3 + $0x78] sm:$0xff]
    %v1241 = vpack.c.bf16 %v1233, %v1233
    %1243 = vrot.lane.b32.xlu0 %v1241, 64
    %v1244 = vpop.permute.xlu0 %1243
    %v1246 = vsel %vm719, %v1244, 0
    %1248 = vmatprep.subr.bf16.mxu0 0
    %1249 = vmatpush1.bf16.msra.mxu0 0
    %1250 = vmatprep.subr.bf16.mxu0 0
    %1251 = vmatpush1.bf16.msra.mxu0 0
    %1252 = vmatprep.subr.bf16.mxu0 0
    %1253 = vmatpush1.bf16.msra.mxu0 0
    %1254 = vmatprep.subr.bf16.mxu0 0
    %1255 = vmatpush1.bf16.msra.mxu0 0
    %1256 = vmatprep.subr.bf16.mxu0 %v710
    %1257 = vmatpush1.bf16.msra.mxu0 %v709
    %1258 = vmatprep.subr.bf16.mxu0 %v708
    %1259 = vmatpush1.bf16.msra.mxu0 %v707
    %1260 = vmatprep.subr.bf16.mxu0 %v706
    %1261 = vmatpush1.bf16.msra.mxu0 %v705
    %1262 = vmatprep.subr.bf16.mxu0 %v704
    %1263 = vmatpush1.bf16.msra.mxu0 %v703
    %1264 = vmatprep.subr.bf16.mxu0 0
    %1265 = vmatpush2.bf16.msra.mxu0 0
    %1266 = vmatprep.subr.bf16.mxu0 0
    %1267 = vmatpush2.bf16.msra.mxu0 0
    %1268 = vmatprep.subr.bf16.mxu0 0
    %1269 = vmatpush2.bf16.msra.mxu0 0
    %1270 = vmatprep.subr.bf16.mxu0 0
    %1271 = vmatpush2.bf16.msra.mxu0 0
    %1272 = vmatprep.subr.bf16.mxu0 0
    %1273 = vmatpush2.bf16.msra.mxu0 0
    %1274 = vmatprep.subr.bf16.mxu0 0
    %1275 = vmatpush2.bf16.msra.mxu0 0
    %1276 = vmatprep.subr.bf16.mxu0 0
    %1277 = vmatpush2.bf16.msra.mxu0 0
    %1278 = vmatprep.subr.bf16.mxu0 0
    %1279 = vmatpush2.bf16.msra.mxu0 0
    %1280 = vmatprep.mubr.bf16.mxu0 0
    %1281 = vmatmul.mubr.bf16.gmra.mxu0 %v1246
    %v1282 = vpop.f32.mrf.mxu0
    %v1283 = vadd.f32 0.0, %v1282
    %v1284 = vpop.f32.mrf.mxu0
    %v1285 = vadd.f32 0.0, %v1284
    %v1286 = vpop.f32.mrf.mxu0
    %v1287 = vpop.f32.mrf.mxu0
    %1288 = vdwg.mxu0
    %v1289 = vadd.f32 %v1239, %v1283
    %v1290 = vadd.f32 %v1240, %v1285
    %v1291 = vmul.f32 %v1289, 0.5
    %v1292 = vtanh.pop %v1291
    %v1293 = vmul.f32 %v1292, 0.5
    %v1294 = vadd.f32 %v1293, 0.5
    %v1295 = vtanh.pop %v1290
    %v1296 = vmul.f32 %v1290, 0.5
    %v1297 = vtanh.pop %v1296
    %v1298 = vmul.f32 %v1297, 0.5
    %v1299 = vadd.f32 %v1298, 0.5
    %v1300 = vmul.f32 %v1294, %v1231
    %v1301 = vmul.f32 %v1294, %v1295
    %1303 = vrot.lane.b32.xlu0 %v1301, 64
    %v1304 = vpop.permute.xlu0 %1303
    %v1306 = vadd.f32 %v1300, %v1304
    %v1307 = vtanh.pop %v1306
    %v1308 = vmul.f32 %v1299, %v1307
    %1310 = vrot.lane.b32.xlu0 %v1308, 64
    %v1311 = vpop.permute.xlu0 %1310
    %1313 = vst.msk [vmem:[#allocation4 + $0x38] sm:$0xff] %vm719, %v1311
    %v1314 = vld [vmem:[#allocation4] sm:$0xff]
    %v1315 = vld [vmem:[#allocation4 + $0x8] sm:$0xff]
    %v1316 = vld [vmem:[#allocation4 + $0x10] sm:$0xff]
    %v1317 = vld [vmem:[#allocation4 + $0x18] sm:$0xff]
    %v1318 = vld [vmem:[#allocation4 + $0x20] sm:$0xff]
    %v1319 = vld [vmem:[#allocation4 + $0x28] sm:$0xff]
    %v1320 = vld [vmem:[#allocation4 + $0x30] sm:$0xff]
    %v1321 = vld [vmem:[#allocation4 + $0x38] sm:$0xff]
    %v1322 = vpack.c.bf16 %v1315, %v1314
    %v1323 = vpack.c.bf16 %v1317, %v1316
    %v1324 = vpack.c.bf16 %v1319, %v1318
    %v1325 = vpack.c.bf16 %v1321, %v1320
    %v1326 = vld [vmem:[#allocation10] sm:$0xff]
    %v1327 = vld [vmem:[#allocation10 + $0x8] sm:$0xff]
    %v1328 = vld [vmem:[#allocation10 + $0x10] sm:$0xff]
    %v1329 = vld [vmem:[#allocation10 + $0x18] sm:$0xff]
    %v1330 = vld [vmem:[#allocation10 + $0x20] sm:$0xff]
    %v1331 = vld [vmem:[#allocation10 + $0x28] sm:$0xff]
    %v1332 = vld [vmem:[#allocation10 + $0x30] sm:$0xff]
    %v1333 = vld [vmem:[#allocation10 + $0x38] sm:$0xff]
    %v1334 = vld [vmem:[#allocation10 + $0x40] sm:$0xff]
    %v1335 = vld [vmem:[#allocation10 + $0x48] sm:$0xff]
    %v1336 = vld [vmem:[#allocation10 + $0x50] sm:$0xff]
    %v1337 = vld [vmem:[#allocation10 + $0x58] sm:$0xff]
    %v1338 = vld [vmem:[#allocation10 + $0x60] sm:$0xff]
    %v1339 = vld [vmem:[#allocation10 + $0x68] sm:$0xff]
    %v1340 = vld [vmem:[#allocation10 + $0x70] sm:$0xff]
    %v1341 = vld [vmem:[#allocation10 + $0x78] sm:$0xff]
    %v1358 = vunpack.c.l.b16 %v1326
    %v1359 = vunpack.c.h.b16 %v1326
    %v1360 = vunpack.c.l.b16 %v1327
    %v1361 = vunpack.c.h.b16 %v1327
    %v1362 = vunpack.c.l.b16 %v1328
    %v1363 = vunpack.c.h.b16 %v1328
    %v1364 = vunpack.c.l.b16 %v1329
    %v1365 = vunpack.c.h.b16 %v1329
    %v1366 = vunpack.c.l.b16 %v1330
    %v1367 = vunpack.c.h.b16 %v1330
    %v1368 = vunpack.c.l.b16 %v1331
    %v1369 = vunpack.c.h.b16 %v1331
    %v1370 = vunpack.c.l.b16 %v1332
    %v1371 = vunpack.c.h.b16 %v1332
    %v1372 = vunpack.c.l.b16 %v1333
    %v1373 = vunpack.c.h.b16 %v1333
    %v1374 = vunpack.c.l.b16 %v1334
    %v1375 = vunpack.c.h.b16 %v1334
    %v1376 = vunpack.c.l.b16 %v1335
    %v1377 = vunpack.c.h.b16 %v1335
    %v1378 = vunpack.c.l.b16 %v1336
    %v1379 = vunpack.c.h.b16 %v1336
    %v1380 = vunpack.c.l.b16 %v1337
    %v1381 = vunpack.c.h.b16 %v1337
    %v1382 = vunpack.c.l.b16 %v1338
    %v1383 = vunpack.c.h.b16 %v1338
    %v1384 = vunpack.c.l.b16 %v1339
    %v1385 = vunpack.c.h.b16 %v1339
    %v1386 = vunpack.c.l.b16 %v1340
    %v1387 = vunpack.c.h.b16 %v1340
    %v1388 = vunpack.c.l.b16 %v1341
    %v1389 = vunpack.c.h.b16 %v1341
    %v1390 = vpack.c.b16 %v1362, %v1358
    %v1391 = vpack.c.b16 %v1363, %v1359
    %v1392 = vpack.c.b16 %v1364, %v1360
    %v1393 = vpack.c.b16 %v1365, %v1361
    %v1394 = vpack.c.b16 %v1370, %v1366
    %v1395 = vpack.c.b16 %v1371, %v1367
    %v1396 = vpack.c.b16 %v1372, %v1368
    %v1397 = vpack.c.b16 %v1373, %v1369
    %v1398 = vpack.c.b16 %v1378, %v1374
    %v1399 = vpack.c.b16 %v1379, %v1375
    %v1400 = vpack.c.b16 %v1380, %v1376
    %v1401 = vpack.c.b16 %v1381, %v1377
    %v1402 = vpack.c.b16 %v1386, %v1382
    %v1403 = vpack.c.b16 %v1387, %v1383
    %v1404 = vpack.c.b16 %v1388, %v1384
    %v1405 = vpack.c.b16 %v1389, %v1385
    %v1423 = vsel %vm719, %v1322, 0
    %v1426 = vsel %vm719, %v1323, 0
    %v1429 = vsel %vm719, %v1324, 0
    %v1432 = vsel %vm719, %v1325, 0
    %1434 = vmatprep.subr.bf16.mxu0 0
    %1435 = vmatpush1.bf16.msra.mxu0 0
    %1436 = vmatprep.subr.bf16.mxu0 0
    %1437 = vmatpush1.bf16.msra.mxu0 0
    %1438 = vmatprep.subr.bf16.mxu0 0
    %1439 = vmatpush1.bf16.msra.mxu0 0
    %1440 = vmatprep.subr.bf16.mxu0 0
    %1441 = vmatpush1.bf16.msra.mxu0 0
    %1442 = vmatprep.subr.bf16.mxu0 %v1403
    %1443 = vmatpush1.bf16.msra.mxu0 %v1402
    %1444 = vmatprep.subr.bf16.mxu0 %v1399
    %1445 = vmatpush1.bf16.msra.mxu0 %v1398
    %1446 = vmatprep.subr.bf16.mxu0 %v1395
    %1447 = vmatpush1.bf16.msra.mxu0 %v1394
    %1448 = vmatprep.subr.bf16.mxu0 %v1391
    %1449 = vmatpush1.bf16.msra.mxu0 %v1390
    %1450 = vmatprep.subr.bf16.mxu0 0
    %1451 = vmatpush2.bf16.msra.mxu0 0
    %1452 = vmatprep.subr.bf16.mxu0 0
    %1453 = vmatpush2.bf16.msra.mxu0 0
    %1454 = vmatprep.subr.bf16.mxu0 0
    %1455 = vmatpush2.bf16.msra.mxu0 0
    %1456 = vmatprep.subr.bf16.mxu0 0
    %1457 = vmatpush2.bf16.msra.mxu0 0
    %1458 = vmatprep.subr.bf16.mxu0 0
    %1459 = vmatpush2.bf16.msra.mxu0 0
    %1460 = vmatprep.subr.bf16.mxu0 0
    %1461 = vmatpush2.bf16.msra.mxu0 0
    %1462 = vmatprep.subr.bf16.mxu0 0
    %1463 = vmatpush2.bf16.msra.mxu0 0
    %1464 = vmatprep.subr.bf16.mxu0 0
    %1465 = vmatpush2.bf16.msra.mxu0 0
    %1466 = vmatprep.mubr.bf16.mxu0 0
    %1467 = vmatmul.mubr.bf16.gmra.mxu0 %v1423
    %v1468 = vpop.f32.mrf.mxu0
    %v1469 = vadd.f32 0.0, %v1468
    %v1470 = vpop.f32.mrf.mxu0
    %v1471 = vadd.f32 0.0, %v1470
    %v1472 = vpop.f32.mrf.mxu0
    %v1473 = vadd.f32 0.0, %v1472
    %v1474 = vpop.f32.mrf.mxu0
    %v1475 = vadd.f32 0.0, %v1474
    %1476 = vmatprep.mubr.bf16.mxu0 0
    %1477 = vmatmul.mubr.bf16.gmra.mxu0 %v1426
    %v1478 = vpop.f32.mrf.mxu0
    %v1479 = vadd.f32 0.0, %v1478
    %v1480 = vpop.f32.mrf.mxu0
    %v1481 = vadd.f32 0.0, %v1480
    %v1482 = vpop.f32.mrf.mxu0
    %v1483 = vadd.f32 0.0, %v1482
    %v1484 = vpop.f32.mrf.mxu0
    %v1485 = vadd.f32 0.0, %v1484
    %1486 = vmatprep.mubr.bf16.mxu0 0
    %1487 = vmatmul.mubr.bf16.gmra.mxu0 %v1429
    %v1488 = vpop.f32.mrf.mxu0
    %v1489 = vadd.f32 0.0, %v1488
    %v1490 = vpop.f32.mrf.mxu0
    %v1491 = vadd.f32 0.0, %v1490
    %v1492 = vpop.f32.mrf.mxu0
    %v1493 = vadd.f32 0.0, %v1492
    %v1494 = vpop.f32.mrf.mxu0
    %v1495 = vadd.f32 0.0, %v1494
    %1496 = vmatprep.mubr.bf16.mxu0 0
    %1497 = vmatmul.mubr.bf16.gmra.mxu0 %v1432
    %v1498 = vpop.f32.mrf.mxu0
    %v1499 = vadd.f32 0.0, %v1498
    %v1500 = vpop.f32.mrf.mxu0
    %v1501 = vadd.f32 0.0, %v1500
    %v1502 = vpop.f32.mrf.mxu0
    %v1503 = vadd.f32 0.0, %v1502
    %v1504 = vpop.f32.mrf.mxu0
    %v1505 = vadd.f32 0.0, %v1504
    %1506 = vdwg.mxu0
    %1507 = vmatprep.subr.bf16.mxu0 0
    %1508 = vmatpush1.bf16.msra.mxu0 0
    %1509 = vmatprep.subr.bf16.mxu0 0
    %1510 = vmatpush1.bf16.msra.mxu0 0
    %1511 = vmatprep.subr.bf16.mxu0 0
    %1512 = vmatpush1.bf16.msra.mxu0 0
    %1513 = vmatprep.subr.bf16.mxu0 0
    %1514 = vmatpush1.bf16.msra.mxu0 0
    %1515 = vmatprep.subr.bf16.mxu0 %v1405
    %1516 = vmatpush1.bf16.msra.mxu0 %v1404
    %1517 = vmatprep.subr.bf16.mxu0 %v1401
    %1518 = vmatpush1.bf16.msra.mxu0 %v1400
    %1519 = vmatprep.subr.bf16.mxu0 %v1397
    %1520 = vmatpush1.bf16.msra.mxu0 %v1396
    %1521 = vmatprep.subr.bf16.mxu0 %v1393
    %1522 = vmatpush1.bf16.msra.mxu0 %v1392
    %1523 = vmatprep.subr.bf16.mxu0 0
    %1524 = vmatpush2.bf16.msra.mxu0 0
    %1525 = vmatprep.subr.bf16.mxu0 0
    %1526 = vmatpush2.bf16.msra.mxu0 0
    %1527 = vmatprep.subr.bf16.mxu0 0
    %1528 = vmatpush2.bf16.msra.mxu0 0
    %1529 = vmatprep.subr.bf16.mxu0 0
    %1530 = vmatpush2.bf16.msra.mxu0 0
    %1531 = vmatprep.subr.bf16.mxu0 0
    %1532 = vmatpush2.bf16.msra.mxu0 0
    %1533 = vmatprep.subr.bf16.mxu0 0
    %1534 = vmatpush2.bf16.msra.mxu0 0
    %1535 = vmatprep.subr.bf16.mxu0 0
    %1536 = vmatpush2.bf16.msra.mxu0 0
    %1537 = vmatprep.subr.bf16.mxu0 0
    %1538 = vmatpush2.bf16.msra.mxu0 0
    %1539 = vmatprep.mubr.bf16.mxu0 0
    %1540 = vmatmul.mubr.bf16.gmra.mxu0 %v1423
    %v1541 = vpop.f32.mrf.mxu0
    %v1542 = vadd.f32 0.0, %v1541
    %v1543 = vpop.f32.mrf.mxu0
    %v1544 = vadd.f32 0.0, %v1543
    %v1545 = vpop.f32.mrf.mxu0
    %v1546 = vadd.f32 0.0, %v1545
    %v1547 = vpop.f32.mrf.mxu0
    %v1548 = vadd.f32 0.0, %v1547
    %1549 = vmatprep.mubr.bf16.mxu0 0
    %1550 = vmatmul.mubr.bf16.gmra.mxu0 %v1426
    %v1551 = vpop.f32.mrf.mxu0
    %v1552 = vadd.f32 0.0, %v1551
    %v1553 = vpop.f32.mrf.mxu0
    %v1554 = vadd.f32 0.0, %v1553
    %v1555 = vpop.f32.mrf.mxu0
    %v1556 = vadd.f32 0.0, %v1555
    %v1557 = vpop.f32.mrf.mxu0
    %v1558 = vadd.f32 0.0, %v1557
    %1559 = vmatprep.mubr.bf16.mxu0 0
    %1560 = vmatmul.mubr.bf16.gmra.mxu0 %v1429
    %v1561 = vpop.f32.mrf.mxu0
    %v1562 = vadd.f32 0.0, %v1561
    %v1563 = vpop.f32.mrf.mxu0
    %v1564 = vadd.f32 0.0, %v1563
    %v1565 = vpop.f32.mrf.mxu0
    %v1566 = vadd.f32 0.0, %v1565
    %v1567 = vpop.f32.mrf.mxu0
    %v1568 = vadd.f32 0.0, %v1567
    %1569 = vmatprep.mubr.bf16.mxu0 0
    %1570 = vmatmul.mubr.bf16.gmra.mxu0 %v1432
    %v1571 = vpop.f32.mrf.mxu0
    %v1572 = vadd.f32 0.0, %v1571
    %v1573 = vpop.f32.mrf.mxu0
    %v1574 = vadd.f32 0.0, %v1573
    %v1575 = vpop.f32.mrf.mxu0
    %v1576 = vadd.f32 0.0, %v1575
    %v1577 = vpop.f32.mrf.mxu0
    %v1578 = vadd.f32 0.0, %v1577
    %1579 = vdwg.mxu0
    %1580 = vst [vmem:[#allocation2] sm:$0xff] %v1469
    %1581 = vst [vmem:[#allocation2 + $0x8] sm:$0xff] %v1471
    %1582 = vst [vmem:[#allocation2 + $0x10] sm:$0xff] %v1542
    %1583 = vst [vmem:[#allocation2 + $0x18] sm:$0xff] %v1544
    %1584 = vst [vmem:[#allocation2 + $0x20] sm:$0xff] %v1473
    %1585 = vst [vmem:[#allocation2 + $0x28] sm:$0xff] %v1475
    %1586 = vst [vmem:[#allocation2 + $0x30] sm:$0xff] %v1546
    %1587 = vst [vmem:[#allocation2 + $0x38] sm:$0xff] %v1548
    %1588 = vst [vmem:[#allocation2 + $0x40] sm:$0xff] %v1479
    %1589 = vst [vmem:[#allocation2 + $0x48] sm:$0xff] %v1481
    %1590 = vst [vmem:[#allocation2 + $0x50] sm:$0xff] %v1552
    %1591 = vst [vmem:[#allocation2 + $0x58] sm:$0xff] %v1554
    %1592 = vst [vmem:[#allocation2 + $0x60] sm:$0xff] %v1483
    %1593 = vst [vmem:[#allocation2 + $0x68] sm:$0xff] %v1485
    %1594 = vst [vmem:[#allocation2 + $0x70] sm:$0xff] %v1556
    %1595 = vst [vmem:[#allocation2 + $0x78] sm:$0xff] %v1558
    %1596 = vst [vmem:[#allocation2 + $0x80] sm:$0xff] %v1489
    %1597 = vst [vmem:[#allocation2 + $0x88] sm:$0xff] %v1491
    %1598 = vst [vmem:[#allocation2 + $0x90] sm:$0xff] %v1562
    %1599 = vst [vmem:[#allocation2 + $0x98] sm:$0xff] %v1564
    %1600 = vst [vmem:[#allocation2 + $0xa0] sm:$0xff] %v1493
    %1601 = vst [vmem:[#allocation2 + $0xa8] sm:$0xff] %v1495
    %1602 = vst [vmem:[#allocation2 + $0xb0] sm:$0xff] %v1566
    %1603 = vst [vmem:[#allocation2 + $0xb8] sm:$0xff] %v1568
    %1604 = vst [vmem:[#allocation2 + $0xc0] sm:$0xff] %v1499
    %1605 = vst [vmem:[#allocation2 + $0xc8] sm:$0xff] %v1501
    %1606 = vst [vmem:[#allocation2 + $0xd0] sm:$0xff] %v1572
    %1607 = vst [vmem:[#allocation2 + $0xd8] sm:$0xff] %v1574
    %1608 = vst [vmem:[#allocation2 + $0xe0] sm:$0xff] %v1503
    %1609 = vst [vmem:[#allocation2 + $0xe8] sm:$0xff] %v1505
    %1610 = vst [vmem:[#allocation2 + $0xf0] sm:$0xff] %v1576
    %1611 = vst [vmem:[#allocation2 + $0xf8] sm:$0xff] %v1578
    %v1612 = vld [vmem:[%s7] sm:$0x3]
    %v1613 = vld [vmem:[#allocation2] sm:$0xff]
    %v1614 = vld [vmem:[#allocation2 + $0x8] sm:$0xff]
    %v1615 = vld [vmem:[#allocation2 + $0xf0] sm:$0xff]
    %v1616 = vld [vmem:[#allocation2 + $0xf8] sm:$0xff]
    %v1617 = vadd.f32 %v1613, %v1615
    %v1618 = vadd.f32 %v1614, %v1616
    %v1620 = vlaneseq
    %v1621 = vshrl.u32 %v1620, 7
    %v1622 = vsub.s32 0, %v1621
    %v1623 = vrot.slane %v1612, %v1622
    %v1624 = vlaneseq
    %v1625 = vshrl.u32 %v1624, 7
    %v1626 = vsub.s32 1, %v1625
    %v1627 = vrot.slane %v1612, %v1626
    %v1630 = vadd.f32 %v1617, %v1623
    %v1631 = vadd.f32 %v1618, %v1627
    %1632 = vst [vmem:[#allocation3] sm:$0xff] %v1630
    %1633 = vst [vmem:[#allocation3 + $0x8] sm:$0xff] %v1631
    %v1634 = vld [vmem:[#allocation2 + $0x20] sm:$0xff]
    %v1635 = vld [vmem:[#allocation2 + $0x28] sm:$0xff]
    %v1636 = vld [vmem:[#allocation2 + $0xd0] sm:$0xff]
    %v1637 = vld [vmem:[#allocation2 + $0xd8] sm:$0xff]
    %v1638 = vadd.f32 %v1634, %v1636
    %v1639 = vadd.f32 %v1635, %v1637
    %v1640 = vadd.f32 %v1638, %v1623
    %v1641 = vadd.f32 %v1639, %v1627
    %1642 = vst [vmem:[#allocation3 + $0x10] sm:$0xff] %v1640
    %1643 = vst [vmem:[#allocation3 + $0x18] sm:$0xff] %v1641
    %v1644 = vld [vmem:[#allocation2 + $0x40] sm:$0xff]
    %v1645 = vld [vmem:[#allocation2 + $0x48] sm:$0xff]
    %v1646 = vld [vmem:[#allocation2 + $0xb0] sm:$0xff]
    %v1647 = vld [vmem:[#allocation2 + $0xb8] sm:$0xff]
    %v1648 = vadd.f32 %v1644, %v1646
    %v1649 = vadd.f32 %v1645, %v1647
    %v1650 = vadd.f32 %v1648, %v1623
    %v1651 = vadd.f32 %v1649, %v1627
    %1652 = vst [vmem:[#allocation3 + $0x20] sm:$0xff] %v1650
    %1653 = vst [vmem:[#allocation3 + $0x28] sm:$0xff] %v1651
    %v1654 = vld [vmem:[#allocation2 + $0x60] sm:$0xff]
    %v1655 = vld [vmem:[#allocation2 + $0x68] sm:$0xff]
    %v1656 = vld [vmem:[#allocation2 + $0x90] sm:$0xff]
    %v1657 = vld [vmem:[#allocation2 + $0x98] sm:$0xff]
    %v1658 = vadd.f32 %v1654, %v1656
    %v1659 = vadd.f32 %v1655, %v1657
    %v1660 = vadd.f32 %v1658, %v1623
    %v1661 = vadd.f32 %v1659, %v1627
    %1662 = vst [vmem:[#allocation3 + $0x30] sm:$0xff] %v1660
    %1663 = vst [vmem:[#allocation3 + $0x38] sm:$0xff] %v1661
    %v1664 = vld [vmem:[#allocation2 + $0x80] sm:$0xff]
    %v1665 = vld [vmem:[#allocation2 + $0x88] sm:$0xff]
    %v1666 = vld [vmem:[#allocation2 + $0x70] sm:$0xff]
    %v1667 = vld [vmem:[#allocation2 + $0x78] sm:$0xff]
    %v1668 = vadd.f32 %v1664, %v1666
    %v1669 = vadd.f32 %v1665, %v1667
    %v1670 = vadd.f32 %v1668, %v1623
    %v1671 = vadd.f32 %v1669, %v1627
    %1672 = vst [vmem:[#allocation3 + $0x40] sm:$0xff] %v1670
    %1673 = vst [vmem:[#allocation3 + $0x48] sm:$0xff] %v1671
    %v1674 = vld [vmem:[#allocation2 + $0xa0] sm:$0xff]
    %v1675 = vld [vmem:[#allocation2 + $0xa8] sm:$0xff]
    %v1676 = vld [vmem:[#allocation2 + $0x50] sm:$0xff]
    %v1677 = vld [vmem:[#allocation2 + $0x58] sm:$0xff]
    %v1678 = vadd.f32 %v1674, %v1676
    %v1679 = vadd.f32 %v1675, %v1677
    %v1680 = vadd.f32 %v1678, %v1623
    %v1681 = vadd.f32 %v1679, %v1627
    %1682 = vst [vmem:[#allocation3 + $0x50] sm:$0xff] %v1680
    %1683 = vst [vmem:[#allocation3 + $0x58] sm:$0xff] %v1681
    %v1684 = vld [vmem:[#allocation2 + $0xc0] sm:$0xff]
    %v1685 = vld [vmem:[#allocation2 + $0xc8] sm:$0xff]
    %v1686 = vld [vmem:[#allocation2 + $0x30] sm:$0xff]
    %v1687 = vld [vmem:[#allocation2 + $0x38] sm:$0xff]
    %v1688 = vadd.f32 %v1684, %v1686
    %v1689 = vadd.f32 %v1685, %v1687
    %v1690 = vadd.f32 %v1688, %v1623
    %v1691 = vadd.f32 %v1689, %v1627
    %1692 = vst [vmem:[#allocation3 + $0x60] sm:$0xff] %v1690
    %1693 = vst [vmem:[#allocation3 + $0x68] sm:$0xff] %v1691
    %v1694 = vld [vmem:[#allocation2 + $0xe0] sm:$0xff]
    %v1695 = vld [vmem:[#allocation2 + $0xe8] sm:$0xff]
    %v1696 = vld [vmem:[#allocation2 + $0x10] sm:$0xff]
    %v1697 = vld [vmem:[#allocation2 + $0x18] sm:$0xff]
    %v1698 = vadd.f32 %v1694, %v1696
    %v1699 = vadd.f32 %v1695, %v1697
    %v1700 = vadd.f32 %v1698, %v1623
    %v1701 = vadd.f32 %v1699, %v1627
    %1702 = vst [vmem:[#allocation3 + $0x70] sm:$0xff] %v1700
    %1703 = vst [vmem:[#allocation3 + $0x78] sm:$0xff] %v1701
    %v1704 = vld [vmem:[#allocation12] sm:$0xff]
    %v1705 = vld [vmem:[#allocation12 + $0x8] sm:$0xff]
    %v1706 = vld [vmem:[#allocation12 + $0x10] sm:$0xff]
    %v1707 = vld [vmem:[#allocation12 + $0x18] sm:$0xff]
    %v1708 = vld [vmem:[#allocation12 + $0x20] sm:$0xff]
    %v1709 = vld [vmem:[#allocation12 + $0x28] sm:$0xff]
    %v1710 = vld [vmem:[#allocation12 + $0x30] sm:$0xff]
    %v1711 = vld [vmem:[#allocation12 + $0x38] sm:$0xff]
    %v1712 = vld [vmem:[#allocation3] sm:$0xff]
    %v1713 = vld [vmem:[#allocation3 + $0x8] sm:$0xff]
    %v1722 = vunpack.c.l.b16 %v1704
    %v1723 = vunpack.c.h.b16 %v1704
    %v1724 = vunpack.c.l.b16 %v1705
    %v1725 = vunpack.c.h.b16 %v1705
    %v1726 = vunpack.c.l.b16 %v1706
    %v1727 = vunpack.c.h.b16 %v1706
    %v1728 = vunpack.c.l.b16 %v1707
    %v1729 = vunpack.c.h.b16 %v1707
    %v1730 = vunpack.c.l.b16 %v1708
    %v1731 = vunpack.c.h.b16 %v1708
    %v1732 = vunpack.c.l.b16 %v1709
    %v1733 = vunpack.c.h.b16 %v1709
    %v1734 = vunpack.c.l.b16 %v1710
    %v1735 = vunpack.c.h.b16 %v1710
    %v1736 = vunpack.c.l.b16 %v1711
    %v1737 = vunpack.c.h.b16 %v1711
    %v1738 = vpack.c.b16 %v1724, %v1722
    %v1739 = vpack.c.b16 %v1725, %v1723
    %v1740 = vpack.c.b16 %v1728, %v1726
    %v1741 = vpack.c.b16 %v1729, %v1727
    %v1742 = vpack.c.b16 %v1732, %v1730
    %v1743 = vpack.c.b16 %v1733, %v1731
    %v1744 = vpack.c.b16 %v1736, %v1734
    %v1745 = vpack.c.b16 %v1737, %v1735
    %1754 = vmatprep.subr.bf16.mxu0 0
    %1755 = vmatpush1.bf16.msra.mxu0 0
    %1756 = vmatprep.subr.bf16.mxu0 0
    %1757 = vmatpush1.bf16.msra.mxu0 0
    %1758 = vmatprep.subr.bf16.mxu0 0
    %1759 = vmatpush1.bf16.msra.mxu0 0
    %1760 = vmatprep.subr.bf16.mxu0 0
    %1761 = vmatpush1.bf16.msra.mxu0 0
    %1762 = vmatprep.subr.bf16.mxu0 %v1745
    %1763 = vmatpush1.bf16.msra.mxu0 %v1744
    %1764 = vmatprep.subr.bf16.mxu0 %v1743
    %1765 = vmatpush1.bf16.msra.mxu0 %v1742
    %1766 = vmatprep.subr.bf16.mxu0 %v1741
    %1767 = vmatpush1.bf16.msra.mxu0 %v1740
    %1768 = vmatprep.subr.bf16.mxu0 %v1739
    %1769 = vmatpush1.bf16.msra.mxu0 %v1738
    %1770 = vmatprep.subr.bf16.mxu0 0
    %1771 = vmatpush2.bf16.msra.mxu0 0
    %1772 = vmatprep.subr.bf16.mxu0 0
    %1773 = vmatpush2.bf16.msra.mxu0 0
    %1774 = vmatprep.subr.bf16.mxu0 0
    %1775 = vmatpush2.bf16.msra.mxu0 0
    %1776 = vmatprep.subr.bf16.mxu0 0
    %1777 = vmatpush2.bf16.msra.mxu0 0
    %1778 = vmatprep.subr.bf16.mxu0 0
    %1779 = vmatpush2.bf16.msra.mxu0 0
    %1780 = vmatprep.subr.bf16.mxu0 0
    %1781 = vmatpush2.bf16.msra.mxu0 0
    %1782 = vmatprep.subr.bf16.mxu0 0
    %1783 = vmatpush2.bf16.msra.mxu0 0
    %1784 = vmatprep.subr.bf16.mxu0 0
    %1785 = vmatpush2.bf16.msra.mxu0 0
    %1786 = vmatprep.mubr.bf16.mxu0 0
    %1787 = vmatmul.mubr.bf16.gmra.mxu0 %v721
    %v1788 = vpop.f32.mrf.mxu0
    %v1789 = vadd.f32 0.0, %v1788
    %v1790 = vpop.f32.mrf.mxu0
    %v1791 = vadd.f32 0.0, %v1790
    %v1792 = vpop.f32.mrf.mxu0
    %v1793 = vpop.f32.mrf.mxu0
    %1794 = vdwg.mxu0
    %v1795 = vadd.f32 %v1712, %v1789
    %v1796 = vadd.f32 %v1713, %v1791
    %v1797 = vmul.f32 %v1795, 0.5
    %v1798 = vtanh.pop %v1797
    %v1799 = vmul.f32 %v1798, 0.5
    %v1800 = vadd.f32 %v1799, 0.5
    %v1801 = vtanh.pop %v1796
    %v1802 = vmul.f32 %v1796, 0.5
    %v1803 = vtanh.pop %v1802
    %v1804 = vmul.f32 %v1803, 0.5
    %v1805 = vadd.f32 %v1804, 0.5
    %v1806 = vmul.f32 %v1800, 0.0
    %v1807 = vmul.f32 %v1800, %v1801
    %1809 = vrot.lane.b32.xlu0 %v1807, 64
    %v1810 = vpop.permute.xlu0 %1809
    %v1812 = vadd.f32 %v1806, %v1810
    %v1813 = vtanh.pop %v1812
    %v1814 = vmul.f32 %v1805, %v1813
    %v1815 = vsub.s32 %v337, 1
    %vm1816 = vcmp.eq.s32.totalorder %v1815, 0
    %v1817 = vsel %vm1816, 1, 0
    %1818 = vset.pattern.permute.xlu0 0
    %1819 = vperm.xlu0 %1818, %v1817
    %v1820 = vpop.permute.xlu0 %1819
    %vm1821 = vcmp.eq.s32.totalorder %v1820, 1
    %v1822 = vsel %vm1821, %v1814, 0.0
    %v1823 = vsub.s32 8, %v337
    %vm1824 = vcmp.eq.s32.totalorder %v1823, 0
    %v1825 = vsel %vm1824, 1, 0
    %1826 = vset.pattern.permute.xlu0 0
    %1827 = vperm.xlu0 %1826, %v1825
    %v1828 = vpop.permute.xlu0 %1827
    %vm1829 = vcmp.eq.s32.totalorder %v1828, 1
    %v1830 = vsel %vm1829, %v1814, 0.0
    %v1831 = vld [vmem:[#allocation3 + $0x10] sm:$0xff]
    %v1832 = vld [vmem:[#allocation3 + $0x18] sm:$0xff]
    %v1833 = vpack.c.bf16 %v1814, %v1814
    %1835 = vrot.lane.b32.xlu0 %v1833, 64
    %v1836 = vpop.permute.xlu0 %1835
    %v1838 = vsel %vm719, %v1836, 0
    %1840 = vmatprep.subr.bf16.mxu0 0
    %1841 = vmatpush1.bf16.msra.mxu0 0
    %1842 = vmatprep.subr.bf16.mxu0 0
    %1843 = vmatpush1.bf16.msra.mxu0 0
    %1844 = vmatprep.subr.bf16.mxu0 0
    %1845 = vmatpush1.bf16.msra.mxu0 0
    %1846 = vmatprep.subr.bf16.mxu0 0
    %1847 = vmatpush1.bf16.msra.mxu0 0
    %1848 = vmatprep.subr.bf16.mxu0 %v1745
    %1849 = vmatpush1.bf16.msra.mxu0 %v1744
    %1850 = vmatprep.subr.bf16.mxu0 %v1743
    %1851 = vmatpush1.bf16.msra.mxu0 %v1742
    %1852 = vmatprep.subr.bf16.mxu0 %v1741
    %1853 = vmatpush1.bf16.msra.mxu0 %v1740
    %1854 = vmatprep.subr.bf16.mxu0 %v1739
    %1855 = vmatpush1.bf16.msra.mxu0 %v1738
    %1856 = vmatprep.subr.bf16.mxu0 0
    %1857 = vmatpush2.bf16.msra.mxu0 0
    %1858 = vmatprep.subr.bf16.mxu0 0
    %1859 = vmatpush2.bf16.msra.mxu0 0
    %1860 = vmatprep.subr.bf16.mxu0 0
    %1861 = vmatpush2.bf16.msra.mxu0 0
    %1862 = vmatprep.subr.bf16.mxu0 0
    %1863 = vmatpush2.bf16.msra.mxu0 0
    %1864 = vmatprep.subr.bf16.mxu0 0
    %1865 = vmatpush2.bf16.msra.mxu0 0
    %1866 = vmatprep.subr.bf16.mxu0 0
    %1867 = vmatpush2.bf16.msra.mxu0 0
    %1868 = vmatprep.subr.bf16.mxu0 0
    %1869 = vmatpush2.bf16.msra.mxu0 0
    %1870 = vmatprep.subr.bf16.mxu0 0
    %1871 = vmatpush2.bf16.msra.mxu0 0
    %1872 = vmatprep.mubr.bf16.mxu0 0
    %1873 = vmatmul.mubr.bf16.gmra.mxu0 %v1838
    %v1874 = vpop.f32.mrf.mxu0
    %v1875 = vadd.f32 0.0, %v1874
    %v1876 = vpop.f32.mrf.mxu0
    %v1877 = vadd.f32 0.0, %v1876
    %v1878 = vpop.f32.mrf.mxu0
    %v1879 = vpop.f32.mrf.mxu0
    %1880 = vdwg.mxu0
    %v1881 = vadd.f32 %v1831, %v1875
    %v1882 = vadd.f32 %v1832, %v1877
    %v1883 = vmul.f32 %v1881, 0.5
    %v1884 = vtanh.pop %v1883
    %v1885 = vmul.f32 %v1884, 0.5
    %v1886 = vadd.f32 %v1885, 0.5
    %v1887 = vtanh.pop %v1882
    %v1888 = vmul.f32 %v1882, 0.5
    %v1889 = vtanh.pop %v1888
    %v1890 = vmul.f32 %v1889, 0.5
    %v1891 = vadd.f32 %v1890, 0.5
    %v1892 = vmul.f32 %v1886, %v1812
    %v1893 = vmul.f32 %v1886, %v1887
    %1895 = vrot.lane.b32.xlu0 %v1893, 64
    %v1896 = vpop.permute.xlu0 %1895
    %v1898 = vadd.f32 %v1892, %v1896
    %v1899 = vtanh.pop %v1898
    %v1900 = vmul.f32 %v1891, %v1899
    %vm1901 = vcmp.eq.s32.totalorder %v1815, 1
    %v1902 = vsel %vm1901, 1, 0
    %1903 = vset.pattern.permute.xlu0 0
    %1904 = vperm.xlu0 %1903, %v1902
    %v1905 = vpop.permute.xlu0 %1904
    %vm1906 = vcmp.eq.s32.totalorder %v1905, 1
    %v1907 = vsel %vm1906, %v1900, %v1822
    %vm1908 = vcmp.eq.s32.totalorder %v1823, 1
    %v1909 = vsel %vm1908, 1, 0
    %1910 = vset.pattern.permute.xlu0 0
    %1911 = vperm.xlu0 %1910, %v1909
    %v1912 = vpop.permute.xlu0 %1911
    %vm1913 = vcmp.eq.s32.totalorder %v1912, 1
    %v1914 = vsel %vm1913, %v1900, %v1830
    %v1915 = vld [vmem:[#allocation3 + $0x20] sm:$0xff]
    %v1916 = vld [vmem:[#allocation3 + $0x28] sm:$0xff]
    %v1917 = vpack.c.bf16 %v1900, %v1900
    %1919 = vrot.lane.b32.xlu0 %v1917, 64
    %v1920 = vpop.permute.xlu0 %1919
    %v1922 = vsel %vm719, %v1920, 0
    %1924 = vmatprep.subr.bf16.mxu0 0
    %1925 = vmatpush1.bf16.msra.mxu0 0
    %1926 = vmatprep.subr.bf16.mxu0 0
    %1927 = vmatpush1.bf16.msra.mxu0 0
    %1928 = vmatprep.subr.bf16.mxu0 0
    %1929 = vmatpush1.bf16.msra.mxu0 0
    %1930 = vmatprep.subr.bf16.mxu0 0
    %1931 = vmatpush1.bf16.msra.mxu0 0
    %1932 = vmatprep.subr.bf16.mxu0 %v1745
    %1933 = vmatpush1.bf16.msra.mxu0 %v1744
    %1934 = vmatprep.subr.bf16.mxu0 %v1743
    %1935 = vmatpush1.bf16.msra.mxu0 %v1742
    %1936 = vmatprep.subr.bf16.mxu0 %v1741
    %1937 = vmatpush1.bf16.msra.mxu0 %v1740
    %1938 = vmatprep.subr.bf16.mxu0 %v1739
    %1939 = vmatpush1.bf16.msra.mxu0 %v1738
    %1940 = vmatprep.subr.bf16.mxu0 0
    %1941 = vmatpush2.bf16.msra.mxu0 0
    %1942 = vmatprep.subr.bf16.mxu0 0
    %1943 = vmatpush2.bf16.msra.mxu0 0
    %1944 = vmatprep.subr.bf16.mxu0 0
    %1945 = vmatpush2.bf16.msra.mxu0 0
    %1946 = vmatprep.subr.bf16.mxu0 0
    %1947 = vmatpush2.bf16.msra.mxu0 0
    %1948 = vmatprep.subr.bf16.mxu0 0
    %1949 = vmatpush2.bf16.msra.mxu0 0
    %1950 = vmatprep.subr.bf16.mxu0 0
    %1951 = vmatpush2.bf16.msra.mxu0 0
    %1952 = vmatprep.subr.bf16.mxu0 0
    %1953 = vmatpush2.bf16.msra.mxu0 0
    %1954 = vmatprep.subr.bf16.mxu0 0
    %1955 = vmatpush2.bf16.msra.mxu0 0
    %1956 = vmatprep.mubr.bf16.mxu0 0
    %1957 = vmatmul.mubr.bf16.gmra.mxu0 %v1922
    %v1958 = vpop.f32.mrf.mxu0
    %v1959 = vadd.f32 0.0, %v1958
    %v1960 = vpop.f32.mrf.mxu0
    %v1961 = vadd.f32 0.0, %v1960
    %v1962 = vpop.f32.mrf.mxu0
    %v1963 = vpop.f32.mrf.mxu0
    %1964 = vdwg.mxu0
    %v1965 = vadd.f32 %v1915, %v1959
    %v1966 = vadd.f32 %v1916, %v1961
    %v1967 = vmul.f32 %v1965, 0.5
    %v1968 = vtanh.pop %v1967
    %v1969 = vmul.f32 %v1968, 0.5
    %v1970 = vadd.f32 %v1969, 0.5
    %v1971 = vtanh.pop %v1966
    %v1972 = vmul.f32 %v1966, 0.5
    %v1973 = vtanh.pop %v1972
    %v1974 = vmul.f32 %v1973, 0.5
    %v1975 = vadd.f32 %v1974, 0.5
    %v1976 = vmul.f32 %v1970, %v1898
    %v1977 = vmul.f32 %v1970, %v1971
    %1979 = vrot.lane.b32.xlu0 %v1977, 64
    %v1980 = vpop.permute.xlu0 %1979
    %v1982 = vadd.f32 %v1976, %v1980
    %v1983 = vtanh.pop %v1982
    %v1984 = vmul.f32 %v1975, %v1983
    %vm1985 = vcmp.eq.s32.totalorder %v1815, 2
    %v1986 = vsel %vm1985, 1, 0
    %1987 = vset.pattern.permute.xlu0 0
    %1988 = vperm.xlu0 %1987, %v1986
    %v1989 = vpop.permute.xlu0 %1988
    %vm1990 = vcmp.eq.s32.totalorder %v1989, 1
    %v1991 = vsel %vm1990, %v1984, %v1907
    %vm1992 = vcmp.eq.s32.totalorder %v1823, 2
    %v1993 = vsel %vm1992, 1, 0
    %1994 = vset.pattern.permute.xlu0 0
    %1995 = vperm.xlu0 %1994, %v1993
    %v1996 = vpop.permute.xlu0 %1995
    %vm1997 = vcmp.eq.s32.totalorder %v1996, 1
    %v1998 = vsel %vm1997, %v1984, %v1914
    %v1999 = vld [vmem:[#allocation3 + $0x30] sm:$0xff]
    %v2000 = vld [vmem:[#allocation3 + $0x38] sm:$0xff]
    %v2001 = vpack.c.bf16 %v1984, %v1984
    %2003 = vrot.lane.b32.xlu0 %v2001, 64
    %v2004 = vpop.permute.xlu0 %2003
    %v2006 = vsel %vm719, %v2004, 0
    %2008 = vmatprep.subr.bf16.mxu0 0
    %2009 = vmatpush1.bf16.msra.mxu0 0
    %2010 = vmatprep.subr.bf16.mxu0 0
    %2011 = vmatpush1.bf16.msra.mxu0 0
    %2012 = vmatprep.subr.bf16.mxu0 0
    %2013 = vmatpush1.bf16.msra.mxu0 0
    %2014 = vmatprep.subr.bf16.mxu0 0
    %2015 = vmatpush1.bf16.msra.mxu0 0
    %2016 = vmatprep.subr.bf16.mxu0 %v1745
    %2017 = vmatpush1.bf16.msra.mxu0 %v1744
    %2018 = vmatprep.subr.bf16.mxu0 %v1743
    %2019 = vmatpush1.bf16.msra.mxu0 %v1742
    %2020 = vmatprep.subr.bf16.mxu0 %v1741
    %2021 = vmatpush1.bf16.msra.mxu0 %v1740
    %2022 = vmatprep.subr.bf16.mxu0 %v1739
    %2023 = vmatpush1.bf16.msra.mxu0 %v1738
    %2024 = vmatprep.subr.bf16.mxu0 0
    %2025 = vmatpush2.bf16.msra.mxu0 0
    %2026 = vmatprep.subr.bf16.mxu0 0
    %2027 = vmatpush2.bf16.msra.mxu0 0
    %2028 = vmatprep.subr.bf16.mxu0 0
    %2029 = vmatpush2.bf16.msra.mxu0 0
    %2030 = vmatprep.subr.bf16.mxu0 0
    %2031 = vmatpush2.bf16.msra.mxu0 0
    %2032 = vmatprep.subr.bf16.mxu0 0
    %2033 = vmatpush2.bf16.msra.mxu0 0
    %2034 = vmatprep.subr.bf16.mxu0 0
    %2035 = vmatpush2.bf16.msra.mxu0 0
    %2036 = vmatprep.subr.bf16.mxu0 0
    %2037 = vmatpush2.bf16.msra.mxu0 0
    %2038 = vmatprep.subr.bf16.mxu0 0
    %2039 = vmatpush2.bf16.msra.mxu0 0
    %2040 = vmatprep.mubr.bf16.mxu0 0
    %2041 = vmatmul.mubr.bf16.gmra.mxu0 %v2006
    %v2042 = vpop.f32.mrf.mxu0
    %v2043 = vadd.f32 0.0, %v2042
    %v2044 = vpop.f32.mrf.mxu0
    %v2045 = vadd.f32 0.0, %v2044
    %v2046 = vpop.f32.mrf.mxu0
    %v2047 = vpop.f32.mrf.mxu0
    %2048 = vdwg.mxu0
    %v2049 = vadd.f32 %v1999, %v2043
    %v2050 = vadd.f32 %v2000, %v2045
    %v2051 = vmul.f32 %v2049, 0.5
    %v2052 = vtanh.pop %v2051
    %v2053 = vmul.f32 %v2052, 0.5
    %v2054 = vadd.f32 %v2053, 0.5
    %v2055 = vtanh.pop %v2050
    %v2056 = vmul.f32 %v2050, 0.5
    %v2057 = vtanh.pop %v2056
    %v2058 = vmul.f32 %v2057, 0.5
    %v2059 = vadd.f32 %v2058, 0.5
    %v2060 = vmul.f32 %v2054, %v1982
    %v2061 = vmul.f32 %v2054, %v2055
    %2063 = vrot.lane.b32.xlu0 %v2061, 64
    %v2064 = vpop.permute.xlu0 %2063
    %v2066 = vadd.f32 %v2060, %v2064
    %v2067 = vtanh.pop %v2066
    %v2068 = vmul.f32 %v2059, %v2067
    %vm2069 = vcmp.eq.s32.totalorder %v1815, 3
    %v2070 = vsel %vm2069, 1, 0
    %2071 = vset.pattern.permute.xlu0 0
    %2072 = vperm.xlu0 %2071, %v2070
    %v2073 = vpop.permute.xlu0 %2072
    %vm2074 = vcmp.eq.s32.totalorder %v2073, 1
    %v2075 = vsel %vm2074, %v2068, %v1991
    %vm2076 = vcmp.eq.s32.totalorder %v1823, 3
    %v2077 = vsel %vm2076, 1, 0
    %2078 = vset.pattern.permute.xlu0 0
    %2079 = vperm.xlu0 %2078, %v2077
    %v2080 = vpop.permute.xlu0 %2079
    %vm2081 = vcmp.eq.s32.totalorder %v2080, 1
    %v2082 = vsel %vm2081, %v2068, %v1998
    %v2083 = vld [vmem:[#allocation3 + $0x40] sm:$0xff]
    %v2084 = vld [vmem:[#allocation3 + $0x48] sm:$0xff]
    %v2085 = vpack.c.bf16 %v2068, %v2068
    %2087 = vrot.lane.b32.xlu0 %v2085, 64
    %v2088 = vpop.permute.xlu0 %2087
    %v2090 = vsel %vm719, %v2088, 0
    %2092 = vmatprep.subr.bf16.mxu0 0
    %2093 = vmatpush1.bf16.msra.mxu0 0
    %2094 = vmatprep.subr.bf16.mxu0 0
    %2095 = vmatpush1.bf16.msra.mxu0 0
    %2096 = vmatprep.subr.bf16.mxu0 0
    %2097 = vmatpush1.bf16.msra.mxu0 0
    %2098 = vmatprep.subr.bf16.mxu0 0
    %2099 = vmatpush1.bf16.msra.mxu0 0
    %2100 = vmatprep.subr.bf16.mxu0 %v1745
    %2101 = vmatpush1.bf16.msra.mxu0 %v1744
    %2102 = vmatprep.subr.bf16.mxu0 %v1743
    %2103 = vmatpush1.bf16.msra.mxu0 %v1742
    %2104 = vmatprep.subr.bf16.mxu0 %v1741
    %2105 = vmatpush1.bf16.msra.mxu0 %v1740
    %2106 = vmatprep.subr.bf16.mxu0 %v1739
    %2107 = vmatpush1.bf16.msra.mxu0 %v1738
    %2108 = vmatprep.subr.bf16.mxu0 0
    %2109 = vmatpush2.bf16.msra.mxu0 0
    %2110 = vmatprep.subr.bf16.mxu0 0
    %2111 = vmatpush2.bf16.msra.mxu0 0
    %2112 = vmatprep.subr.bf16.mxu0 0
    %2113 = vmatpush2.bf16.msra.mxu0 0
    %2114 = vmatprep.subr.bf16.mxu0 0
    %2115 = vmatpush2.bf16.msra.mxu0 0
    %2116 = vmatprep.subr.bf16.mxu0 0
    %2117 = vmatpush2.bf16.msra.mxu0 0
    %2118 = vmatprep.subr.bf16.mxu0 0
    %2119 = vmatpush2.bf16.msra.mxu0 0
    %2120 = vmatprep.subr.bf16.mxu0 0
    %2121 = vmatpush2.bf16.msra.mxu0 0
    %2122 = vmatprep.subr.bf16.mxu0 0
    %2123 = vmatpush2.bf16.msra.mxu0 0
    %2124 = vmatprep.mubr.bf16.mxu0 0
    %2125 = vmatmul.mubr.bf16.gmra.mxu0 %v2090
    %v2126 = vpop.f32.mrf.mxu0
    %v2127 = vadd.f32 0.0, %v2126
    %v2128 = vpop.f32.mrf.mxu0
    %v2129 = vadd.f32 0.0, %v2128
    %v2130 = vpop.f32.mrf.mxu0
    %v2131 = vpop.f32.mrf.mxu0
    %2132 = vdwg.mxu0
    %v2133 = vadd.f32 %v2083, %v2127
    %v2134 = vadd.f32 %v2084, %v2129
    %v2135 = vmul.f32 %v2133, 0.5
    %v2136 = vtanh.pop %v2135
    %v2137 = vmul.f32 %v2136, 0.5
    %v2138 = vadd.f32 %v2137, 0.5
    %v2139 = vtanh.pop %v2134
    %v2140 = vmul.f32 %v2134, 0.5
    %v2141 = vtanh.pop %v2140
    %v2142 = vmul.f32 %v2141, 0.5
    %v2143 = vadd.f32 %v2142, 0.5
    %v2144 = vmul.f32 %v2138, %v2066
    %v2145 = vmul.f32 %v2138, %v2139
    %2147 = vrot.lane.b32.xlu0 %v2145, 64
    %v2148 = vpop.permute.xlu0 %2147
    %v2150 = vadd.f32 %v2144, %v2148
    %v2151 = vtanh.pop %v2150
    %v2152 = vmul.f32 %v2143, %v2151
    %vm2153 = vcmp.eq.s32.totalorder %v1815, 4
    %v2154 = vsel %vm2153, 1, 0
    %2155 = vset.pattern.permute.xlu0 0
    %2156 = vperm.xlu0 %2155, %v2154
    %v2157 = vpop.permute.xlu0 %2156
    %vm2158 = vcmp.eq.s32.totalorder %v2157, 1
    %v2159 = vsel %vm2158, %v2152, %v2075
    %vm2160 = vcmp.eq.s32.totalorder %v1823, 4
    %v2161 = vsel %vm2160, 1, 0
    %2162 = vset.pattern.permute.xlu0 0
    %2163 = vperm.xlu0 %2162, %v2161
    %v2164 = vpop.permute.xlu0 %2163
    %vm2165 = vcmp.eq.s32.totalorder %v2164, 1
    %v2166 = vsel %vm2165, %v2152, %v2082
    %v2167 = vld [vmem:[#allocation3 + $0x50] sm:$0xff]
    %v2168 = vld [vmem:[#allocation3 + $0x58] sm:$0xff]
    %v2169 = vpack.c.bf16 %v2152, %v2152
    %2171 = vrot.lane.b32.xlu0 %v2169, 64
    %v2172 = vpop.permute.xlu0 %2171
    %v2174 = vsel %vm719, %v2172, 0
    %2176 = vmatprep.subr.bf16.mxu0 0
    %2177 = vmatpush1.bf16.msra.mxu0 0
    %2178 = vmatprep.subr.bf16.mxu0 0
    %2179 = vmatpush1.bf16.msra.mxu0 0
    %2180 = vmatprep.subr.bf16.mxu0 0
    %2181 = vmatpush1.bf16.msra.mxu0 0
    %2182 = vmatprep.subr.bf16.mxu0 0
    %2183 = vmatpush1.bf16.msra.mxu0 0
    %2184 = vmatprep.subr.bf16.mxu0 %v1745
    %2185 = vmatpush1.bf16.msra.mxu0 %v1744
    %2186 = vmatprep.subr.bf16.mxu0 %v1743
    %2187 = vmatpush1.bf16.msra.mxu0 %v1742
    %2188 = vmatprep.subr.bf16.mxu0 %v1741
    %2189 = vmatpush1.bf16.msra.mxu0 %v1740
    %2190 = vmatprep.subr.bf16.mxu0 %v1739
    %2191 = vmatpush1.bf16.msra.mxu0 %v1738
    %2192 = vmatprep.subr.bf16.mxu0 0
    %2193 = vmatpush2.bf16.msra.mxu0 0
    %2194 = vmatprep.subr.bf16.mxu0 0
    %2195 = vmatpush2.bf16.msra.mxu0 0
    %2196 = vmatprep.subr.bf16.mxu0 0
    %2197 = vmatpush2.bf16.msra.mxu0 0
    %2198 = vmatprep.subr.bf16.mxu0 0
    %2199 = vmatpush2.bf16.msra.mxu0 0
    %2200 = vmatprep.subr.bf16.mxu0 0
    %2201 = vmatpush2.bf16.msra.mxu0 0
    %2202 = vmatprep.subr.bf16.mxu0 0
    %2203 = vmatpush2.bf16.msra.mxu0 0
    %2204 = vmatprep.subr.bf16.mxu0 0
    %2205 = vmatpush2.bf16.msra.mxu0 0
    %2206 = vmatprep.subr.bf16.mxu0 0
    %2207 = vmatpush2.bf16.msra.mxu0 0
    %2208 = vmatprep.mubr.bf16.mxu0 0
    %2209 = vmatmul.mubr.bf16.gmra.mxu0 %v2174
    %v2210 = vpop.f32.mrf.mxu0
    %v2211 = vadd.f32 0.0, %v2210
    %v2212 = vpop.f32.mrf.mxu0
    %v2213 = vadd.f32 0.0, %v2212
    %v2214 = vpop.f32.mrf.mxu0
    %v2215 = vpop.f32.mrf.mxu0
    %2216 = vdwg.mxu0
    %v2217 = vadd.f32 %v2167, %v2211
    %v2218 = vadd.f32 %v2168, %v2213
    %v2219 = vmul.f32 %v2217, 0.5
    %v2220 = vtanh.pop %v2219
    %v2221 = vmul.f32 %v2220, 0.5
    %v2222 = vadd.f32 %v2221, 0.5
    %v2223 = vtanh.pop %v2218
    %v2224 = vmul.f32 %v2218, 0.5
    %v2225 = vtanh.pop %v2224
    %v2226 = vmul.f32 %v2225, 0.5
    %v2227 = vadd.f32 %v2226, 0.5
    %v2228 = vmul.f32 %v2222, %v2150
    %v2229 = vmul.f32 %v2222, %v2223
    %2231 = vrot.lane.b32.xlu0 %v2229, 64
    %v2232 = vpop.permute.xlu0 %2231
    %v2234 = vadd.f32 %v2228, %v2232
    %v2235 = vtanh.pop %v2234
    %v2236 = vmul.f32 %v2227, %v2235
    %vm2237 = vcmp.eq.s32.totalorder %v1815, 5
    %v2238 = vsel %vm2237, 1, 0
    %2239 = vset.pattern.permute.xlu0 0
    %2240 = vperm.xlu0 %2239, %v2238
    %v2241 = vpop.permute.xlu0 %2240
    %vm2242 = vcmp.eq.s32.totalorder %v2241, 1
    %v2243 = vsel %vm2242, %v2236, %v2159
    %vm2244 = vcmp.eq.s32.totalorder %v1823, 5
    %v2245 = vsel %vm2244, 1, 0
    %2246 = vset.pattern.permute.xlu0 0
    %2247 = vperm.xlu0 %2246, %v2245
    %v2248 = vpop.permute.xlu0 %2247
    %vm2249 = vcmp.eq.s32.totalorder %v2248, 1
    %v2250 = vsel %vm2249, %v2236, %v2166
    %v2251 = vld [vmem:[#allocation3 + $0x60] sm:$0xff]
    %v2252 = vld [vmem:[#allocation3 + $0x68] sm:$0xff]
    %v2253 = vpack.c.bf16 %v2236, %v2236
    %2255 = vrot.lane.b32.xlu0 %v2253, 64
    %v2256 = vpop.permute.xlu0 %2255
    %v2258 = vsel %vm719, %v2256, 0
    %2260 = vmatprep.subr.bf16.mxu0 0
    %2261 = vmatpush1.bf16.msra.mxu0 0
    %2262 = vmatprep.subr.bf16.mxu0 0
    %2263 = vmatpush1.bf16.msra.mxu0 0
    %2264 = vmatprep.subr.bf16.mxu0 0
    %2265 = vmatpush1.bf16.msra.mxu0 0
    %2266 = vmatprep.subr.bf16.mxu0 0
    %2267 = vmatpush1.bf16.msra.mxu0 0
    %2268 = vmatprep.subr.bf16.mxu0 %v1745
    %2269 = vmatpush1.bf16.msra.mxu0 %v1744
    %2270 = vmatprep.subr.bf16.mxu0 %v1743
    %2271 = vmatpush1.bf16.msra.mxu0 %v1742
    %2272 = vmatprep.subr.bf16.mxu0 %v1741
    %2273 = vmatpush1.bf16.msra.mxu0 %v1740
    %2274 = vmatprep.subr.bf16.mxu0 %v1739
    %2275 = vmatpush1.bf16.msra.mxu0 %v1738
    %2276 = vmatprep.subr.bf16.mxu0 0
    %2277 = vmatpush2.bf16.msra.mxu0 0
    %2278 = vmatprep.subr.bf16.mxu0 0
    %2279 = vmatpush2.bf16.msra.mxu0 0
    %2280 = vmatprep.subr.bf16.mxu0 0
    %2281 = vmatpush2.bf16.msra.mxu0 0
    %2282 = vmatprep.subr.bf16.mxu0 0
    %2283 = vmatpush2.bf16.msra.mxu0 0
    %2284 = vmatprep.subr.bf16.mxu0 0
    %2285 = vmatpush2.bf16.msra.mxu0 0
    %2286 = vmatprep.subr.bf16.mxu0 0
    %2287 = vmatpush2.bf16.msra.mxu0 0
    %2288 = vmatprep.subr.bf16.mxu0 0
    %2289 = vmatpush2.bf16.msra.mxu0 0
    %2290 = vmatprep.subr.bf16.mxu0 0
    %2291 = vmatpush2.bf16.msra.mxu0 0
    %2292 = vmatprep.mubr.bf16.mxu0 0
    %2293 = vmatmul.mubr.bf16.gmra.mxu0 %v2258
    %v2294 = vpop.f32.mrf.mxu0
    %v2295 = vadd.f32 0.0, %v2294
    %v2296 = vpop.f32.mrf.mxu0
    %v2297 = vadd.f32 0.0, %v2296
    %v2298 = vpop.f32.mrf.mxu0
    %v2299 = vpop.f32.mrf.mxu0
    %2300 = vdwg.mxu0
    %v2301 = vadd.f32 %v2251, %v2295
    %v2302 = vadd.f32 %v2252, %v2297
    %v2303 = vmul.f32 %v2301, 0.5
    %v2304 = vtanh.pop %v2303
    %v2305 = vmul.f32 %v2304, 0.5
    %v2306 = vadd.f32 %v2305, 0.5
    %v2307 = vtanh.pop %v2302
    %v2308 = vmul.f32 %v2302, 0.5
    %v2309 = vtanh.pop %v2308
    %v2310 = vmul.f32 %v2309, 0.5
    %v2311 = vadd.f32 %v2310, 0.5
    %v2312 = vmul.f32 %v2306, %v2234
    %v2313 = vmul.f32 %v2306, %v2307
    %2315 = vrot.lane.b32.xlu0 %v2313, 64
    %v2316 = vpop.permute.xlu0 %2315
    %v2318 = vadd.f32 %v2312, %v2316
    %v2319 = vtanh.pop %v2318
    %v2320 = vmul.f32 %v2311, %v2319
    %vm2321 = vcmp.eq.s32.totalorder %v1815, 6
    %v2322 = vsel %vm2321, 1, 0
    %2323 = vset.pattern.permute.xlu0 0
    %2324 = vperm.xlu0 %2323, %v2322
    %v2325 = vpop.permute.xlu0 %2324
    %vm2326 = vcmp.eq.s32.totalorder %v2325, 1
    %v2327 = vsel %vm2326, %v2320, %v2243
    %vm2328 = vcmp.eq.s32.totalorder %v1823, 6
    %v2329 = vsel %vm2328, 1, 0
    %2330 = vset.pattern.permute.xlu0 0
    %2331 = vperm.xlu0 %2330, %v2329
    %v2332 = vpop.permute.xlu0 %2331
    %vm2333 = vcmp.eq.s32.totalorder %v2332, 1
    %v2334 = vsel %vm2333, %v2320, %v2250
    %v2335 = vld [vmem:[#allocation3 + $0x70] sm:$0xff]
    %v2336 = vld [vmem:[#allocation3 + $0x78] sm:$0xff]
    %v2337 = vpack.c.bf16 %v2320, %v2320
    %2339 = vrot.lane.b32.xlu0 %v2337, 64
    %v2340 = vpop.permute.xlu0 %2339
    %v2342 = vsel %vm719, %v2340, 0
    %2344 = vmatprep.subr.bf16.mxu0 0
    %2345 = vmatpush1.bf16.msra.mxu0 0
    %2346 = vmatprep.subr.bf16.mxu0 0
    %2347 = vmatpush1.bf16.msra.mxu0 0
    %2348 = vmatprep.subr.bf16.mxu0 0
    %2349 = vmatpush1.bf16.msra.mxu0 0
    %2350 = vmatprep.subr.bf16.mxu0 0
    %2351 = vmatpush1.bf16.msra.mxu0 0
    %2352 = vmatprep.subr.bf16.mxu0 %v1745
    %2353 = vmatpush1.bf16.msra.mxu0 %v1744
    %2354 = vmatprep.subr.bf16.mxu0 %v1743
    %2355 = vmatpush1.bf16.msra.mxu0 %v1742
    %2356 = vmatprep.subr.bf16.mxu0 %v1741
    %2357 = vmatpush1.bf16.msra.mxu0 %v1740
    %2358 = vmatprep.subr.bf16.mxu0 %v1739
    %2359 = vmatpush1.bf16.msra.mxu0 %v1738
    %2360 = vmatprep.subr.bf16.mxu0 0
    %2361 = vmatpush2.bf16.msra.mxu0 0
    %2362 = vmatprep.subr.bf16.mxu0 0
    %2363 = vmatpush2.bf16.msra.mxu0 0
    %2364 = vmatprep.subr.bf16.mxu0 0
    %2365 = vmatpush2.bf16.msra.mxu0 0
    %2366 = vmatprep.subr.bf16.mxu0 0
    %2367 = vmatpush2.bf16.msra.mxu0 0
    %2368 = vmatprep.subr.bf16.mxu0 0
    %2369 = vmatpush2.bf16.msra.mxu0 0
    %2370 = vmatprep.subr.bf16.mxu0 0
    %2371 = vmatpush2.bf16.msra.mxu0 0
    %2372 = vmatprep.subr.bf16.mxu0 0
    %2373 = vmatpush2.bf16.msra.mxu0 0
    %2374 = vmatprep.subr.bf16.mxu0 0
    %2375 = vmatpush2.bf16.msra.mxu0 0
    %2376 = vmatprep.mubr.bf16.mxu0 0
    %2377 = vmatmul.mubr.bf16.gmra.mxu0 %v2342
    %v2378 = vpop.f32.mrf.mxu0
    %v2379 = vadd.f32 0.0, %v2378
    %v2380 = vpop.f32.mrf.mxu0
    %v2381 = vadd.f32 0.0, %v2380
    %v2382 = vpop.f32.mrf.mxu0
    %v2383 = vpop.f32.mrf.mxu0
    %2384 = vdwg.mxu0
    %v2385 = vadd.f32 %v2335, %v2379
    %v2386 = vadd.f32 %v2336, %v2381
    %v2387 = vmul.f32 %v2385, 0.5
    %v2388 = vtanh.pop %v2387
    %v2389 = vmul.f32 %v2388, 0.5
    %v2390 = vadd.f32 %v2389, 0.5
    %v2391 = vtanh.pop %v2386
    %v2392 = vmul.f32 %v2386, 0.5
    %v2393 = vtanh.pop %v2392
    %v2394 = vmul.f32 %v2393, 0.5
    %v2395 = vadd.f32 %v2394, 0.5
    %v2396 = vmul.f32 %v2390, %v2318
    %v2397 = vmul.f32 %v2390, %v2391
    %2399 = vrot.lane.b32.xlu0 %v2397, 64
    %v2400 = vpop.permute.xlu0 %2399
    %v2402 = vadd.f32 %v2396, %v2400
    %v2403 = vtanh.pop %v2402
    %v2404 = vmul.f32 %v2395, %v2403
    %vm2405 = vcmp.eq.s32.totalorder %v1815, 7
    %v2406 = vsel %vm2405, 1, 0
    %2407 = vset.pattern.permute.xlu0 0
    %2408 = vperm.xlu0 %2407, %v2406
    %v2409 = vpop.permute.xlu0 %2408
    %vm2410 = vcmp.eq.s32.totalorder %v2409, 1
    %v2411 = vsel %vm2410, %v2404, %v2327
    %vm2412 = vcmp.eq.s32.totalorder %v1823, 7
    %v2413 = vsel %vm2412, 1, 0
    %2414 = vset.pattern.permute.xlu0 0
    %2415 = vperm.xlu0 %2414, %v2413
    %v2416 = vpop.permute.xlu0 %2415
    %vm2417 = vcmp.eq.s32.totalorder %v2416, 1
    %v2418 = vsel %vm2417, %v2404, %v2334
    %v2419 = vld [vmem:[#allocation13] sm:$0xff]
    %v2420 = vld [vmem:[#allocation13 + $0x8] sm:$0xff]
    %v2421 = vld [vmem:[#allocation13 + $0x10] sm:$0xff]
    %v2422 = vld [vmem:[#allocation13 + $0x18] sm:$0xff]
    %v2423 = vld [vmem:[#allocation13 + $0x20] sm:$0xff]
    %v2424 = vld [vmem:[#allocation13 + $0x28] sm:$0xff]
    %v2425 = vld [vmem:[#allocation13 + $0x30] sm:$0xff]
    %v2426 = vld [vmem:[#allocation13 + $0x38] sm:$0xff]
    %v2427 = vld [vmem:[#allocation13 + $0x40] sm:$0xff]
    %v2428 = vld [vmem:[#allocation13 + $0x48] sm:$0xff]
    %v2429 = vld [vmem:[#allocation13 + $0x50] sm:$0xff]
    %v2430 = vld [vmem:[#allocation13 + $0x58] sm:$0xff]
    %v2431 = vld [vmem:[#allocation13 + $0x60] sm:$0xff]
    %v2432 = vld [vmem:[#allocation13 + $0x68] sm:$0xff]
    %v2433 = vld [vmem:[#allocation13 + $0x70] sm:$0xff]
    %v2434 = vld [vmem:[#allocation13 + $0x78] sm:$0xff]
    %2436 = vrot.lane.b32.xlu0 %v2418, 32
    %v2437 = vpop.permute.xlu0 %2436
    %v2438 = vsel %vm386, %v2437, 0
    %2440 = vmatprep.subr.mxu0 0.0
    %2441 = vmatpush1.msra.mxu0 0.0
    %2442 = vmatprep.subr.mxu0 0.0
    %2443 = vmatpush1.msra.mxu0 0.0
    %2444 = vmatprep.subr.mxu0 0.0
    %2445 = vmatpush1.msra.mxu0 0.0
    %2446 = vmatprep.subr.mxu0 0.0
    %2447 = vmatpush1.msra.mxu0 0.0
    %2448 = vmatprep.subr.mxu0 0.0
    %2449 = vmatpush1.msra.mxu0 0.0
    %2450 = vmatprep.subr.mxu0 0.0
    %2451 = vmatpush1.msra.mxu0 0.0
    %2452 = vmatprep.subr.mxu0 0.0
    %2453 = vmatpush1.msra.mxu0 0.0
    %2454 = vmatprep.subr.mxu0 0.0
    %2455 = vmatpush1.msra.mxu0 0.0
    %2456 = vmatprep.subr.mxu0 0.0
    %2457 = vmatpush1.msra.mxu0 0.0
    %2458 = vmatprep.subr.mxu0 0.0
    %2459 = vmatpush1.msra.mxu0 0.0
    %2460 = vmatprep.subr.mxu0 0.0
    %2461 = vmatpush1.msra.mxu0 0.0
    %2462 = vmatprep.subr.mxu0 0.0
    %2463 = vmatpush1.msra.mxu0 0.0
    %2464 = vmatprep.subr.mxu0 %v2434
    %2465 = vmatpush1.msra.mxu0 %v2433
    %2466 = vmatprep.subr.mxu0 %v2432
    %2467 = vmatpush1.msra.mxu0 %v2431
    %2468 = vmatprep.subr.mxu0 %v2430
    %2469 = vmatpush1.msra.mxu0 %v2429
    %2470 = vmatprep.subr.mxu0 %v2428
    %2471 = vmatpush1.msra.mxu0 %v2427
    %2472 = vmatprep.subr.mxu0 0.0
    %2473 = vmatpush2.msra.mxu0 0.0
    %2474 = vmatprep.subr.mxu0 0.0
    %2475 = vmatpush2.msra.mxu0 0.0
    %2476 = vmatprep.subr.mxu0 0.0
    %2477 = vmatpush2.msra.mxu0 0.0
    %2478 = vmatprep.subr.mxu0 0.0
    %2479 = vmatpush2.msra.mxu0 0.0
    %2480 = vmatprep.subr.mxu0 0.0
    %2481 = vmatpush2.msra.mxu0 0.0
    %2482 = vmatprep.subr.mxu0 0.0
    %2483 = vmatpush2.msra.mxu0 0.0
    %2484 = vmatprep.subr.mxu0 0.0
    %2485 = vmatpush2.msra.mxu0 0.0
    %2486 = vmatprep.subr.mxu0 0.0
    %2487 = vmatpush2.msra.mxu0 0.0
    %2488 = vmatprep.subr.mxu0 0.0
    %2489 = vmatpush2.msra.mxu0 0.0
    %2490 = vmatprep.subr.mxu0 0.0
    %2491 = vmatpush2.msra.mxu0 0.0
    %2492 = vmatprep.subr.mxu0 0.0
    %2493 = vmatpush2.msra.mxu0 0.0
    %2494 = vmatprep.subr.mxu0 0.0
    %2495 = vmatpush2.msra.mxu0 0.0
    %2496 = vmatprep.subr.mxu0 0.0
    %2497 = vmatpush2.msra.mxu0 0.0
    %2498 = vmatprep.subr.mxu0 0.0
    %2499 = vmatpush2.msra.mxu0 0.0
    %2500 = vmatprep.subr.mxu0 0.0
    %2501 = vmatpush2.msra.mxu0 0.0
    %2502 = vmatprep.subr.mxu0 0.0
    %2503 = vmatpush2.msra.mxu0 0.0
    %2504 = vmatprep.mubr.f32.mxu0 0.0
    %2505 = vmatmul.mubr.f32.gmra.mxu0 %v2438
    %v2506 = vpop.f32.mrf.mxu0
    %v2507 = vadd.f32 0.0, %v2506
    %v2508 = vpop.f32.mrf.mxu0
    %v2509 = vadd.f32 0.0, %v2508
    %2510 = vdwg.mxu0
    %2512 = vrot.lane.b32.xlu0 %v2411, 64
    %v2513 = vpop.permute.xlu0 %2512
    %v2514 = vsel %vm386, %v2513, 0
    %2516 = vmatprep.subr.mxu0 0.0
    %2517 = vmatpush1.msra.mxu0 0.0
    %2518 = vmatprep.subr.mxu0 0.0
    %2519 = vmatpush1.msra.mxu0 0.0
    %2520 = vmatprep.subr.mxu0 0.0
    %2521 = vmatpush1.msra.mxu0 0.0
    %2522 = vmatprep.subr.mxu0 0.0
    %2523 = vmatpush1.msra.mxu0 0.0
    %2524 = vmatprep.subr.mxu0 0.0
    %2525 = vmatpush1.msra.mxu0 0.0
    %2526 = vmatprep.subr.mxu0 0.0
    %2527 = vmatpush1.msra.mxu0 0.0
    %2528 = vmatprep.subr.mxu0 0.0
    %2529 = vmatpush1.msra.mxu0 0.0
    %2530 = vmatprep.subr.mxu0 0.0
    %2531 = vmatpush1.msra.mxu0 0.0
    %2532 = vmatprep.subr.mxu0 0.0
    %2533 = vmatpush1.msra.mxu0 0.0
    %2534 = vmatprep.subr.mxu0 0.0
    %2535 = vmatpush1.msra.mxu0 0.0
    %2536 = vmatprep.subr.mxu0 0.0
    %2537 = vmatpush1.msra.mxu0 0.0
    %2538 = vmatprep.subr.mxu0 0.0
    %2539 = vmatpush1.msra.mxu0 0.0
    %2540 = vmatprep.subr.mxu0 %v2426
    %2541 = vmatpush1.msra.mxu0 %v2425
    %2542 = vmatprep.subr.mxu0 %v2424
    %2543 = vmatpush1.msra.mxu0 %v2423
    %2544 = vmatprep.subr.mxu0 %v2422
    %2545 = vmatpush1.msra.mxu0 %v2421
    %2546 = vmatprep.subr.mxu0 %v2420
    %2547 = vmatpush1.msra.mxu0 %v2419
    %2548 = vmatprep.subr.mxu0 0.0
    %2549 = vmatpush2.msra.mxu0 0.0
    %2550 = vmatprep.subr.mxu0 0.0
    %2551 = vmatpush2.msra.mxu0 0.0
    %2552 = vmatprep.subr.mxu0 0.0
    %2553 = vmatpush2.msra.mxu0 0.0
    %2554 = vmatprep.subr.mxu0 0.0
    %2555 = vmatpush2.msra.mxu0 0.0
    %2556 = vmatprep.subr.mxu0 0.0
    %2557 = vmatpush2.msra.mxu0 0.0
    %2558 = vmatprep.subr.mxu0 0.0
    %2559 = vmatpush2.msra.mxu0 0.0
    %2560 = vmatprep.subr.mxu0 0.0
    %2561 = vmatpush2.msra.mxu0 0.0
    %2562 = vmatprep.subr.mxu0 0.0
    %2563 = vmatpush2.msra.mxu0 0.0
    %2564 = vmatprep.subr.mxu0 0.0
    %2565 = vmatpush2.msra.mxu0 0.0
    %2566 = vmatprep.subr.mxu0 0.0
    %2567 = vmatpush2.msra.mxu0 0.0
    %2568 = vmatprep.subr.mxu0 0.0
    %2569 = vmatpush2.msra.mxu0 0.0
    %2570 = vmatprep.subr.mxu0 0.0
    %2571 = vmatpush2.msra.mxu0 0.0
    %2572 = vmatprep.subr.mxu0 0.0
    %2573 = vmatpush2.msra.mxu0 0.0
    %2574 = vmatprep.subr.mxu0 0.0
    %2575 = vmatpush2.msra.mxu0 0.0
    %2576 = vmatprep.subr.mxu0 0.0
    %2577 = vmatpush2.msra.mxu0 0.0
    %2578 = vmatprep.subr.mxu0 0.0
    %2579 = vmatpush2.msra.mxu0 0.0
    %2580 = vmatprep.mubr.f32.mxu0 0.0
    %2581 = vmatmul.mubr.f32.gmra.mxu0 %v2514
    %v2582 = vpop.f32.mrf.mxu0
    %v2583 = vadd.f32 %v2507, %v2582
    %v2584 = vpop.f32.mrf.mxu0
    %v2585 = vadd.f32 %v2509, %v2584
    %2586 = vdwg.mxu0
    %v2587 = vld [vmem:[%s9] sm:$0xff]
    %v2588 = vld [vmem:[%s11] sm:$0xff]
    %v2589 = vld [vmem:[%s11 + $0x8] sm:$0xff]
    %v2590 = vld [vmem:[%s11 + $0x10] sm:$0xff]
    %v2591 = vld [vmem:[%s11 + $0x18] sm:$0xff]
    %v2592 = vld [vmem:[%s11 + $0x20] sm:$0xff]
    %v2593 = vld [vmem:[%s11 + $0x28] sm:$0xff]
    %v2594 = vld [vmem:[%s11 + $0x30] sm:$0xff]
    %v2595 = vld [vmem:[%s11 + $0x38] sm:$0xff]
    %v2596 = vld [vmem:[%s11 + $0x40] sm:$0xff]
    %v2597 = vld [vmem:[%s11 + $0x48] sm:$0xff]
    %v2598 = vld [vmem:[%s11 + $0x50] sm:$0xff]
    %v2599 = vld [vmem:[%s11 + $0x58] sm:$0xff]
    %v2600 = vld [vmem:[%s11 + $0x60] sm:$0xff]
    %v2601 = vld [vmem:[%s11 + $0x68] sm:$0xff]
    %v2602 = vld [vmem:[%s11 + $0x70] sm:$0xff]
    %v2603 = vld [vmem:[%s11 + $0x78] sm:$0xff]
    %v2605 = vsel %vm719, %v2587, 0
    %2607 = vmatprep.subr.mxu0 0.0
    %2608 = vmatpush1.msra.mxu0 0.0
    %2609 = vmatprep.subr.mxu0 0.0
    %2610 = vmatpush1.msra.mxu0 0.0
    %2611 = vmatprep.subr.mxu0 0.0
    %2612 = vmatpush1.msra.mxu0 0.0
    %2613 = vmatprep.subr.mxu0 0.0
    %2614 = vmatpush1.msra.mxu0 0.0
    %2615 = vmatprep.subr.mxu0 0.0
    %2616 = vmatpush1.msra.mxu0 0.0
    %2617 = vmatprep.subr.mxu0 0.0
    %2618 = vmatpush1.msra.mxu0 0.0
    %2619 = vmatprep.subr.mxu0 0.0
    %2620 = vmatpush1.msra.mxu0 0.0
    %2621 = vmatprep.subr.mxu0 0.0
    %2622 = vmatpush1.msra.mxu0 0.0
    %2623 = vmatprep.subr.mxu0 %v2603
    %2624 = vmatpush1.msra.mxu0 %v2602
    %2625 = vmatprep.subr.mxu0 %v2601
    %2626 = vmatpush1.msra.mxu0 %v2600
    %2627 = vmatprep.subr.mxu0 %v2599
    %2628 = vmatpush1.msra.mxu0 %v2598
    %2629 = vmatprep.subr.mxu0 %v2597
    %2630 = vmatpush1.msra.mxu0 %v2596
    %2631 = vmatprep.subr.mxu0 %v2595
    %2632 = vmatpush1.msra.mxu0 %v2594
    %2633 = vmatprep.subr.mxu0 %v2593
    %2634 = vmatpush1.msra.mxu0 %v2592
    %2635 = vmatprep.subr.mxu0 %v2591
    %2636 = vmatpush1.msra.mxu0 %v2590
    %2637 = vmatprep.subr.mxu0 %v2589
    %2638 = vmatpush1.msra.mxu0 %v2588
    %2639 = vmatprep.subr.mxu0 0.0
    %2640 = vmatpush2.msra.mxu0 0.0
    %2641 = vmatprep.subr.mxu0 0.0
    %2642 = vmatpush2.msra.mxu0 0.0
    %2643 = vmatprep.subr.mxu0 0.0
    %2644 = vmatpush2.msra.mxu0 0.0
    %2645 = vmatprep.subr.mxu0 0.0
    %2646 = vmatpush2.msra.mxu0 0.0
    %2647 = vmatprep.subr.mxu0 0.0
    %2648 = vmatpush2.msra.mxu0 0.0
    %2649 = vmatprep.subr.mxu0 0.0
    %2650 = vmatpush2.msra.mxu0 0.0
    %2651 = vmatprep.subr.mxu0 0.0
    %2652 = vmatpush2.msra.mxu0 0.0
    %2653 = vmatprep.subr.mxu0 0.0
    %2654 = vmatpush2.msra.mxu0 0.0
    %2655 = vmatprep.subr.mxu0 0.0
    %2656 = vmatpush2.msra.mxu0 0.0
    %2657 = vmatprep.subr.mxu0 0.0
    %2658 = vmatpush2.msra.mxu0 0.0
    %2659 = vmatprep.subr.mxu0 0.0
    %2660 = vmatpush2.msra.mxu0 0.0
    %2661 = vmatprep.subr.mxu0 0.0
    %2662 = vmatpush2.msra.mxu0 0.0
    %2663 = vmatprep.subr.mxu0 0.0
    %2664 = vmatpush2.msra.mxu0 0.0
    %2665 = vmatprep.subr.mxu0 0.0
    %2666 = vmatpush2.msra.mxu0 0.0
    %2667 = vmatprep.subr.mxu0 0.0
    %2668 = vmatpush2.msra.mxu0 0.0
    %2669 = vmatprep.subr.mxu0 0.0
    %2670 = vmatpush2.msra.mxu0 0.0
    %2671 = vmatprep.mubr.f32.mxu0 0.0
    %2672 = vmatmul.mubr.f32.gmra.mxu0 %v2605
    %v2673 = vpop.f32.mrf.mxu0
    %v2674 = vadd.f32 0.0, %v2673
    %v2675 = vpop.f32.mrf.mxu0
    %v2676 = vadd.f32 0.0, %v2675
    %2677 = vdwg.mxu0
    %v2678 = vadd.f32 %v2583, %v2674
    %v2679 = vadd.f32 %v2585, %v2676
    %v2680 = vld [vmem:[%s12] sm:$0x3]
    %v2682 = vlaneseq
    %v2683 = vshrl.u32 %v2682, 7
    %v2684 = vsub.s32 0, %v2683
    %v2685 = vrot.slane %v2680, %v2684
    %v2686 = vlaneseq
    %v2687 = vshrl.u32 %v2686, 7
    %v2688 = vsub.s32 1, %v2687
    %v2689 = vrot.slane %v2680, %v2688
    %v2692 = vadd.f32 %v2678, %v2685
    %v2693 = vadd.f32 %v2679, %v2689
    %v2694 = vadd.s32 %v155, 128
    %vm2695 = vcmp.lt.s32.totalorder %v155, 64
    %vm2696 = vcmp.lt.s32.totalorder %v2694, 64
    %vm2697 = vcmp.ge.s32.totalorder %v155, 128
    %vm2698 = vcmp.ge.s32.totalorder %v2694, 128
    %vm2699 = vmor %vm2695, %vm2697
    %vm2700 = vmor %vm2696, %vm2698
    %v2701 = vmax.f32 %v2692, 0.0
    %v2702 = vmax.f32 %v2693, 0.0
    %v2703 = vsel %vm2699, %v2701, %v2692
    %v2704 = vsel %vm2700, %v2702, %v2693
    %v2705 = vld [vmem:[#allocation15] sm:$0xff]
    %v2706 = vld [vmem:[#allocation15 + $0x8] sm:$0xff]
    %v2707 = vld [vmem:[#allocation15 + $0x10] sm:$0xff]
    %v2708 = vld [vmem:[#allocation15 + $0x18] sm:$0xff]
    %v2709 = vld [vmem:[#allocation15 + $0x20] sm:$0xff]
    %v2710 = vld [vmem:[#allocation15 + $0x28] sm:$0xff]
    %v2711 = vld [vmem:[#allocation15 + $0x30] sm:$0xff]
    %v2712 = vld [vmem:[#allocation15 + $0x38] sm:$0xff]
    %v2713 = vld [vmem:[#allocation15 + $0x40] sm:$0xff]
    %v2714 = vld [vmem:[#allocation15 + $0x48] sm:$0xff]
    %v2715 = vld [vmem:[#allocation15 + $0x50] sm:$0xff]
    %v2716 = vld [vmem:[#allocation15 + $0x58] sm:$0xff]
    %v2717 = vld [vmem:[#allocation15 + $0x60] sm:$0xff]
    %v2718 = vld [vmem:[#allocation15 + $0x68] sm:$0xff]
    %v2719 = vld [vmem:[#allocation15 + $0x70] sm:$0xff]
    %v2720 = vld [vmem:[#allocation15 + $0x78] sm:$0xff]
    %v2721 = vld [vmem:[#allocation15 + $0x80] sm:$0xff]
    %v2722 = vld [vmem:[#allocation15 + $0x88] sm:$0xff]
    %v2723 = vld [vmem:[#allocation15 + $0x90] sm:$0xff]
    %v2724 = vld [vmem:[#allocation15 + $0x98] sm:$0xff]
    %v2725 = vld [vmem:[#allocation15 + $0xa0] sm:$0xff]
    %v2726 = vld [vmem:[#allocation15 + $0xa8] sm:$0xff]
    %v2727 = vld [vmem:[#allocation15 + $0xb0] sm:$0xff]
    %v2728 = vld [vmem:[#allocation15 + $0xb8] sm:$0xff]
    %v2729 = vld [vmem:[%s14] sm:$0x1]
    %v2731 = vlaneseq
    %v2732 = vshrl.u32 %v2731, 7
    %v2733 = vsub.s32 0, %v2732
    %v2734 = vrot.slane %v2729, %v2733
    %v2737 = vsel %vm719, %v2704, 0
    %2739 = vmatprep.subr.mxu0 0.0
    %2740 = vmatpush1.msra.mxu0 %v2720
    %2741 = vmatprep.subr.mxu0 0.0
    %2742 = vmatpush1.msra.mxu0 %v2719
    %2743 = vmatprep.subr.mxu0 0.0
    %2744 = vmatpush1.msra.mxu0 %v2718
    %2745 = vmatprep.subr.mxu0 0.0
    %2746 = vmatpush1.msra.mxu0 %v2717
    %2747 = vmatprep.subr.mxu0 0.0
    %2748 = vmatpush1.msra.mxu0 %v2716
    %2749 = vmatprep.subr.mxu0 0.0
    %2750 = vmatpush1.msra.mxu0 %v2715
    %2751 = vmatprep.subr.mxu0 0.0
    %2752 = vmatpush1.msra.mxu0 %v2714
    %2753 = vmatprep.subr.mxu0 0.0
    %2754 = vmatpush1.msra.mxu0 %v2713
    %2755 = vmatprep.subr.mxu0 0.0
    %2756 = vmatpush1.msra.mxu0 %v2712
    %2757 = vmatprep.subr.mxu0 0.0
    %2758 = vmatpush1.msra.mxu0 %v2711
    %2759 = vmatprep.subr.mxu0 0.0
    %2760 = vmatpush1.msra.mxu0 %v2710
    %2761 = vmatprep.subr.mxu0 0.0
    %2762 = vmatpush1.msra.mxu0 %v2709
    %2763 = vmatprep.subr.mxu0 0.0
    %2764 = vmatpush1.msra.mxu0 %v2708
    %2765 = vmatprep.subr.mxu0 0.0
    %2766 = vmatpush1.msra.mxu0 %v2707
    %2767 = vmatprep.subr.mxu0 0.0
    %2768 = vmatpush1.msra.mxu0 %v2706
    %2769 = vmatprep.subr.mxu0 0.0
    %2770 = vmatpush1.msra.mxu0 %v2705
    %2771 = vmatprep.subr.mxu0 0.0
    %2772 = vmatpush2.msra.mxu0 0.0
    %2773 = vmatprep.subr.mxu0 0.0
    %2774 = vmatpush2.msra.mxu0 0.0
    %2775 = vmatprep.subr.mxu0 0.0
    %2776 = vmatpush2.msra.mxu0 0.0
    %2777 = vmatprep.subr.mxu0 0.0
    %2778 = vmatpush2.msra.mxu0 0.0
    %2779 = vmatprep.subr.mxu0 0.0
    %2780 = vmatpush2.msra.mxu0 0.0
    %2781 = vmatprep.subr.mxu0 0.0
    %2782 = vmatpush2.msra.mxu0 0.0
    %2783 = vmatprep.subr.mxu0 0.0
    %2784 = vmatpush2.msra.mxu0 0.0
    %2785 = vmatprep.subr.mxu0 0.0
    %2786 = vmatpush2.msra.mxu0 0.0
    %2787 = vmatprep.subr.mxu0 0.0
    %2788 = vmatpush2.msra.mxu0 %v2728
    %2789 = vmatprep.subr.mxu0 0.0
    %2790 = vmatpush2.msra.mxu0 %v2727
    %2791 = vmatprep.subr.mxu0 0.0
    %2792 = vmatpush2.msra.mxu0 %v2726
    %2793 = vmatprep.subr.mxu0 0.0
    %2794 = vmatpush2.msra.mxu0 %v2725
    %2795 = vmatprep.subr.mxu0 0.0
    %2796 = vmatpush2.msra.mxu0 %v2724
    %2797 = vmatprep.subr.mxu0 0.0
    %2798 = vmatpush2.msra.mxu0 %v2723
    %2799 = vmatprep.subr.mxu0 0.0
    %2800 = vmatpush2.msra.mxu0 %v2722
    %2801 = vmatprep.subr.mxu0 0.0
    %2802 = vmatpush2.msra.mxu0 %v2721
    %2803 = vmatprep.mubr.f32.mxu0 %v2737
    %2804 = vmatmul.mubr.f32.gmra.mxu0 %v2703
    %v2805 = vpop.f32.mrf.mxu0
    %v2806 = vadd.f32 %v2734, %v2805
    %v2807 = vpop.f32.mrf.mxu0
    %2808 = vdwg.mxu0
    %vm2809 = vcmask 15360
    %2810 = vst.msk [vmem:[%s15] sm:$0xff] %vm2809, %v2806
    // Predicated region
    $region90: #{model3_forward.1} parent=1 // pred_check
      _
    $region91: #{model3_forward.1} parent=1 // pred_check_branch
      %2812 = sbr.rel (0) target = $region93
    $region92: #{model3_forward.1} parent=1 // pred_region
      _
    $region93: #{model3_forward.1} parent=1 // pred_fallthru
      _
    // Predicated region
    $region94: #{model3_forward.1} parent=1 // pred_check
      _
    $region95: #{model3_forward.1} parent=1 // pred_check_branch
      %2814 = sbr.rel (0) target = $region97
    $region96: #{model3_forward.1} parent=1 // pred_region
      _
    $region97: #{model3_forward.1} parent=1 // pred_fallthru
      _
    %2815 = vsyncpa [#allocation6], 1
    %2816 = vsyncpa [#allocation8], 1
    %2817 = vsyncpa [#allocation11], 1
    %2818 = vsyncpa [#allocation14], 1

</llo_original>
